<compile_context>
chip_gen: v5e
topology: v5e:2x2
jax: 0.10.0
libtpu: 0.0.40
codegen_flags: <defaults>
</compile_context>

<pallas_src>
import jax
import jax.numpy as jnp
import numpy as np
from jax.experimental import pallas as pl
from jax.experimental.pallas import tpu as pltpu


def convt_sigmoid_kernel(w_ref, x_ref, o_ref):
    # (tn, Kp) @ (Kp, M) on the MXU; bias folded into the GEMM, so the
    # epilogue is sigmoid only.  Output tile is lane-dense (M on lanes).
    acc = jnp.dot(w_ref[...], x_ref[...], preferred_element_type=jnp.float32)
    # sigmoid(z) = 0.5 * (tanh(z/2) + 1): one EUP transcendental per element.
    o_ref[...] = 0.5 * jnp.tanh(0.5 * acc) + 0.5


def conv_transpose3d_sigmoid(x, weight, bias, *, stride, padding, output_padding):
    # x: (1, Ci, D, H, W) f32, weight: (Ci, Co, kD, kH, kW) f32, bias: (Co,)
    N, Ci, D, H, W = x.shape
    Ci_w, Co, kD, kH, kW = weight.shape
    sD, sH, sW = stride
    pD, pH, pW = padding
    opD, opH, opW = output_padding
    assert N == 1 and Ci_w == Ci
    # The GEMM reformulation relies on a non-overlapping scatter:
    assert (sD, sH, sW) == (kD, kH, kW), "requires stride == kernel_size"
    assert kW == 1
    # crop-based padding/output_padding handling needs op <= p per dim:
    assert opD <= pD and opH <= pH and opW <= pW

    M = D * H * W                 # 2640  -> lane axis
    Nc = Co * kD * kH             # 48    -> sublane axis
    Kp = 8                        # Ci + 1 (bias) padded to a full sublane group

    # Lane-dense input: channels (+ ones row for bias, + zero pad) on sublanes,
    # flattened (d, h, w) on lanes.
    x2dT = x[0].reshape(Ci, M)                                            # (Ci, M)
    xb = jnp.concatenate(
        [x2dT,
         jnp.ones((1, M), x.dtype),
         jnp.zeros((Kp - Ci - 1, M), x.dtype)], axis=0)                   # (Kp, M)

    # weight (Ci, Co, kD, kH, 1) -> rows n = (co, kd, kh), cols k = ci,
    # then append the bias column and zero-pad K to Kp.
    w_t = jnp.transpose(weight[..., 0], (1, 2, 3, 0)).reshape(Nc, Ci)     # (Nc, Ci)
    b_col = jnp.repeat(bias, kD * kH).reshape(Nc, 1)                      # (Nc, 1)
    wb = jnp.concatenate(
        [w_t, b_col, jnp.zeros((Nc, Kp - Ci - 1), weight.dtype)], axis=1)  # (Nc, Kp)

    n_tiles = 2
    tn = Nc // n_tiles
    assert Nc % n_tiles == 0 and tn % 8 == 0

    cost = pl.CostEstimate(
        flops=2 * Nc * Kp * M,
        transcendentals=Nc * M,
        bytes_accessed=(Nc * Kp + Kp * M + Nc * M) * 4,
    )

    yT = pl.pallas_call(
        convt_sigmoid_kernel,
        out_shape=jax.ShapeDtypeStruct((Nc, M), jnp.float32),
        grid=(n_tiles,),
        in_specs=[
            pl.BlockSpec((tn, Kp), lambda i: (i, 0)),   # weight tile (24, 8)
            pl.BlockSpec((Kp, M), lambda i: (0, 0)),    # full lane-dense input
        ],
        out_specs=pl.BlockSpec((tn, M), lambda i: (i, 0)),
        compiler_params=pltpu.CompilerParams(
            dimension_semantics=("parallel",)),
        cost_estimate=cost,
    )(wb, xb)

    # Glue (single fused XLA copy): interleave the taps with the spatial dims
    # and crop the padding.  Output is already Co-major from the kernel.
    y6 = yT.reshape(Co, kD, kH, D, H, W)
    y6 = jnp.transpose(y6, (0, 3, 1, 4, 2, 5))          # (Co, D, kD, H, kH, W)
    y_full = y6.reshape(Co, D * kD, H * kH, W)          # full scatter output
    outD = (D - 1) * sD - 2 * pD + kD + opD
    outH = (H - 1) * sH - 2 * pH + kH + opH
    outW = (W - 1) * sW - 2 * pW + kW + opW
    out = y_full[:, pD:pD + outD, pH:pH + outH, pW:pW + outW][None]
    return out                                           # (1, Co, 36, 43, 10)


def reference(x, weight, bias):
    # independent check: conv_transpose == lhs-dilated forward conv with flipped kernel
    w = jnp.transpose(weight, (1, 0, 2, 3, 4))           # (Co, Ci, kD, kH, kW)
    w = w[:, :, ::-1, ::-1, ::-1]                        # flip spatial dims
    y = jax.lax.conv_general_dilated(
        x, w,
        window_strides=(1, 1, 1),
        padding=[(2, 2), (0, 1), (0, 0)],                # (k-1-p, k-1-p+output_padding)
        lhs_dilation=(3, 2, 1),
        dimension_numbers=("NCDHW", "OIDHW", "NCDHW"),
    )
    y = y + bias.reshape(1, -1, 1, 1, 1)
    return jax.nn.sigmoid(y)


if __name__ == "__main__":
    key = jax.random.PRNGKey(0)
    kx, kw, kb = jax.random.split(key, 3)
    x = jax.random.normal(kx, (1, 4, 12, 22, 10), dtype=jnp.float32)
    weight = jax.random.normal(kw, (4, 8, 3, 2, 1), dtype=jnp.float32) * 0.2
    bias = jax.random.normal(kb, (8,), dtype=jnp.float32) * 0.1

    fwd = jax.jit(lambda a, w, b: conv_transpose3d_sigmoid(
        a, w, b, stride=(3, 2, 1), padding=(0, 1, 0), output_padding=(0, 1, 0)))

    out = fwd(x, weight, bias)
    out = jax.block_until_ready(out)

    assert out.shape == (1, 8, 36, 43, 10), out.shape
    ref = reference(x, weight, bias)
    np.testing.assert_allclose(np.asarray(out), np.asarray(ref), rtol=1e-5, atol=1e-5)
    print("KERNEL_OK")
</pallas_src>

<mosaic_0001>
module attributes {stable_mosaic.version = 11 : i64} {
  func.func @convt_sigmoid_kernel(%arg0: i32, %arg1: memref<24x8xf32, #tpu.memory_space<vmem>>, %arg2: memref<8x2640xf32, #tpu.memory_space<vmem>>, %arg3: memref<24x2640xf32, #tpu.memory_space<vmem>>) attributes {dimension_semantics = [#tpu.dimension_semantics<parallel>], iteration_bounds = array<i64: 2>, scalar_prefetch = 0 : i64, scratch_operands = 0 : i64, tpu.core_type = #tpu.core_type<tc>, window_params = [{transform_indices = @transform_0, window_bounds = array<i64: 24, 8>}, {pipeline_mode = #tpu.pipeline_mode<synchronous>, transform_indices = @transform_1, window_bounds = array<i64: 8, 2640>}, {transform_indices = @transform_2, window_bounds = array<i64: 24, 2640>}]} {
    %c0 = arith.constant 0 : index
    %c0_0 = arith.constant 0 : index
    %0 = vector.load %arg1[%c0, %c0_0] : memref<24x8xf32, #tpu.memory_space<vmem>>, vector<24x8xf32>
    %c0_1 = arith.constant 0 : index
    %c0_2 = arith.constant 0 : index
    %1 = vector.load %arg2[%c0_1, %c0_2] : memref<8x2640xf32, #tpu.memory_space<vmem>>, vector<8x2640xf32>
    %cst = arith.constant dense<0.000000e+00> : vector<24x2640xf32>
    %2 = tpu.matmul %0, %1, %cst {dimension_numbers = #tpu.dot_dimension_numbers<[1], [0], [0], [1], [0, 0, 1, 1], [], []>} : vector<24x8xf32>, vector<8x2640xf32>, vector<24x2640xf32> -> vector<24x2640xf32>
    %cst_3 = arith.constant 5.000000e-01 : f32
    %3 = vector.broadcast %cst_3 : f32 to vector<24x2640xf32>
    %4 = arith.mulf %3, %2 : vector<24x2640xf32>
    %5 = math.tanh %4 : vector<24x2640xf32>
    %cst_4 = arith.constant 5.000000e-01 : f32
    %6 = vector.broadcast %cst_4 : f32 to vector<24x2640xf32>
    %7 = arith.mulf %6, %5 : vector<24x2640xf32>
    %cst_5 = arith.constant 5.000000e-01 : f32
    %8 = vector.broadcast %cst_5 : f32 to vector<24x2640xf32>
    %9 = arith.addf %7, %8 : vector<24x2640xf32>
    %c0_6 = arith.constant 0 : index
    %c0_7 = arith.constant 0 : index
    %10 = vector.load %arg3[%c0_6, %c0_7] : memref<24x2640xf32, #tpu.memory_space<vmem>>, vector<24x2640xf32>
    tpu.vector_store %arg3[%c0_6, %c0_7], %9 {strides = array<i32>} : memref<24x2640xf32, #tpu.memory_space<vmem>>, vector<24x2640xf32>,
    return
  }
  func.func @transform_0(%arg0: i32) -> (i32, i32) {
    %c0_i32 = arith.constant 0 : i32
    %c0_i32_0 = arith.constant 0 : i32
    return %arg0, %c0_i32 : i32, i32
  }
  func.func @transform_1(%arg0: i32) -> (i32, i32) {
    %c0_i32 = arith.constant 0 : i32
    %c0_i32_0 = arith.constant 0 : i32
    %c0_i32_1 = arith.constant 0 : i32
    return %c0_i32, %c0_i32_0 : i32, i32
  }
  func.func @transform_2(%arg0: i32) -> (i32, i32) {
    %c0_i32 = arith.constant 0 : i32
    %c0_i32_0 = arith.constant 0 : i32
    return %arg0, %c0_i32 : i32, i32
  }
}

</mosaic_0001>

<llo_original>
// kernel: squeeze.2
$region0: #{squeeze.2}
  %s0 = inlined_call_operand.vmem [shape: f32[1,4,12,22,10], index: 0, kind: input, shape index: {}]
  %s1 = inlined_call_operand.vmem [shape: f32[4,2640], index: 1, kind: output, shape index: {}]
  $region1: #{squeeze.2} parent=0
    #allocation0 [shape = 'u8[86016]{0}', space=vmem, size = 0x15000, scoped, tag = 'scoped mem for output reshape']
    %s2 = smov 3
    %v3 = vld [vmem:[%s0] ss:$68 sm:%s2]
    %vm4 = vcmask 80896
    %5 = vst.msk [vmem:[#allocation0] ss:$40 sm:$0x3] %vm4, %v3
    %s6 = scalar_lea.vmem %s0, 138
    %v7 = vld [vmem:[%s6] ss:$70 sm:$0x7]
    %vm8 = vcmask 80896
    %s9 = scalar_lea.vmem [#allocation0], 80
    %10 = vst.msk [vmem:[%s9] ss:$40 sm:$0x7] %vm8, %v7
    %s11 = scalar_lea.vmem %s0, 288
    %s12 = smov 3
    %v13 = vld [vmem:[%s11] ss:$68 sm:%s12]
    %vm14 = vcmask 80896
    %s15 = scalar_lea.vmem [#allocation0], 1
    %16 = vst.msk [vmem:[%s15] ss:$40 sm:$0x3] %vm14, %v13
    %s17 = scalar_lea.vmem %s0, 426
    %v18 = vld [vmem:[%s17] ss:$70 sm:$0x7]
    %vm19 = vcmask 80896
    %s20 = scalar_lea.vmem [#allocation0], 81
    %21 = vst.msk [vmem:[%s20] ss:$40 sm:$0x7] %vm19, %v18
    %s22 = scalar_lea.vmem %s0, 576
    %s23 = smov 3
    %v24 = vld [vmem:[%s22] ss:$68 sm:%s23]
    %vm25 = vcmask 80896
    %s26 = scalar_lea.vmem [#allocation0], 2
    %27 = vst.msk [vmem:[%s26] ss:$40 sm:$0x3] %vm25, %v24
    %s28 = scalar_lea.vmem %s0, 714
    %v29 = vld [vmem:[%s28] ss:$70 sm:$0x7]
    %vm30 = vcmask 80896
    %s31 = scalar_lea.vmem [#allocation0], 82
    %32 = vst.msk [vmem:[%s31] ss:$40 sm:$0x7] %vm30, %v29
    %s33 = scalar_lea.vmem %s0, 864
    %s34 = smov 3
    %v35 = vld [vmem:[%s33] ss:$68 sm:%s34]
    %vm36 = vcmask 80896
    %s37 = scalar_lea.vmem [#allocation0], 3
    %38 = vst.msk [vmem:[%s37] ss:$40 sm:$0x3] %vm36, %v35
    %s39 = scalar_lea.vmem %s0, 1002
    %v40 = vld [vmem:[%s39] ss:$70 sm:$0x7]
    %vm41 = vcmask 80896
    %s42 = scalar_lea.vmem [#allocation0], 83
    %43 = vst.msk [vmem:[%s42] ss:$40 sm:$0x7] %vm41, %v40
    %s44 = scalar_lea.vmem %s0, 55
    %v45 = vld [vmem:[%s44] sm:$0x1]
    %s46 = scalar_lea.vmem %s0, 342
    %v47 = vld [vmem:[%s46] sm:$0x2]
    %vm48 = vcmask 1041409
    %v49 = vsel %vm48, %v47, %v45
    %s50 = scalar_lea.vmem %s0, 629
    %v51 = vld [vmem:[%s50] sm:$0x4]
    %vm52 = vcmask 1042434
    %v53 = vsel %vm52, %v51, %v49
    %s54 = scalar_lea.vmem %s0, 3301
    %s55 = smov 24
    %v56 = vld [vmem:[%s54] ss:$-794 sm:%s55]
    %vm57 = vcmask 1044483
    %v58 = vsel %vm57, %v56, %v53
    %s59 = scalar_lea.vmem %s0, 408
    %v60 = vld [vmem:[%s59] sm:$0x20]
    %vm61 = vcmask 1045509
    %v62 = vsel %vm61, %v60, %v58
    %s63 = scalar_lea.vmem %s0, 695
    %v64 = vld [vmem:[%s63] sm:$0x40]
    %vm65 = vcmask 1046534
    %v66 = vsel %vm65, %v64, %v62
    %s67 = scalar_lea.vmem %s0, 982
    %v68 = vld [vmem:[%s67] sm:$0x80]
    %vm69 = vcmask 1047559
    %v70 = vsel %vm69, %v68, %v66
    %71 = vrot.lane.b32.xlu0 %v70, 126
    %v72 = vpop.permute.xlu0 %71
    %vm73 = vcmask 64512
    %s74 = scalar_lea.vmem [#allocation0], 32
    %75 = vst.msk [vmem:[%s74] sm:$0xf] %vm73, %v72
    %s76 = scalar_lea.vmem [#allocation0], 68
    %77 = vst.msk [vmem:[%s76] sm:$0xf0] %vm73, %v72
    %s78 = scalar_lea.vmem %s0, 125
    %v79 = vld [vmem:[%s78] sm:$0x1]
    %s80 = scalar_lea.vmem %s0, 412
    %v81 = vld [vmem:[%s80] sm:$0x2]
    %vm82 = vcmask 1041409
    %v83 = vsel %vm82, %v81, %v79
    %s84 = scalar_lea.vmem %s0, 699
    %v85 = vld [vmem:[%s84] sm:$0x4]
    %vm86 = vcmask 1042434
    %v87 = vsel %vm86, %v85, %v83
    %s88 = scalar_lea.vmem %s0, 3371
    %s89 = smov 24
    %v90 = vld [vmem:[%s88] ss:$-794 sm:%s89]
    %vm91 = vcmask 1044483
    %v92 = vsel %vm91, %v90, %v87
    %s93 = scalar_lea.vmem %s0, 478
    %v94 = vld [vmem:[%s93] sm:$0x20]
    %vm95 = vcmask 1045509
    %v96 = vsel %vm95, %v94, %v92
    %s97 = scalar_lea.vmem %s0, 765
    %v98 = vld [vmem:[%s97] sm:$0x40]
    %vm99 = vcmask 1046534
    %v100 = vsel %vm99, %v98, %v96
    %s101 = scalar_lea.vmem %s0, 1052
    %v102 = vld [vmem:[%s101] sm:$0x80]
    %vm103 = vcmask 1047559
    %v104 = vsel %vm103, %v102, %v100
    %105 = vrot.lane.b32.xlu0 %v104, 126
    %v106 = vpop.permute.xlu0 %105
    %vm107 = vcmask 1048560
    %s108 = scalar_lea.vmem [#allocation0], 64
    %109 = vst.msk [vmem:[%s108] sm:$0xf] %vm107, %v106
    %s110 = scalar_lea.vmem [#allocation0], 100
    %111 = vst.msk [vmem:[%s110] sm:$0xf0] %vm107, %v106
    %s112 = scalar_lea.vmem %s0, 195
    %v113 = vld [vmem:[%s112] sm:$0x1]
    %s114 = scalar_lea.vmem %s0, 482
    %v115 = vld [vmem:[%s114] sm:$0x2]
    %vm116 = vcmask 1041409
    %v117 = vsel %vm116, %v115, %v113
    %s118 = scalar_lea.vmem %s0, 769
    %v119 = vld [vmem:[%s118] sm:$0x4]
    %vm120 = vcmask 1042434
    %v121 = vsel %vm120, %v119, %v117
    %s122 = scalar_lea.vmem %s0, 3441
    %s123 = smov 24
    %v124 = vld [vmem:[%s122] ss:$-794 sm:%s123]
    %vm125 = vcmask 1044483
    %v126 = vsel %vm125, %v124, %v121
    %s127 = scalar_lea.vmem %s0, 548
    %v128 = vld [vmem:[%s127] sm:$0x20]
    %vm129 = vcmask 1045509
    %v130 = vsel %vm129, %v128, %v126
    %s131 = scalar_lea.vmem %s0, 835
    %v132 = vld [vmem:[%s131] sm:$0x40]
    %vm133 = vcmask 1046534
    %v134 = vsel %vm133, %v132, %v130
    %s135 = scalar_lea.vmem %s0, 1122
    %v136 = vld [vmem:[%s135] sm:$0x80]
    %vm137 = vcmask 1047559
    %v138 = vsel %vm137, %v136, %v134
    %139 = vrot.lane.b32.xlu0 %v138, 126
    %v140 = vpop.permute.xlu0 %139
    %vm141 = vcmask 64512
    %s142 = scalar_lea.vmem [#allocation0], 112
    %143 = vst.msk [vmem:[%s142] sm:$0xf] %vm141, %v140
    %s144 = scalar_lea.vmem [#allocation0], 148
    %145 = vst.msk [vmem:[%s144] sm:$0xf0] %vm141, %v140
    %s146 = scalar_lea.vmem %s0, 265
    %v147 = vld [vmem:[%s146] sm:$0x1]
    %s148 = scalar_lea.vmem %s0, 552
    %v149 = vld [vmem:[%s148] sm:$0x2]
    %vm150 = vcmask 1041409
    %v151 = vsel %vm150, %v149, %v147
    %s152 = scalar_lea.vmem %s0, 839
    %v153 = vld [vmem:[%s152] sm:$0x4]
    %vm154 = vcmask 1042434
    %v155 = vsel %vm154, %v153, %v151
    %s156 = scalar_lea.vmem %s0, 4351
    %s157 = smov 24
    %v158 = vld [vmem:[%s156] ss:$-1074 sm:%s157]
    %vm159 = vcmask 1044483
    %v160 = vsel %vm159, %v158, %v155
    %s161 = scalar_lea.vmem %s0, 338
    %v162 = vld [vmem:[%s161] sm:$0x20]
    %vm163 = vcmask 1045509
    %v164 = vsel %vm163, %v162, %v160
    %s165 = scalar_lea.vmem %s0, 625
    %v166 = vld [vmem:[%s165] sm:$0x40]
    %vm167 = vcmask 1046534
    %v168 = vsel %vm167, %v166, %v164
    %s169 = scalar_lea.vmem %s0, 912
    %v170 = vld [vmem:[%s169] sm:$0x80]
    %vm171 = vcmask 1047559
    %v172 = vsel %vm171, %v170, %v168
    %173 = vrot.lane.b32.xlu0 %v172, 126
    %v174 = vpop.permute.xlu0 %173
    %vm175 = vcmask 1048560
    %s176 = scalar_lea.vmem [#allocation0], 144
    %177 = vst.msk [vmem:[%s176] sm:$0xf] %vm175, %v174
    %s178 = scalar_lea.vmem [#allocation0], 20
    %179 = vst.msk [vmem:[%s178] sm:$0xf0] %vm175, %v174
    %s180 = scalar_lea.vmem %s0, 110
    %v181 = vld [vmem:[%s180] sm:$0x1]
    %s182 = scalar_lea.vmem %s0, 397
    %v183 = vld [vmem:[%s182] sm:$0x2]
    %vm184 = vcmask 1041409
    %v185 = vsel %vm184, %v183, %v181
    %s186 = scalar_lea.vmem %s0, 684
    %v187 = vld [vmem:[%s186] sm:$0x4]
    %vm188 = vcmask 1042434
    %v189 = vsel %vm188, %v187, %v185
    %s190 = scalar_lea.vmem %s0, 3356
    %s191 = smov 24
    %v192 = vld [vmem:[%s190] ss:$-794 sm:%s191]
    %vm193 = vcmask 1044483
    %v194 = vsel %vm193, %v192, %v189
    %s195 = scalar_lea.vmem %s0, 463
    %v196 = vld [vmem:[%s195] sm:$0x20]
    %vm197 = vcmask 1045509
    %v198 = vsel %vm197, %v196, %v194
    %s199 = scalar_lea.vmem %s0, 750
    %v200 = vld [vmem:[%s199] sm:$0x40]
    %vm201 = vcmask 1046534
    %v202 = vsel %vm201, %v200, %v198
    %s203 = scalar_lea.vmem %s0, 1037
    %v204 = vld [vmem:[%s203] sm:$0x80]
    %vm205 = vcmask 1047559
    %v206 = vsel %vm205, %v204, %v202
    %207 = vrot.lane.b32.xlu0 %v206, 124
    %v208 = vpop.permute.xlu0 %207
    %vm209 = vcmask 48128
    %s210 = scalar_lea.vmem [#allocation0], 64
    %211 = vst.msk [vmem:[%s210] sm:$0xf] %vm209, %v208
    %s212 = scalar_lea.vmem [#allocation0], 100
    %213 = vst.msk [vmem:[%s212] sm:$0xf0] %vm209, %v208
    %s214 = scalar_lea.vmem %s0, 180
    %v215 = vld [vmem:[%s214] sm:$0x1]
    %s216 = scalar_lea.vmem %s0, 467
    %v217 = vld [vmem:[%s216] sm:$0x2]
    %vm218 = vcmask 1041409
    %v219 = vsel %vm218, %v217, %v215
    %s220 = scalar_lea.vmem %s0, 754
    %v221 = vld [vmem:[%s220] sm:$0x4]
    %vm222 = vcmask 1042434
    %v223 = vsel %vm222, %v221, %v219
    %s224 = scalar_lea.vmem %s0, 3426
    %s225 = smov 24
    %v226 = vld [vmem:[%s224] ss:$-794 sm:%s225]
    %vm227 = vcmask 1044483
    %v228 = vsel %vm227, %v226, %v223
    %s229 = scalar_lea.vmem %s0, 533
    %v230 = vld [vmem:[%s229] sm:$0x20]
    %vm231 = vcmask 1045509
    %v232 = vsel %vm231, %v230, %v228
    %s233 = scalar_lea.vmem %s0, 820
    %v234 = vld [vmem:[%s233] sm:$0x40]
    %vm235 = vcmask 1046534
    %v236 = vsel %vm235, %v234, %v232
    %s237 = scalar_lea.vmem %s0, 1107
    %v238 = vld [vmem:[%s237] sm:$0x80]
    %vm239 = vcmask 1047559
    %v240 = vsel %vm239, %v238, %v236
    %241 = vrot.lane.b32.xlu0 %v240, 124
    %v242 = vpop.permute.xlu0 %241
    %vm243 = vcmask 1048544
    %s244 = scalar_lea.vmem [#allocation0], 96
    %245 = vst.msk [vmem:[%s244] sm:$0xf] %vm243, %v242
    %s246 = scalar_lea.vmem [#allocation0], 132
    %247 = vst.msk [vmem:[%s246] sm:$0xf0] %vm243, %v242
    %s248 = scalar_lea.vmem %s0, 250
    %v249 = vld [vmem:[%s248] sm:$0x1]
    %s250 = scalar_lea.vmem %s0, 537
    %v251 = vld [vmem:[%s250] sm:$0x2]
    %vm252 = vcmask 1041409
    %v253 = vsel %vm252, %v251, %v249
    %s254 = scalar_lea.vmem %s0, 824
    %v255 = vld [vmem:[%s254] sm:$0x4]
    %vm256 = vcmask 1042434
    %v257 = vsel %vm256, %v255, %v253
    %s258 = scalar_lea.vmem %s0, 4336
    %s259 = smov 24
    %v260 = vld [vmem:[%s258] ss:$-1074 sm:%s259]
    %vm261 = vcmask 1044483
    %v262 = vsel %vm261, %v260, %v257
    %s263 = scalar_lea.vmem %s0, 323
    %v264 = vld [vmem:[%s263] sm:$0x20]
    %vm265 = vcmask 1045509
    %v266 = vsel %vm265, %v264, %v262
    %s267 = scalar_lea.vmem %s0, 610
    %v268 = vld [vmem:[%s267] sm:$0x40]
    %vm269 = vcmask 1046534
    %v270 = vsel %vm269, %v268, %v266
    %s271 = scalar_lea.vmem %s0, 897
    %v272 = vld [vmem:[%s271] sm:$0x80]
    %vm273 = vcmask 1047559
    %v274 = vsel %vm273, %v272, %v270
    %275 = vrot.lane.b32.xlu0 %v274, 124
    %v276 = vpop.permute.xlu0 %275
    %vm277 = vcmask 48128
    %s278 = scalar_lea.vmem [#allocation0], 144
    %279 = vst.msk [vmem:[%s278] sm:$0xf] %vm277, %v276
    %s280 = scalar_lea.vmem [#allocation0], 20
    %281 = vst.msk [vmem:[%s280] sm:$0xf0] %vm277, %v276
    %s282 = scalar_lea.vmem %s0, 40
    %v283 = vld [vmem:[%s282] sm:$0x1]
    %s284 = scalar_lea.vmem %s0, 327
    %v285 = vld [vmem:[%s284] sm:$0x2]
    %vm286 = vcmask 1041409
    %v287 = vsel %vm286, %v285, %v283
    %s288 = scalar_lea.vmem %s0, 614
    %v289 = vld [vmem:[%s288] sm:$0x4]
    %vm290 = vcmask 1042434
    %v291 = vsel %vm290, %v289, %v287
    %s292 = scalar_lea.vmem %s0, 3286
    %s293 = smov 24
    %v294 = vld [vmem:[%s292] ss:$-794 sm:%s293]
    %vm295 = vcmask 1044483
    %v296 = vsel %vm295, %v294, %v291
    %s297 = scalar_lea.vmem %s0, 393
    %v298 = vld [vmem:[%s297] sm:$0x20]
    %vm299 = vcmask 1045509
    %v300 = vsel %vm299, %v298, %v296
    %s301 = scalar_lea.vmem %s0, 680
    %v302 = vld [vmem:[%s301] sm:$0x40]
    %vm303 = vcmask 1046534
    %v304 = vsel %vm303, %v302, %v300
    %s305 = scalar_lea.vmem %s0, 967
    %v306 = vld [vmem:[%s305] sm:$0x80]
    %vm307 = vcmask 1047559
    %v308 = vsel %vm307, %v306, %v304
    %309 = vrot.lane.b32.xlu0 %v308, 124
    %v310 = vpop.permute.xlu0 %309
    %vm311 = vcmask 1048544
    %s312 = scalar_lea.vmem [#allocation0], 16
    %313 = vst.msk [vmem:[%s312] sm:$0xf] %vm311, %v310
    %s314 = scalar_lea.vmem [#allocation0], 52
    %315 = vst.msk [vmem:[%s314] sm:$0xf0] %vm311, %v310
    %s316 = scalar_lea.vmem %s0, 165
    %v317 = vld [vmem:[%s316] sm:$0x1]
    %s318 = scalar_lea.vmem %s0, 452
    %v319 = vld [vmem:[%s318] sm:$0x2]
    %vm320 = vcmask 1041409
    %v321 = vsel %vm320, %v319, %v317
    %s322 = scalar_lea.vmem %s0, 739
    %v323 = vld [vmem:[%s322] sm:$0x4]
    %vm324 = vcmask 1042434
    %v325 = vsel %vm324, %v323, %v321
    %s326 = scalar_lea.vmem %s0, 3411
    %s327 = smov 24
    %v328 = vld [vmem:[%s326] ss:$-794 sm:%s327]
    %vm329 = vcmask 1044483
    %v330 = vsel %vm329, %v328, %v325
    %s331 = scalar_lea.vmem %s0, 518
    %v332 = vld [vmem:[%s331] sm:$0x20]
    %vm333 = vcmask 1045509
    %v334 = vsel %vm333, %v332, %v330
    %s335 = scalar_lea.vmem %s0, 805
    %v336 = vld [vmem:[%s335] sm:$0x40]
    %vm337 = vcmask 1046534
    %v338 = vsel %vm337, %v336, %v334
    %s339 = scalar_lea.vmem %s0, 1092
    %v340 = vld [vmem:[%s339] sm:$0x80]
    %vm341 = vcmask 1047559
    %v342 = vsel %vm341, %v340, %v338
    %343 = vrot.lane.b32.xlu0 %v342, 122
    %v344 = vpop.permute.xlu0 %343
    %vm345 = vcmask 31744
    %s346 = scalar_lea.vmem [#allocation0], 96
    %347 = vst.msk [vmem:[%s346] sm:$0xf] %vm345, %v344
    %s348 = scalar_lea.vmem [#allocation0], 132
    %349 = vst.msk [vmem:[%s348] sm:$0xf0] %vm345, %v344
    %s350 = scalar_lea.vmem %s0, 235
    %v351 = vld [vmem:[%s350] sm:$0x1]
    %s352 = scalar_lea.vmem %s0, 522
    %v353 = vld [vmem:[%s352] sm:$0x2]
    %vm354 = vcmask 1041409
    %v355 = vsel %vm354, %v353, %v351
    %s356 = scalar_lea.vmem %s0, 809
    %v357 = vld [vmem:[%s356] sm:$0x4]
    %vm358 = vcmask 1042434
    %v359 = vsel %vm358, %v357, %v355
    %s360 = scalar_lea.vmem %s0, 4315
    %s361 = smov 24
    %v362 = vld [vmem:[%s360] ss:$-1072 sm:%s361]
    %vm363 = vcmask 1044483
    %v364 = vsel %vm363, %v362, %v359
    %s365 = scalar_lea.vmem %s0, 310
    %v366 = vld [vmem:[%s365] sm:$0x20]
    %vm367 = vcmask 1045509
    %v368 = vsel %vm367, %v366, %v364
    %s369 = scalar_lea.vmem %s0, 597
    %v370 = vld [vmem:[%s369] sm:$0x40]
    %vm371 = vcmask 1046534
    %v372 = vsel %vm371, %v370, %v368
    %s373 = scalar_lea.vmem %s0, 884
    %v374 = vld [vmem:[%s373] sm:$0x80]
    %vm375 = vcmask 1047559
    %v376 = vsel %vm375, %v374, %v372
    %377 = vrot.lane.b32.xlu0 %v376, 122
    %v378 = vpop.permute.xlu0 %377
    %vm379 = vcmask 1048528
    %s380 = scalar_lea.vmem [#allocation0], 128
    %381 = vst.msk [vmem:[%s380] sm:$0xf] %vm379, %v378
    %s382 = scalar_lea.vmem [#allocation0], 4
    %383 = vst.msk [vmem:[%s382] sm:$0xf0] %vm379, %v378
    %s384 = scalar_lea.vmem %s0, 27
    %v385 = vld [vmem:[%s384] sm:$0x1]
    %s386 = scalar_lea.vmem %s0, 314
    %v387 = vld [vmem:[%s386] sm:$0x2]
    %vm388 = vcmask 1041409
    %v389 = vsel %vm388, %v387, %v385
    %s390 = scalar_lea.vmem %s0, 601
    %v391 = vld [vmem:[%s390] sm:$0x4]
    %vm392 = vcmask 1042434
    %v393 = vsel %vm392, %v391, %v389
    %s394 = scalar_lea.vmem %s0, 3273
    %s395 = smov 24
    %v396 = vld [vmem:[%s394] ss:$-794 sm:%s395]
    %vm397 = vcmask 1044483
    %v398 = vsel %vm397, %v396, %v393
    %s399 = scalar_lea.vmem %s0, 380
    %v400 = vld [vmem:[%s399] sm:$0x20]
    %vm401 = vcmask 1045509
    %v402 = vsel %vm401, %v400, %v398
    %s403 = scalar_lea.vmem %s0, 667
    %v404 = vld [vmem:[%s403] sm:$0x40]
    %vm405 = vcmask 1046534
    %v406 = vsel %vm405, %v404, %v402
    %s407 = scalar_lea.vmem %s0, 954
    %v408 = vld [vmem:[%s407] sm:$0x80]
    %vm409 = vcmask 1047559
    %v410 = vsel %vm409, %v408, %v406
    %411 = vrot.lane.b32.xlu0 %v410, 122
    %v412 = vpop.permute.xlu0 %411
    %vm413 = vcmask 31744
    %s414 = scalar_lea.vmem [#allocation0], 16
    %415 = vst.msk [vmem:[%s414] sm:$0xf] %vm413, %v412
    %s416 = scalar_lea.vmem [#allocation0], 52
    %417 = vst.msk [vmem:[%s416] sm:$0xf0] %vm413, %v412
    %s418 = scalar_lea.vmem %s0, 97
    %v419 = vld [vmem:[%s418] sm:$0x1]
    %s420 = scalar_lea.vmem %s0, 384
    %v421 = vld [vmem:[%s420] sm:$0x2]
    %vm422 = vcmask 1041409
    %v423 = vsel %vm422, %v421, %v419
    %s424 = scalar_lea.vmem %s0, 671
    %v425 = vld [vmem:[%s424] sm:$0x4]
    %vm426 = vcmask 1042434
    %v427 = vsel %vm426, %v425, %v423
    %s428 = scalar_lea.vmem %s0, 3349
    %s429 = smov 24
    %v430 = vld [vmem:[%s428] ss:$-796 sm:%s429]
    %vm431 = vcmask 1044483
    %v432 = vsel %vm431, %v430, %v427
    %s433 = scalar_lea.vmem %s0, 448
    %v434 = vld [vmem:[%s433] sm:$0x20]
    %vm435 = vcmask 1045509
    %v436 = vsel %vm435, %v434, %v432
    %s437 = scalar_lea.vmem %s0, 735
    %v438 = vld [vmem:[%s437] sm:$0x40]
    %vm439 = vcmask 1046534
    %v440 = vsel %vm439, %v438, %v436
    %s441 = scalar_lea.vmem %s0, 1022
    %v442 = vld [vmem:[%s441] sm:$0x80]
    %vm443 = vcmask 1047559
    %v444 = vsel %vm443, %v442, %v440
    %445 = vrot.lane.b32.xlu0 %v444, 122
    %v446 = vpop.permute.xlu0 %445
    %vm447 = vcmask 1048528
    %s448 = scalar_lea.vmem [#allocation0], 48
    %449 = vst.msk [vmem:[%s448] sm:$0xf] %vm447, %v446
    %s450 = scalar_lea.vmem [#allocation0], 84
    %451 = vst.msk [vmem:[%s450] sm:$0xf0] %vm447, %v446
    %s452 = scalar_lea.vmem %s0, 222
    %v453 = vld [vmem:[%s452] sm:$0x1]
    %s454 = scalar_lea.vmem %s0, 509
    %v455 = vld [vmem:[%s454] sm:$0x2]
    %vm456 = vcmask 1041409
    %v457 = vsel %vm456, %v455, %v453
    %s458 = scalar_lea.vmem %s0, 796
    %v459 = vld [vmem:[%s458] sm:$0x4]
    %vm460 = vcmask 1042434
    %v461 = vsel %vm460, %v459, %v457
    %s462 = scalar_lea.vmem %s0, 4308
    %s463 = smov 24
    %v464 = vld [vmem:[%s462] ss:$-1074 sm:%s463]
    %vm465 = vcmask 1044483
    %v466 = vsel %vm465, %v464, %v461
    %s467 = scalar_lea.vmem %s0, 295
    %v468 = vld [vmem:[%s467] sm:$0x20]
    %vm469 = vcmask 1045509
    %v470 = vsel %vm469, %v468, %v466
    %s471 = scalar_lea.vmem %s0, 582
    %v472 = vld [vmem:[%s471] sm:$0x40]
    %vm473 = vcmask 1046534
    %v474 = vsel %vm473, %v472, %v470
    %s475 = scalar_lea.vmem %s0, 869
    %v476 = vld [vmem:[%s475] sm:$0x80]
    %vm477 = vcmask 1047559
    %v478 = vsel %vm477, %v476, %v474
    %479 = vrot.lane.b32.xlu0 %v478, 120
    %v480 = vpop.permute.xlu0 %479
    %vm481 = vcmask 15360
    %s482 = scalar_lea.vmem [#allocation0], 128
    %483 = vst.msk [vmem:[%s482] sm:$0xf] %vm481, %v480
    %s484 = scalar_lea.vmem [#allocation0], 4
    %485 = vst.msk [vmem:[%s484] sm:$0xf0] %vm481, %v480
    %s486 = scalar_lea.vmem %s0, 12
    %v487 = vld [vmem:[%s486] sm:$0x1]
    %s488 = scalar_lea.vmem %s0, 299
    %v489 = vld [vmem:[%s488] sm:$0x2]
    %vm490 = vcmask 1041409
    %v491 = vsel %vm490, %v489, %v487
    %s492 = scalar_lea.vmem %s0, 586
    %v493 = vld [vmem:[%s492] sm:$0x4]
    %vm494 = vcmask 1042434
    %v495 = vsel %vm494, %v493, %v491
    %s496 = scalar_lea.vmem %s0, 3258
    %s497 = smov 24
    %v498 = vld [vmem:[%s496] ss:$-794 sm:%s497]
    %vm499 = vcmask 1044483
    %v500 = vsel %vm499, %v498, %v495
    %s501 = scalar_lea.vmem %s0, 365
    %v502 = vld [vmem:[%s501] sm:$0x20]
    %vm503 = vcmask 1045509
    %v504 = vsel %vm503, %v502, %v500
    %s505 = scalar_lea.vmem %s0, 652
    %v506 = vld [vmem:[%s505] sm:$0x40]
    %vm507 = vcmask 1046534
    %v508 = vsel %vm507, %v506, %v504
    %s509 = scalar_lea.vmem %s0, 939
    %v510 = vld [vmem:[%s509] sm:$0x80]
    %vm511 = vcmask 1047559
    %v512 = vsel %vm511, %v510, %v508
    %513 = vrot.lane.b32.xlu0 %v512, 120
    %v514 = vpop.permute.xlu0 %513
    %vm515 = vcmask 1048512
    %516 = vst.msk [vmem:[#allocation0] sm:$0xf] %vm515, %v514
    %s517 = scalar_lea.vmem [#allocation0], 36
    %518 = vst.msk [vmem:[%s517] sm:$0xf0] %vm515, %v514
    %s519 = scalar_lea.vmem %s0, 82
    %v520 = vld [vmem:[%s519] sm:$0x1]
    %s521 = scalar_lea.vmem %s0, 369
    %v522 = vld [vmem:[%s521] sm:$0x2]
    %vm523 = vcmask 1041409
    %v524 = vsel %vm523, %v522, %v520
    %s525 = scalar_lea.vmem %s0, 656
    %v526 = vld [vmem:[%s525] sm:$0x4]
    %vm527 = vcmask 1042434
    %v528 = vsel %vm527, %v526, %v524
    %s529 = scalar_lea.vmem %s0, 3328
    %s530 = smov 24
    %v531 = vld [vmem:[%s529] ss:$-794 sm:%s530]
    %vm532 = vcmask 1044483
    %v533 = vsel %vm532, %v531, %v528
    %s534 = scalar_lea.vmem %s0, 435
    %v535 = vld [vmem:[%s534] sm:$0x20]
    %vm536 = vcmask 1045509
    %v537 = vsel %vm536, %v535, %v533
    %s538 = scalar_lea.vmem %s0, 722
    %v539 = vld [vmem:[%s538] sm:$0x40]
    %vm540 = vcmask 1046534
    %v541 = vsel %vm540, %v539, %v537
    %s542 = scalar_lea.vmem %s0, 1009
    %v543 = vld [vmem:[%s542] sm:$0x80]
    %vm544 = vcmask 1047559
    %v545 = vsel %vm544, %v543, %v541
    %546 = vrot.lane.b32.xlu0 %v545, 120
    %v547 = vpop.permute.xlu0 %546
    %vm548 = vcmask 15360
    %s549 = scalar_lea.vmem [#allocation0], 48
    %550 = vst.msk [vmem:[%s549] sm:$0xf] %vm548, %v547
    %s551 = scalar_lea.vmem [#allocation0], 84
    %552 = vst.msk [vmem:[%s551] sm:$0xf0] %vm548, %v547
    %s553 = scalar_lea.vmem %s0, 152
    %v554 = vld [vmem:[%s553] sm:$0x1]
    %s555 = scalar_lea.vmem %s0, 439
    %v556 = vld [vmem:[%s555] sm:$0x2]
    %vm557 = vcmask 1041409
    %v558 = vsel %vm557, %v556, %v554
    %s559 = scalar_lea.vmem %s0, 726
    %v560 = vld [vmem:[%s559] sm:$0x4]
    %vm561 = vcmask 1042434
    %v562 = vsel %vm561, %v560, %v558
    %s563 = scalar_lea.vmem %s0, 3398
    %s564 = smov 24
    %v565 = vld [vmem:[%s563] ss:$-794 sm:%s564]
    %vm566 = vcmask 1044483
    %v567 = vsel %vm566, %v565, %v562
    %s568 = scalar_lea.vmem %s0, 505
    %v569 = vld [vmem:[%s568] sm:$0x20]
    %vm570 = vcmask 1045509
    %v571 = vsel %vm570, %v569, %v567
    %s572 = scalar_lea.vmem %s0, 792
    %v573 = vld [vmem:[%s572] sm:$0x40]
    %vm574 = vcmask 1046534
    %v575 = vsel %vm574, %v573, %v571
    %s576 = scalar_lea.vmem %s0, 1079
    %v577 = vld [vmem:[%s576] sm:$0x80]
    %vm578 = vcmask 1047559
    %v579 = vsel %vm578, %v577, %v575
    %580 = vrot.lane.b32.xlu0 %v579, 120
    %v581 = vpop.permute.xlu0 %580
    %vm582 = vcmask 1048512
    %s583 = scalar_lea.vmem [#allocation0], 80
    %584 = vst.msk [vmem:[%s583] sm:$0xf] %vm582, %v581
    %s585 = scalar_lea.vmem [#allocation0], 116
    %586 = vst.msk [vmem:[%s585] sm:$0xf0] %vm582, %v581
    %s587 = scalar_lea.vmem %s0, 67
    %v588 = vld [vmem:[%s587] sm:$0x1]
    %s589 = scalar_lea.vmem %s0, 354
    %v590 = vld [vmem:[%s589] sm:$0x2]
    %vm591 = vcmask 1041409
    %v592 = vsel %vm591, %v590, %v588
    %s593 = scalar_lea.vmem %s0, 641
    %v594 = vld [vmem:[%s593] sm:$0x4]
    %vm595 = vcmask 1042434
    %v596 = vsel %vm595, %v594, %v592
    %s597 = scalar_lea.vmem %s0, 3313
    %s598 = smov 24
    %v599 = vld [vmem:[%s597] ss:$-794 sm:%s598]
    %vm600 = vcmask 1044483
    %v601 = vsel %vm600, %v599, %v596
    %s602 = scalar_lea.vmem %s0, 420
    %v603 = vld [vmem:[%s602] sm:$0x20]
    %vm604 = vcmask 1045509
    %v605 = vsel %vm604, %v603, %v601
    %s606 = scalar_lea.vmem %s0, 707
    %v607 = vld [vmem:[%s606] sm:$0x40]
    %vm608 = vcmask 1046534
    %v609 = vsel %vm608, %v607, %v605
    %s610 = scalar_lea.vmem %s0, 994
    %v611 = vld [vmem:[%s610] sm:$0x80]
    %vm612 = vcmask 1047559
    %v613 = vsel %vm612, %v611, %v609
    %614 = vrot.lane.b32.xlu0 %v613, 118
    %v615 = vpop.permute.xlu0 %614
    %vm616 = vcmask 1048496
    %s617 = scalar_lea.vmem [#allocation0], 32
    %618 = vst.msk [vmem:[%s617] sm:$0xf] %vm616, %v615
    %s619 = scalar_lea.vmem [#allocation0], 68
    %620 = vst.msk [vmem:[%s619] sm:$0xf0] %vm616, %v615
    %s621 = scalar_lea.vmem %s0, 207
    %v622 = vld [vmem:[%s621] sm:$0x1]
    %s623 = scalar_lea.vmem %s0, 494
    %v624 = vld [vmem:[%s623] sm:$0x2]
    %vm625 = vcmask 1041409
    %v626 = vsel %vm625, %v624, %v622
    %s627 = scalar_lea.vmem %s0, 781
    %v628 = vld [vmem:[%s627] sm:$0x4]
    %vm629 = vcmask 1042434
    %v630 = vsel %vm629, %v628, %v626
    %s631 = scalar_lea.vmem %s0, 3453
    %s632 = smov 24
    %v633 = vld [vmem:[%s631] ss:$-794 sm:%s632]
    %vm634 = vcmask 1044483
    %v635 = vsel %vm634, %v633, %v630
    %s636 = scalar_lea.vmem %s0, 560
    %v637 = vld [vmem:[%s636] sm:$0x20]
    %vm638 = vcmask 1045509
    %v639 = vsel %vm638, %v637, %v635
    %s640 = scalar_lea.vmem %s0, 847
    %v641 = vld [vmem:[%s640] sm:$0x40]
    %vm642 = vcmask 1046534
    %v643 = vsel %vm642, %v641, %v639
    %s644 = scalar_lea.vmem %s0, 1134
    %v645 = vld [vmem:[%s644] sm:$0x80]
    %vm646 = vcmask 1047559
    %v647 = vsel %vm646, %v645, %v643
    %648 = vrot.lane.b32.xlu0 %v647, 118
    %v649 = vpop.permute.xlu0 %648
    %vm650 = vcmask 1048496
    %s651 = scalar_lea.vmem [#allocation0], 112
    %652 = vst.msk [vmem:[%s651] sm:$0xf] %vm650, %v649
    %s653 = scalar_lea.vmem [#allocation0], 148
    %654 = vst.msk [vmem:[%s653] sm:$0xf0] %vm650, %v649
    %s655 = scalar_lea.vmem %s0, 124
    %v656 = vld [vmem:[%s655] sm:$0x1]
    %s657 = scalar_lea.vmem %s0, 411
    %v658 = vld [vmem:[%s657] sm:$0x2]
    %vm659 = vcmask 1041409
    %v660 = vsel %vm659, %v658, %v656
    %s661 = scalar_lea.vmem %s0, 698
    %v662 = vld [vmem:[%s661] sm:$0x4]
    %vm663 = vcmask 1042434
    %v664 = vsel %vm663, %v662, %v660
    %s665 = scalar_lea.vmem %s0, 3370
    %s666 = smov 24
    %v667 = vld [vmem:[%s665] ss:$-794 sm:%s666]
    %vm668 = vcmask 1044483
    %v669 = vsel %vm668, %v667, %v664
    %s670 = scalar_lea.vmem %s0, 477
    %v671 = vld [vmem:[%s670] sm:$0x20]
    %vm672 = vcmask 1045509
    %v673 = vsel %vm672, %v671, %v669
    %s674 = scalar_lea.vmem %s0, 764
    %v675 = vld [vmem:[%s674] sm:$0x40]
    %vm676 = vcmask 1046534
    %v677 = vsel %vm676, %v675, %v673
    %s678 = scalar_lea.vmem %s0, 1051
    %v679 = vld [vmem:[%s678] sm:$0x80]
    %vm680 = vcmask 1047559
    %v681 = vsel %vm680, %v679, %v677
    %682 = vrot.lane.b32.xlu0 %v681, 116
    %v683 = vpop.permute.xlu0 %682
    %vm684 = vcmask 1032096
    %s685 = scalar_lea.vmem [#allocation0], 64
    %686 = vst.msk [vmem:[%s685] sm:$0xf] %vm684, %v683
    %s687 = scalar_lea.vmem [#allocation0], 100
    %688 = vst.msk [vmem:[%s687] sm:$0xf0] %vm684, %v683
    %s689 = scalar_lea.vmem %s0, 264
    %v690 = vld [vmem:[%s689] sm:$0x1]
    %s691 = scalar_lea.vmem %s0, 551
    %v692 = vld [vmem:[%s691] sm:$0x2]
    %vm693 = vcmask 1041409
    %v694 = vsel %vm693, %v692, %v690
    %s695 = scalar_lea.vmem %s0, 838
    %v696 = vld [vmem:[%s695] sm:$0x4]
    %vm697 = vcmask 1042434
    %v698 = vsel %vm697, %v696, %v694
    %s699 = scalar_lea.vmem %s0, 4350
    %s700 = smov 24
    %v701 = vld [vmem:[%s699] ss:$-1074 sm:%s700]
    %vm702 = vcmask 1044483
    %v703 = vsel %vm702, %v701, %v698
    %s704 = scalar_lea.vmem %s0, 337
    %v705 = vld [vmem:[%s704] sm:$0x20]
    %vm706 = vcmask 1045509
    %v707 = vsel %vm706, %v705, %v703
    %s708 = scalar_lea.vmem %s0, 624
    %v709 = vld [vmem:[%s708] sm:$0x40]
    %vm710 = vcmask 1046534
    %v711 = vsel %vm710, %v709, %v707
    %s712 = scalar_lea.vmem %s0, 911
    %v713 = vld [vmem:[%s712] sm:$0x80]
    %vm714 = vcmask 1047559
    %v715 = vsel %vm714, %v713, %v711
    %716 = vrot.lane.b32.xlu0 %v715, 116
    %v717 = vpop.permute.xlu0 %716
    %vm718 = vcmask 1032096
    %s719 = scalar_lea.vmem [#allocation0], 144
    %720 = vst.msk [vmem:[%s719] sm:$0xf] %vm718, %v717
    %s721 = scalar_lea.vmem [#allocation0], 20
    %722 = vst.msk [vmem:[%s721] sm:$0xf0] %vm718, %v717
    %s723 = scalar_lea.vmem %s0, 179
    %v724 = vld [vmem:[%s723] sm:$0x1]
    %s725 = scalar_lea.vmem %s0, 466
    %v726 = vld [vmem:[%s725] sm:$0x2]
    %vm727 = vcmask 1041409
    %v728 = vsel %vm727, %v726, %v724
    %s729 = scalar_lea.vmem %s0, 753
    %v730 = vld [vmem:[%s729] sm:$0x4]
    %vm731 = vcmask 1042434
    %v732 = vsel %vm731, %v730, %v728
    %s733 = scalar_lea.vmem %s0, 3425
    %s734 = smov 24
    %v735 = vld [vmem:[%s733] ss:$-794 sm:%s734]
    %vm736 = vcmask 1044483
    %v737 = vsel %vm736, %v735, %v732
    %s738 = scalar_lea.vmem %s0, 532
    %v739 = vld [vmem:[%s738] sm:$0x20]
    %vm740 = vcmask 1045509
    %v741 = vsel %vm740, %v739, %v737
    %s742 = scalar_lea.vmem %s0, 819
    %v743 = vld [vmem:[%s742] sm:$0x40]
    %vm744 = vcmask 1046534
    %v745 = vsel %vm744, %v743, %v741
    %s746 = scalar_lea.vmem %s0, 1106
    %v747 = vld [vmem:[%s746] sm:$0x80]
    %vm748 = vcmask 1047559
    %v749 = vsel %vm748, %v747, %v745
    %750 = vrot.lane.b32.xlu0 %v749, 114
    %v751 = vpop.permute.xlu0 %750
    %vm752 = vcmask 1015696
    %s753 = scalar_lea.vmem [#allocation0], 96
    %754 = vst.msk [vmem:[%s753] sm:$0xf] %vm752, %v751
    %s755 = scalar_lea.vmem [#allocation0], 132
    %756 = vst.msk [vmem:[%s755] sm:$0xf0] %vm752, %v751
    %s757 = scalar_lea.vmem %s0, 39
    %v758 = vld [vmem:[%s757] sm:$0x1]
    %s759 = scalar_lea.vmem %s0, 326
    %v760 = vld [vmem:[%s759] sm:$0x2]
    %vm761 = vcmask 1041409
    %v762 = vsel %vm761, %v760, %v758
    %s763 = scalar_lea.vmem %s0, 613
    %v764 = vld [vmem:[%s763] sm:$0x4]
    %vm765 = vcmask 1042434
    %v766 = vsel %vm765, %v764, %v762
    %s767 = scalar_lea.vmem %s0, 3285
    %s768 = smov 24
    %v769 = vld [vmem:[%s767] ss:$-794 sm:%s768]
    %vm770 = vcmask 1044483
    %v771 = vsel %vm770, %v769, %v766
    %s772 = scalar_lea.vmem %s0, 392
    %v773 = vld [vmem:[%s772] sm:$0x20]
    %vm774 = vcmask 1045509
    %v775 = vsel %vm774, %v773, %v771
    %s776 = scalar_lea.vmem %s0, 679
    %v777 = vld [vmem:[%s776] sm:$0x40]
    %vm778 = vcmask 1046534
    %v779 = vsel %vm778, %v777, %v775
    %s780 = scalar_lea.vmem %s0, 966
    %v781 = vld [vmem:[%s780] sm:$0x80]
    %vm782 = vcmask 1047559
    %v783 = vsel %vm782, %v781, %v779
    %784 = vrot.lane.b32.xlu0 %v783, 114
    %v785 = vpop.permute.xlu0 %784
    %vm786 = vcmask 1015696
    %s787 = scalar_lea.vmem [#allocation0], 16
    %788 = vst.msk [vmem:[%s787] sm:$0xf] %vm786, %v785
    %s789 = scalar_lea.vmem [#allocation0], 52
    %790 = vst.msk [vmem:[%s789] sm:$0xf0] %vm786, %v785
    %s791 = scalar_lea.vmem %s0, 234
    %v792 = vld [vmem:[%s791] sm:$0x1]
    %s793 = scalar_lea.vmem %s0, 521
    %v794 = vld [vmem:[%s793] sm:$0x2]
    %vm795 = vcmask 1041409
    %v796 = vsel %vm795, %v794, %v792
    %s797 = scalar_lea.vmem %s0, 808
    %v798 = vld [vmem:[%s797] sm:$0x4]
    %vm799 = vcmask 1042434
    %v800 = vsel %vm799, %v798, %v796
    %s801 = scalar_lea.vmem %s0, 4314
    %s802 = smov 24
    %v803 = vld [vmem:[%s801] ss:$-1072 sm:%s802]
    %vm804 = vcmask 1044483
    %v805 = vsel %vm804, %v803, %v800
    %s806 = scalar_lea.vmem %s0, 309
    %v807 = vld [vmem:[%s806] sm:$0x20]
    %vm808 = vcmask 1045509
    %v809 = vsel %vm808, %v807, %v805
    %s810 = scalar_lea.vmem %s0, 596
    %v811 = vld [vmem:[%s810] sm:$0x40]
    %vm812 = vcmask 1046534
    %v813 = vsel %vm812, %v811, %v809
    %s814 = scalar_lea.vmem %s0, 883
    %v815 = vld [vmem:[%s814] sm:$0x80]
    %vm816 = vcmask 1047559
    %v817 = vsel %vm816, %v815, %v813
    %818 = vrot.lane.b32.xlu0 %v817, 112
    %v819 = vpop.permute.xlu0 %818
    %vm820 = vcmask 999296
    %s821 = scalar_lea.vmem [#allocation0], 128
    %822 = vst.msk [vmem:[%s821] sm:$0xf] %vm820, %v819
    %s823 = scalar_lea.vmem [#allocation0], 4
    %824 = vst.msk [vmem:[%s823] sm:$0xf0] %vm820, %v819
    %s825 = scalar_lea.vmem %s0, 96
    %v826 = vld [vmem:[%s825] sm:$0x1]
    %s827 = scalar_lea.vmem %s0, 383
    %v828 = vld [vmem:[%s827] sm:$0x2]
    %vm829 = vcmask 1041409
    %v830 = vsel %vm829, %v828, %v826
    %s831 = scalar_lea.vmem %s0, 670
    %v832 = vld [vmem:[%s831] sm:$0x4]
    %vm833 = vcmask 1042434
    %v834 = vsel %vm833, %v832, %v830
    %s835 = scalar_lea.vmem %s0, 3348
    %s836 = smov 24
    %v837 = vld [vmem:[%s835] ss:$-796 sm:%s836]
    %vm838 = vcmask 1044483
    %v839 = vsel %vm838, %v837, %v834
    %s840 = scalar_lea.vmem %s0, 447
    %v841 = vld [vmem:[%s840] sm:$0x20]
    %vm842 = vcmask 1045509
    %v843 = vsel %vm842, %v841, %v839
    %s844 = scalar_lea.vmem %s0, 734
    %v845 = vld [vmem:[%s844] sm:$0x40]
    %vm846 = vcmask 1046534
    %v847 = vsel %vm846, %v845, %v843
    %s848 = scalar_lea.vmem %s0, 1021
    %v849 = vld [vmem:[%s848] sm:$0x80]
    %vm850 = vcmask 1047559
    %v851 = vsel %vm850, %v849, %v847
    %852 = vrot.lane.b32.xlu0 %v851, 112
    %v853 = vpop.permute.xlu0 %852
    %vm854 = vcmask 999296
    %s855 = scalar_lea.vmem [#allocation0], 48
    %856 = vst.msk [vmem:[%s855] sm:$0xf] %vm854, %v853
    %s857 = scalar_lea.vmem [#allocation0], 84
    %858 = vst.msk [vmem:[%s857] sm:$0xf0] %vm854, %v853
    %s859 = scalar_lea.vmem %s0, 11
    %v860 = vld [vmem:[%s859] sm:$0x1]
    %s861 = scalar_lea.vmem %s0, 298
    %v862 = vld [vmem:[%s861] sm:$0x2]
    %vm863 = vcmask 1041409
    %v864 = vsel %vm863, %v862, %v860
    %s865 = scalar_lea.vmem %s0, 585
    %v866 = vld [vmem:[%s865] sm:$0x4]
    %vm867 = vcmask 1042434
    %v868 = vsel %vm867, %v866, %v864
    %s869 = scalar_lea.vmem %s0, 3257
    %s870 = smov 24
    %v871 = vld [vmem:[%s869] ss:$-794 sm:%s870]
    %vm872 = vcmask 1044483
    %v873 = vsel %vm872, %v871, %v868
    %s874 = scalar_lea.vmem %s0, 364
    %v875 = vld [vmem:[%s874] sm:$0x20]
    %vm876 = vcmask 1045509
    %v877 = vsel %vm876, %v875, %v873
    %s878 = scalar_lea.vmem %s0, 651
    %v879 = vld [vmem:[%s878] sm:$0x40]
    %vm880 = vcmask 1046534
    %v881 = vsel %vm880, %v879, %v877
    %s882 = scalar_lea.vmem %s0, 938
    %v883 = vld [vmem:[%s882] sm:$0x80]
    %vm884 = vcmask 1047559
    %v885 = vsel %vm884, %v883, %v881
    %886 = vrot.lane.b32.xlu0 %v885, 110
    %v887 = vpop.permute.xlu0 %886
    %vm888 = vcmask 982896
    %889 = vst.msk [vmem:[#allocation0] sm:$0xf] %vm888, %v887
    %s890 = scalar_lea.vmem [#allocation0], 36
    %891 = vst.msk [vmem:[%s890] sm:$0xf0] %vm888, %v887
    %s892 = scalar_lea.vmem %s0, 151
    %v893 = vld [vmem:[%s892] sm:$0x1]
    %s894 = scalar_lea.vmem %s0, 438
    %v895 = vld [vmem:[%s894] sm:$0x2]
    %vm896 = vcmask 1041409
    %v897 = vsel %vm896, %v895, %v893
    %s898 = scalar_lea.vmem %s0, 725
    %v899 = vld [vmem:[%s898] sm:$0x4]
    %vm900 = vcmask 1042434
    %v901 = vsel %vm900, %v899, %v897
    %s902 = scalar_lea.vmem %s0, 3397
    %s903 = smov 24
    %v904 = vld [vmem:[%s902] ss:$-794 sm:%s903]
    %vm905 = vcmask 1044483
    %v906 = vsel %vm905, %v904, %v901
    %s907 = scalar_lea.vmem %s0, 504
    %v908 = vld [vmem:[%s907] sm:$0x20]
    %vm909 = vcmask 1045509
    %v910 = vsel %vm909, %v908, %v906
    %s911 = scalar_lea.vmem %s0, 791
    %v912 = vld [vmem:[%s911] sm:$0x40]
    %vm913 = vcmask 1046534
    %v914 = vsel %vm913, %v912, %v910
    %s915 = scalar_lea.vmem %s0, 1078
    %v916 = vld [vmem:[%s915] sm:$0x80]
    %vm917 = vcmask 1047559
    %v918 = vsel %vm917, %v916, %v914
    %919 = vrot.lane.b32.xlu0 %v918, 110
    %v920 = vpop.permute.xlu0 %919
    %vm921 = vcmask 982896
    %s922 = scalar_lea.vmem [#allocation0], 80
    %923 = vst.msk [vmem:[%s922] sm:$0xf] %vm921, %v920
    %s924 = scalar_lea.vmem [#allocation0], 116
    %925 = vst.msk [vmem:[%s924] sm:$0xf0] %vm921, %v920
    %s926 = scalar_lea.vmem %s0, 66
    %v927 = vld [vmem:[%s926] sm:$0x1]
    %s928 = scalar_lea.vmem %s0, 353
    %v929 = vld [vmem:[%s928] sm:$0x2]
    %vm930 = vcmask 1041409
    %v931 = vsel %vm930, %v929, %v927
    %s932 = scalar_lea.vmem %s0, 640
    %v933 = vld [vmem:[%s932] sm:$0x4]
    %vm934 = vcmask 1042434
    %v935 = vsel %vm934, %v933, %v931
    %s936 = scalar_lea.vmem %s0, 3312
    %s937 = smov 24
    %v938 = vld [vmem:[%s936] ss:$-794 sm:%s937]
    %vm939 = vcmask 1044483
    %v940 = vsel %vm939, %v938, %v935
    %s941 = scalar_lea.vmem %s0, 419
    %v942 = vld [vmem:[%s941] sm:$0x20]
    %vm943 = vcmask 1045509
    %v944 = vsel %vm943, %v942, %v940
    %s945 = scalar_lea.vmem %s0, 706
    %v946 = vld [vmem:[%s945] sm:$0x40]
    %vm947 = vcmask 1046534
    %v948 = vsel %vm947, %v946, %v944
    %s949 = scalar_lea.vmem %s0, 993
    %v950 = vld [vmem:[%s949] sm:$0x80]
    %vm951 = vcmask 1047559
    %v952 = vsel %vm951, %v950, %v948
    %953 = vrot.lane.b32.xlu0 %v952, 108
    %v954 = vpop.permute.xlu0 %953
    %vm955 = vcmask 966496
    %s956 = scalar_lea.vmem [#allocation0], 32
    %957 = vst.msk [vmem:[%s956] sm:$0xf] %vm955, %v954
    %s958 = scalar_lea.vmem [#allocation0], 68
    %959 = vst.msk [vmem:[%s958] sm:$0xf0] %vm955, %v954
    %s960 = scalar_lea.vmem %s0, 206
    %v961 = vld [vmem:[%s960] sm:$0x1]
    %s962 = scalar_lea.vmem %s0, 493
    %v963 = vld [vmem:[%s962] sm:$0x2]
    %vm964 = vcmask 1041409
    %v965 = vsel %vm964, %v963, %v961
    %s966 = scalar_lea.vmem %s0, 780
    %v967 = vld [vmem:[%s966] sm:$0x4]
    %vm968 = vcmask 1042434
    %v969 = vsel %vm968, %v967, %v965
    %s970 = scalar_lea.vmem %s0, 3452
    %s971 = smov 24
    %v972 = vld [vmem:[%s970] ss:$-794 sm:%s971]
    %vm973 = vcmask 1044483
    %v974 = vsel %vm973, %v972, %v969
    %s975 = scalar_lea.vmem %s0, 559
    %v976 = vld [vmem:[%s975] sm:$0x20]
    %vm977 = vcmask 1045509
    %v978 = vsel %vm977, %v976, %v974
    %s979 = scalar_lea.vmem %s0, 846
    %v980 = vld [vmem:[%s979] sm:$0x40]
    %vm981 = vcmask 1046534
    %v982 = vsel %vm981, %v980, %v978
    %s983 = scalar_lea.vmem %s0, 1133
    %v984 = vld [vmem:[%s983] sm:$0x80]
    %vm985 = vcmask 1047559
    %v986 = vsel %vm985, %v984, %v982
    %987 = vrot.lane.b32.xlu0 %v986, 108
    %v988 = vpop.permute.xlu0 %987
    %vm989 = vcmask 966496
    %s990 = scalar_lea.vmem [#allocation0], 112
    %991 = vst.msk [vmem:[%s990] sm:$0xf] %vm989, %v988
    %s992 = scalar_lea.vmem [#allocation0], 148
    %993 = vst.msk [vmem:[%s992] sm:$0xf0] %vm989, %v988
    %s994 = scalar_lea.vmem %s0, 123
    %v995 = vld [vmem:[%s994] sm:$0x1]
    %s996 = scalar_lea.vmem %s0, 410
    %v997 = vld [vmem:[%s996] sm:$0x2]
    %vm998 = vcmask 1041409
    %v999 = vsel %vm998, %v997, %v995
    %s1000 = scalar_lea.vmem %s0, 697
    %v1001 = vld [vmem:[%s1000] sm:$0x4]
    %vm1002 = vcmask 1042434
    %v1003 = vsel %vm1002, %v1001, %v999
    %s1004 = scalar_lea.vmem %s0, 3369
    %s1005 = smov 24
    %v1006 = vld [vmem:[%s1004] ss:$-794 sm:%s1005]
    %vm1007 = vcmask 1044483
    %v1008 = vsel %vm1007, %v1006, %v1003
    %s1009 = scalar_lea.vmem %s0, 476
    %v1010 = vld [vmem:[%s1009] sm:$0x20]
    %vm1011 = vcmask 1045509
    %v1012 = vsel %vm1011, %v1010, %v1008
    %s1013 = scalar_lea.vmem %s0, 763
    %v1014 = vld [vmem:[%s1013] sm:$0x40]
    %vm1015 = vcmask 1046534
    %v1016 = vsel %vm1015, %v1014, %v1012
    %s1017 = scalar_lea.vmem %s0, 1050
    %v1018 = vld [vmem:[%s1017] sm:$0x80]
    %vm1019 = vcmask 1047559
    %v1020 = vsel %vm1019, %v1018, %v1016
    %1021 = vrot.lane.b32.xlu0 %v1020, 106
    %v1022 = vpop.permute.xlu0 %1021
    %vm1023 = vcmask 950096
    %s1024 = scalar_lea.vmem [#allocation0], 64
    %1025 = vst.msk [vmem:[%s1024] sm:$0xf] %vm1023, %v1022
    %s1026 = scalar_lea.vmem [#allocation0], 100
    %1027 = vst.msk [vmem:[%s1026] sm:$0xf0] %vm1023, %v1022
    %s1028 = scalar_lea.vmem %s0, 261
    %v1029 = vld [vmem:[%s1028] sm:$0x1]
    %s1030 = scalar_lea.vmem %s0, 548
    %v1031 = vld [vmem:[%s1030] sm:$0x2]
    %vm1032 = vcmask 1041409
    %v1033 = vsel %vm1032, %v1031, %v1029
    %s1034 = scalar_lea.vmem %s0, 835
    %v1035 = vld [vmem:[%s1034] sm:$0x4]
    %vm1036 = vcmask 1042434
    %v1037 = vsel %vm1036, %v1035, %v1033
    %s1038 = scalar_lea.vmem %s0, 4341
    %s1039 = smov 24
    %v1040 = vld [vmem:[%s1038] ss:$-1072 sm:%s1039]
    %vm1041 = vcmask 1044483
    %v1042 = vsel %vm1041, %v1040, %v1037
    %s1043 = scalar_lea.vmem %s0, 336
    %v1044 = vld [vmem:[%s1043] sm:$0x20]
    %vm1045 = vcmask 1045509
    %v1046 = vsel %vm1045, %v1044, %v1042
    %s1047 = scalar_lea.vmem %s0, 623
    %v1048 = vld [vmem:[%s1047] sm:$0x40]
    %vm1049 = vcmask 1046534
    %v1050 = vsel %vm1049, %v1048, %v1046
    %s1051 = scalar_lea.vmem %s0, 910
    %v1052 = vld [vmem:[%s1051] sm:$0x80]
    %vm1053 = vcmask 1047559
    %v1054 = vsel %vm1053, %v1052, %v1050
    %1055 = vrot.lane.b32.xlu0 %v1054, 106
    %v1056 = vpop.permute.xlu0 %1055
    %vm1057 = vcmask 950096
    %s1058 = scalar_lea.vmem [#allocation0], 144
    %1059 = vst.msk [vmem:[%s1058] sm:$0xf] %vm1057, %v1056
    %s1060 = scalar_lea.vmem [#allocation0], 20
    %1061 = vst.msk [vmem:[%s1060] sm:$0xf0] %vm1057, %v1056
    %s1062 = scalar_lea.vmem %s0, 178
    %v1063 = vld [vmem:[%s1062] sm:$0x1]
    %s1064 = scalar_lea.vmem %s0, 465
    %v1065 = vld [vmem:[%s1064] sm:$0x2]
    %vm1066 = vcmask 1041409
    %v1067 = vsel %vm1066, %v1065, %v1063
    %s1068 = scalar_lea.vmem %s0, 752
    %v1069 = vld [vmem:[%s1068] sm:$0x4]
    %vm1070 = vcmask 1042434
    %v1071 = vsel %vm1070, %v1069, %v1067
    %s1072 = scalar_lea.vmem %s0, 3424
    %s1073 = smov 24
    %v1074 = vld [vmem:[%s1072] ss:$-794 sm:%s1073]
    %vm1075 = vcmask 1044483
    %v1076 = vsel %vm1075, %v1074, %v1071
    %s1077 = scalar_lea.vmem %s0, 531
    %v1078 = vld [vmem:[%s1077] sm:$0x20]
    %vm1079 = vcmask 1045509
    %v1080 = vsel %vm1079, %v1078, %v1076
    %s1081 = scalar_lea.vmem %s0, 818
    %v1082 = vld [vmem:[%s1081] sm:$0x40]
    %vm1083 = vcmask 1046534
    %v1084 = vsel %vm1083, %v1082, %v1080
    %s1085 = scalar_lea.vmem %s0, 1105
    %v1086 = vld [vmem:[%s1085] sm:$0x80]
    %vm1087 = vcmask 1047559
    %v1088 = vsel %vm1087, %v1086, %v1084
    %1089 = vrot.lane.b32.xlu0 %v1088, 104
    %v1090 = vpop.permute.xlu0 %1089
    %vm1091 = vcmask 933696
    %s1092 = scalar_lea.vmem [#allocation0], 96
    %1093 = vst.msk [vmem:[%s1092] sm:$0xf] %vm1091, %v1090
    %s1094 = scalar_lea.vmem [#allocation0], 132
    %1095 = vst.msk [vmem:[%s1094] sm:$0xf0] %vm1091, %v1090
    %s1096 = scalar_lea.vmem %s0, 38
    %v1097 = vld [vmem:[%s1096] sm:$0x1]
    %s1098 = scalar_lea.vmem %s0, 325
    %v1099 = vld [vmem:[%s1098] sm:$0x2]
    %vm1100 = vcmask 1041409
    %v1101 = vsel %vm1100, %v1099, %v1097
    %s1102 = scalar_lea.vmem %s0, 612
    %v1103 = vld [vmem:[%s1102] sm:$0x4]
    %vm1104 = vcmask 1042434
    %v1105 = vsel %vm1104, %v1103, %v1101
    %s1106 = scalar_lea.vmem %s0, 3284
    %s1107 = smov 24
    %v1108 = vld [vmem:[%s1106] ss:$-794 sm:%s1107]
    %vm1109 = vcmask 1044483
    %v1110 = vsel %vm1109, %v1108, %v1105
    %s1111 = scalar_lea.vmem %s0, 391
    %v1112 = vld [vmem:[%s1111] sm:$0x20]
    %vm1113 = vcmask 1045509
    %v1114 = vsel %vm1113, %v1112, %v1110
    %s1115 = scalar_lea.vmem %s0, 678
    %v1116 = vld [vmem:[%s1115] sm:$0x40]
    %vm1117 = vcmask 1046534
    %v1118 = vsel %vm1117, %v1116, %v1114
    %s1119 = scalar_lea.vmem %s0, 965
    %v1120 = vld [vmem:[%s1119] sm:$0x80]
    %vm1121 = vcmask 1047559
    %v1122 = vsel %vm1121, %v1120, %v1118
    %1123 = vrot.lane.b32.xlu0 %v1122, 104
    %v1124 = vpop.permute.xlu0 %1123
    %vm1125 = vcmask 933696
    %s1126 = scalar_lea.vmem [#allocation0], 16
    %1127 = vst.msk [vmem:[%s1126] sm:$0xf] %vm1125, %v1124
    %s1128 = scalar_lea.vmem [#allocation0], 52
    %1129 = vst.msk [vmem:[%s1128] sm:$0xf0] %vm1125, %v1124
    %s1130 = scalar_lea.vmem %s0, 233
    %v1131 = vld [vmem:[%s1130] sm:$0x1]
    %s1132 = scalar_lea.vmem %s0, 520
    %v1133 = vld [vmem:[%s1132] sm:$0x2]
    %vm1134 = vcmask 1041409
    %v1135 = vsel %vm1134, %v1133, %v1131
    %s1136 = scalar_lea.vmem %s0, 807
    %v1137 = vld [vmem:[%s1136] sm:$0x4]
    %vm1138 = vcmask 1042434
    %v1139 = vsel %vm1138, %v1137, %v1135
    %s1140 = scalar_lea.vmem %s0, 4313
    %s1141 = smov 24
    %v1142 = vld [vmem:[%s1140] ss:$-1072 sm:%s1141]
    %vm1143 = vcmask 1044483
    %v1144 = vsel %vm1143, %v1142, %v1139
    %s1145 = scalar_lea.vmem %s0, 308
    %v1146 = vld [vmem:[%s1145] sm:$0x20]
    %vm1147 = vcmask 1045509
    %v1148 = vsel %vm1147, %v1146, %v1144
    %s1149 = scalar_lea.vmem %s0, 595
    %v1150 = vld [vmem:[%s1149] sm:$0x40]
    %vm1151 = vcmask 1046534
    %v1152 = vsel %vm1151, %v1150, %v1148
    %s1153 = scalar_lea.vmem %s0, 882
    %v1154 = vld [vmem:[%s1153] sm:$0x80]
    %vm1155 = vcmask 1047559
    %v1156 = vsel %vm1155, %v1154, %v1152
    %1157 = vrot.lane.b32.xlu0 %v1156, 102
    %v1158 = vpop.permute.xlu0 %1157
    %vm1159 = vcmask 917296
    %s1160 = scalar_lea.vmem [#allocation0], 128
    %1161 = vst.msk [vmem:[%s1160] sm:$0xf] %vm1159, %v1158
    %s1162 = scalar_lea.vmem [#allocation0], 4
    %1163 = vst.msk [vmem:[%s1162] sm:$0xf0] %vm1159, %v1158
    %s1164 = scalar_lea.vmem %s0, 93
    %v1165 = vld [vmem:[%s1164] sm:$0x1]
    %s1166 = scalar_lea.vmem %s0, 380
    %v1167 = vld [vmem:[%s1166] sm:$0x2]
    %vm1168 = vcmask 1041409
    %v1169 = vsel %vm1168, %v1167, %v1165
    %s1170 = scalar_lea.vmem %s0, 667
    %v1171 = vld [vmem:[%s1170] sm:$0x4]
    %vm1172 = vcmask 1042434
    %v1173 = vsel %vm1172, %v1171, %v1169
    %s1174 = scalar_lea.vmem %s0, 3339
    %s1175 = smov 24
    %v1176 = vld [vmem:[%s1174] ss:$-794 sm:%s1175]
    %vm1177 = vcmask 1044483
    %v1178 = vsel %vm1177, %v1176, %v1173
    %s1179 = scalar_lea.vmem %s0, 446
    %v1180 = vld [vmem:[%s1179] sm:$0x20]
    %vm1181 = vcmask 1045509
    %v1182 = vsel %vm1181, %v1180, %v1178
    %s1183 = scalar_lea.vmem %s0, 733
    %v1184 = vld [vmem:[%s1183] sm:$0x40]
    %vm1185 = vcmask 1046534
    %v1186 = vsel %vm1185, %v1184, %v1182
    %s1187 = scalar_lea.vmem %s0, 1020
    %v1188 = vld [vmem:[%s1187] sm:$0x80]
    %vm1189 = vcmask 1047559
    %v1190 = vsel %vm1189, %v1188, %v1186
    %1191 = vrot.lane.b32.xlu0 %v1190, 102
    %v1192 = vpop.permute.xlu0 %1191
    %vm1193 = vcmask 917296
    %s1194 = scalar_lea.vmem [#allocation0], 48
    %1195 = vst.msk [vmem:[%s1194] sm:$0xf] %vm1193, %v1192
    %s1196 = scalar_lea.vmem [#allocation0], 84
    %1197 = vst.msk [vmem:[%s1196] sm:$0xf0] %vm1193, %v1192
    %s1198 = scalar_lea.vmem %s0, 10
    %v1199 = vld [vmem:[%s1198] sm:$0x1]
    %s1200 = scalar_lea.vmem %s0, 297
    %v1201 = vld [vmem:[%s1200] sm:$0x2]
    %vm1202 = vcmask 1041409
    %v1203 = vsel %vm1202, %v1201, %v1199
    %s1204 = scalar_lea.vmem %s0, 584
    %v1205 = vld [vmem:[%s1204] sm:$0x4]
    %vm1206 = vcmask 1042434
    %v1207 = vsel %vm1206, %v1205, %v1203
    %s1208 = scalar_lea.vmem %s0, 3256
    %s1209 = smov 24
    %v1210 = vld [vmem:[%s1208] ss:$-794 sm:%s1209]
    %vm1211 = vcmask 1044483
    %v1212 = vsel %vm1211, %v1210, %v1207
    %s1213 = scalar_lea.vmem %s0, 363
    %v1214 = vld [vmem:[%s1213] sm:$0x20]
    %vm1215 = vcmask 1045509
    %v1216 = vsel %vm1215, %v1214, %v1212
    %s1217 = scalar_lea.vmem %s0, 650
    %v1218 = vld [vmem:[%s1217] sm:$0x40]
    %vm1219 = vcmask 1046534
    %v1220 = vsel %vm1219, %v1218, %v1216
    %s1221 = scalar_lea.vmem %s0, 937
    %v1222 = vld [vmem:[%s1221] sm:$0x80]
    %vm1223 = vcmask 1047559
    %v1224 = vsel %vm1223, %v1222, %v1220
    %1225 = vrot.lane.b32.xlu0 %v1224, 100
    %v1226 = vpop.permute.xlu0 %1225
    %vm1227 = vcmask 900896
    %1228 = vst.msk [vmem:[#allocation0] sm:$0xf] %vm1227, %v1226
    %s1229 = scalar_lea.vmem [#allocation0], 36
    %1230 = vst.msk [vmem:[%s1229] sm:$0xf0] %vm1227, %v1226
    %s1231 = scalar_lea.vmem %s0, 150
    %v1232 = vld [vmem:[%s1231] sm:$0x1]
    %s1233 = scalar_lea.vmem %s0, 437
    %v1234 = vld [vmem:[%s1233] sm:$0x2]
    %vm1235 = vcmask 1041409
    %v1236 = vsel %vm1235, %v1234, %v1232
    %s1237 = scalar_lea.vmem %s0, 724
    %v1238 = vld [vmem:[%s1237] sm:$0x4]
    %vm1239 = vcmask 1042434
    %v1240 = vsel %vm1239, %v1238, %v1236
    %s1241 = scalar_lea.vmem %s0, 3396
    %s1242 = smov 24
    %v1243 = vld [vmem:[%s1241] ss:$-794 sm:%s1242]
    %vm1244 = vcmask 1044483
    %v1245 = vsel %vm1244, %v1243, %v1240
    %s1246 = scalar_lea.vmem %s0, 503
    %v1247 = vld [vmem:[%s1246] sm:$0x20]
    %vm1248 = vcmask 1045509
    %v1249 = vsel %vm1248, %v1247, %v1245
    %s1250 = scalar_lea.vmem %s0, 790
    %v1251 = vld [vmem:[%s1250] sm:$0x40]
    %vm1252 = vcmask 1046534
    %v1253 = vsel %vm1252, %v1251, %v1249
    %s1254 = scalar_lea.vmem %s0, 1077
    %v1255 = vld [vmem:[%s1254] sm:$0x80]
    %vm1256 = vcmask 1047559
    %v1257 = vsel %vm1256, %v1255, %v1253
    %1258 = vrot.lane.b32.xlu0 %v1257, 100
    %v1259 = vpop.permute.xlu0 %1258
    %vm1260 = vcmask 900896
    %s1261 = scalar_lea.vmem [#allocation0], 80
    %1262 = vst.msk [vmem:[%s1261] sm:$0xf] %vm1260, %v1259
    %s1263 = scalar_lea.vmem [#allocation0], 116
    %1264 = vst.msk [vmem:[%s1263] sm:$0xf0] %vm1260, %v1259
    %s1265 = scalar_lea.vmem %s0, 65
    %v1266 = vld [vmem:[%s1265] sm:$0x1]
    %s1267 = scalar_lea.vmem %s0, 352
    %v1268 = vld [vmem:[%s1267] sm:$0x2]
    %vm1269 = vcmask 1041409
    %v1270 = vsel %vm1269, %v1268, %v1266
    %s1271 = scalar_lea.vmem %s0, 639
    %v1272 = vld [vmem:[%s1271] sm:$0x4]
    %vm1273 = vcmask 1042434
    %v1274 = vsel %vm1273, %v1272, %v1270
    %s1275 = scalar_lea.vmem %s0, 3311
    %s1276 = smov 24
    %v1277 = vld [vmem:[%s1275] ss:$-794 sm:%s1276]
    %vm1278 = vcmask 1044483
    %v1279 = vsel %vm1278, %v1277, %v1274
    %s1280 = scalar_lea.vmem %s0, 418
    %v1281 = vld [vmem:[%s1280] sm:$0x20]
    %vm1282 = vcmask 1045509
    %v1283 = vsel %vm1282, %v1281, %v1279
    %s1284 = scalar_lea.vmem %s0, 705
    %v1285 = vld [vmem:[%s1284] sm:$0x40]
    %vm1286 = vcmask 1046534
    %v1287 = vsel %vm1286, %v1285, %v1283
    %s1288 = scalar_lea.vmem %s0, 992
    %v1289 = vld [vmem:[%s1288] sm:$0x80]
    %vm1290 = vcmask 1047559
    %v1291 = vsel %vm1290, %v1289, %v1287
    %1292 = vrot.lane.b32.xlu0 %v1291, 98
    %v1293 = vpop.permute.xlu0 %1292
    %vm1294 = vcmask 884496
    %s1295 = scalar_lea.vmem [#allocation0], 32
    %1296 = vst.msk [vmem:[%s1295] sm:$0xf] %vm1294, %v1293
    %s1297 = scalar_lea.vmem [#allocation0], 68
    %1298 = vst.msk [vmem:[%s1297] sm:$0xf0] %vm1294, %v1293
    %s1299 = scalar_lea.vmem %s0, 205
    %v1300 = vld [vmem:[%s1299] sm:$0x1]
    %s1301 = scalar_lea.vmem %s0, 492
    %v1302 = vld [vmem:[%s1301] sm:$0x2]
    %vm1303 = vcmask 1041409
    %v1304 = vsel %vm1303, %v1302, %v1300
    %s1305 = scalar_lea.vmem %s0, 779
    %v1306 = vld [vmem:[%s1305] sm:$0x4]
    %vm1307 = vcmask 1042434
    %v1308 = vsel %vm1307, %v1306, %v1304
    %s1309 = scalar_lea.vmem %s0, 3451
    %s1310 = smov 24
    %v1311 = vld [vmem:[%s1309] ss:$-794 sm:%s1310]
    %vm1312 = vcmask 1044483
    %v1313 = vsel %vm1312, %v1311, %v1308
    %s1314 = scalar_lea.vmem %s0, 558
    %v1315 = vld [vmem:[%s1314] sm:$0x20]
    %vm1316 = vcmask 1045509
    %v1317 = vsel %vm1316, %v1315, %v1313
    %s1318 = scalar_lea.vmem %s0, 845
    %v1319 = vld [vmem:[%s1318] sm:$0x40]
    %vm1320 = vcmask 1046534
    %v1321 = vsel %vm1320, %v1319, %v1317
    %s1322 = scalar_lea.vmem %s0, 1132
    %v1323 = vld [vmem:[%s1322] sm:$0x80]
    %vm1324 = vcmask 1047559
    %v1325 = vsel %vm1324, %v1323, %v1321
    %1326 = vrot.lane.b32.xlu0 %v1325, 98
    %v1327 = vpop.permute.xlu0 %1326
    %vm1328 = vcmask 884496
    %s1329 = scalar_lea.vmem [#allocation0], 112
    %1330 = vst.msk [vmem:[%s1329] sm:$0xf] %vm1328, %v1327
    %s1331 = scalar_lea.vmem [#allocation0], 148
    %1332 = vst.msk [vmem:[%s1331] sm:$0xf0] %vm1328, %v1327
    %s1333 = scalar_lea.vmem %s0, 122
    %v1334 = vld [vmem:[%s1333] sm:$0x1]
    %s1335 = scalar_lea.vmem %s0, 409
    %v1336 = vld [vmem:[%s1335] sm:$0x2]
    %vm1337 = vcmask 1041409
    %v1338 = vsel %vm1337, %v1336, %v1334
    %s1339 = scalar_lea.vmem %s0, 696
    %v1340 = vld [vmem:[%s1339] sm:$0x4]
    %vm1341 = vcmask 1042434
    %v1342 = vsel %vm1341, %v1340, %v1338
    %s1343 = scalar_lea.vmem %s0, 3368
    %s1344 = smov 24
    %v1345 = vld [vmem:[%s1343] ss:$-794 sm:%s1344]
    %vm1346 = vcmask 1044483
    %v1347 = vsel %vm1346, %v1345, %v1342
    %s1348 = scalar_lea.vmem %s0, 475
    %v1349 = vld [vmem:[%s1348] sm:$0x20]
    %vm1350 = vcmask 1045509
    %v1351 = vsel %vm1350, %v1349, %v1347
    %s1352 = scalar_lea.vmem %s0, 762
    %v1353 = vld [vmem:[%s1352] sm:$0x40]
    %vm1354 = vcmask 1046534
    %v1355 = vsel %vm1354, %v1353, %v1351
    %s1356 = scalar_lea.vmem %s0, 1049
    %v1357 = vld [vmem:[%s1356] sm:$0x80]
    %vm1358 = vcmask 1047559
    %v1359 = vsel %vm1358, %v1357, %v1355
    %1360 = vrot.lane.b32.xlu0 %v1359, 96
    %v1361 = vpop.permute.xlu0 %1360
    %vm1362 = vcmask 868096
    %s1363 = scalar_lea.vmem [#allocation0], 64
    %1364 = vst.msk [vmem:[%s1363] sm:$0xf] %vm1362, %v1361
    %s1365 = scalar_lea.vmem [#allocation0], 100
    %1366 = vst.msk [vmem:[%s1365] sm:$0xf0] %vm1362, %v1361
    %s1367 = scalar_lea.vmem %s0, 260
    %v1368 = vld [vmem:[%s1367] sm:$0x1]
    %s1369 = scalar_lea.vmem %s0, 547
    %v1370 = vld [vmem:[%s1369] sm:$0x2]
    %vm1371 = vcmask 1041409
    %v1372 = vsel %vm1371, %v1370, %v1368
    %s1373 = scalar_lea.vmem %s0, 834
    %v1374 = vld [vmem:[%s1373] sm:$0x4]
    %vm1375 = vcmask 1042434
    %v1376 = vsel %vm1375, %v1374, %v1372
    %s1377 = scalar_lea.vmem %s0, 4340
    %s1378 = smov 24
    %v1379 = vld [vmem:[%s1377] ss:$-1072 sm:%s1378]
    %vm1380 = vcmask 1044483
    %v1381 = vsel %vm1380, %v1379, %v1376
    %s1382 = scalar_lea.vmem %s0, 335
    %v1383 = vld [vmem:[%s1382] sm:$0x20]
    %vm1384 = vcmask 1045509
    %v1385 = vsel %vm1384, %v1383, %v1381
    %s1386 = scalar_lea.vmem %s0, 622
    %v1387 = vld [vmem:[%s1386] sm:$0x40]
    %vm1388 = vcmask 1046534
    %v1389 = vsel %vm1388, %v1387, %v1385
    %s1390 = scalar_lea.vmem %s0, 909
    %v1391 = vld [vmem:[%s1390] sm:$0x80]
    %vm1392 = vcmask 1047559
    %v1393 = vsel %vm1392, %v1391, %v1389
    %1394 = vrot.lane.b32.xlu0 %v1393, 96
    %v1395 = vpop.permute.xlu0 %1394
    %vm1396 = vcmask 868096
    %s1397 = scalar_lea.vmem [#allocation0], 144
    %1398 = vst.msk [vmem:[%s1397] sm:$0xf] %vm1396, %v1395
    %s1399 = scalar_lea.vmem [#allocation0], 20
    %1400 = vst.msk [vmem:[%s1399] sm:$0xf0] %vm1396, %v1395
    %s1401 = scalar_lea.vmem %s0, 177
    %v1402 = vld [vmem:[%s1401] sm:$0x1]
    %s1403 = scalar_lea.vmem %s0, 464
    %v1404 = vld [vmem:[%s1403] sm:$0x2]
    %vm1405 = vcmask 1041409
    %v1406 = vsel %vm1405, %v1404, %v1402
    %s1407 = scalar_lea.vmem %s0, 751
    %v1408 = vld [vmem:[%s1407] sm:$0x4]
    %vm1409 = vcmask 1042434
    %v1410 = vsel %vm1409, %v1408, %v1406
    %s1411 = scalar_lea.vmem %s0, 3423
    %s1412 = smov 24
    %v1413 = vld [vmem:[%s1411] ss:$-794 sm:%s1412]
    %vm1414 = vcmask 1044483
    %v1415 = vsel %vm1414, %v1413, %v1410
    %s1416 = scalar_lea.vmem %s0, 530
    %v1417 = vld [vmem:[%s1416] sm:$0x20]
    %vm1418 = vcmask 1045509
    %v1419 = vsel %vm1418, %v1417, %v1415
    %s1420 = scalar_lea.vmem %s0, 817
    %v1421 = vld [vmem:[%s1420] sm:$0x40]
    %vm1422 = vcmask 1046534
    %v1423 = vsel %vm1422, %v1421, %v1419
    %s1424 = scalar_lea.vmem %s0, 1104
    %v1425 = vld [vmem:[%s1424] sm:$0x80]
    %vm1426 = vcmask 1047559
    %v1427 = vsel %vm1426, %v1425, %v1423
    %1428 = vrot.lane.b32.xlu0 %v1427, 94
    %v1429 = vpop.permute.xlu0 %1428
    %vm1430 = vcmask 851696
    %s1431 = scalar_lea.vmem [#allocation0], 96
    %1432 = vst.msk [vmem:[%s1431] sm:$0xf] %vm1430, %v1429
    %s1433 = scalar_lea.vmem [#allocation0], 132
    %1434 = vst.msk [vmem:[%s1433] sm:$0xf0] %vm1430, %v1429
    %s1435 = scalar_lea.vmem %s0, 37
    %v1436 = vld [vmem:[%s1435] sm:$0x1]
    %s1437 = scalar_lea.vmem %s0, 324
    %v1438 = vld [vmem:[%s1437] sm:$0x2]
    %vm1439 = vcmask 1041409
    %v1440 = vsel %vm1439, %v1438, %v1436
    %s1441 = scalar_lea.vmem %s0, 611
    %v1442 = vld [vmem:[%s1441] sm:$0x4]
    %vm1443 = vcmask 1042434
    %v1444 = vsel %vm1443, %v1442, %v1440
    %s1445 = scalar_lea.vmem %s0, 3283
    %s1446 = smov 24
    %v1447 = vld [vmem:[%s1445] ss:$-794 sm:%s1446]
    %vm1448 = vcmask 1044483
    %v1449 = vsel %vm1448, %v1447, %v1444
    %s1450 = scalar_lea.vmem %s0, 390
    %v1451 = vld [vmem:[%s1450] sm:$0x20]
    %vm1452 = vcmask 1045509
    %v1453 = vsel %vm1452, %v1451, %v1449
    %s1454 = scalar_lea.vmem %s0, 677
    %v1455 = vld [vmem:[%s1454] sm:$0x40]
    %vm1456 = vcmask 1046534
    %v1457 = vsel %vm1456, %v1455, %v1453
    %s1458 = scalar_lea.vmem %s0, 964
    %v1459 = vld [vmem:[%s1458] sm:$0x80]
    %vm1460 = vcmask 1047559
    %v1461 = vsel %vm1460, %v1459, %v1457
    %1462 = vrot.lane.b32.xlu0 %v1461, 94
    %v1463 = vpop.permute.xlu0 %1462
    %vm1464 = vcmask 851696
    %s1465 = scalar_lea.vmem [#allocation0], 16
    %1466 = vst.msk [vmem:[%s1465] sm:$0xf] %vm1464, %v1463
    %s1467 = scalar_lea.vmem [#allocation0], 52
    %1468 = vst.msk [vmem:[%s1467] sm:$0xf0] %vm1464, %v1463
    %s1469 = scalar_lea.vmem %s0, 232
    %v1470 = vld [vmem:[%s1469] sm:$0x1]
    %s1471 = scalar_lea.vmem %s0, 519
    %v1472 = vld [vmem:[%s1471] sm:$0x2]
    %vm1473 = vcmask 1041409
    %v1474 = vsel %vm1473, %v1472, %v1470
    %s1475 = scalar_lea.vmem %s0, 806
    %v1476 = vld [vmem:[%s1475] sm:$0x4]
    %vm1477 = vcmask 1042434
    %v1478 = vsel %vm1477, %v1476, %v1474
    %s1479 = scalar_lea.vmem %s0, 4312
    %s1480 = smov 24
    %v1481 = vld [vmem:[%s1479] ss:$-1072 sm:%s1480]
    %vm1482 = vcmask 1044483
    %v1483 = vsel %vm1482, %v1481, %v1478
    %s1484 = scalar_lea.vmem %s0, 307
    %v1485 = vld [vmem:[%s1484] sm:$0x20]
    %vm1486 = vcmask 1045509
    %v1487 = vsel %vm1486, %v1485, %v1483
    %s1488 = scalar_lea.vmem %s0, 594
    %v1489 = vld [vmem:[%s1488] sm:$0x40]
    %vm1490 = vcmask 1046534
    %v1491 = vsel %vm1490, %v1489, %v1487
    %s1492 = scalar_lea.vmem %s0, 881
    %v1493 = vld [vmem:[%s1492] sm:$0x80]
    %vm1494 = vcmask 1047559
    %v1495 = vsel %vm1494, %v1493, %v1491
    %1496 = vrot.lane.b32.xlu0 %v1495, 92
    %v1497 = vpop.permute.xlu0 %1496
    %vm1498 = vcmask 835296
    %s1499 = scalar_lea.vmem [#allocation0], 128
    %1500 = vst.msk [vmem:[%s1499] sm:$0xf] %vm1498, %v1497
    %s1501 = scalar_lea.vmem [#allocation0], 4
    %1502 = vst.msk [vmem:[%s1501] sm:$0xf0] %vm1498, %v1497
    %s1503 = scalar_lea.vmem %s0, 92
    %v1504 = vld [vmem:[%s1503] sm:$0x1]
    %s1505 = scalar_lea.vmem %s0, 379
    %v1506 = vld [vmem:[%s1505] sm:$0x2]
    %vm1507 = vcmask 1041409
    %v1508 = vsel %vm1507, %v1506, %v1504
    %s1509 = scalar_lea.vmem %s0, 666
    %v1510 = vld [vmem:[%s1509] sm:$0x4]
    %vm1511 = vcmask 1042434
    %v1512 = vsel %vm1511, %v1510, %v1508
    %s1513 = scalar_lea.vmem %s0, 3338
    %s1514 = smov 24
    %v1515 = vld [vmem:[%s1513] ss:$-794 sm:%s1514]
    %vm1516 = vcmask 1044483
    %v1517 = vsel %vm1516, %v1515, %v1512
    %s1518 = scalar_lea.vmem %s0, 445
    %v1519 = vld [vmem:[%s1518] sm:$0x20]
    %vm1520 = vcmask 1045509
    %v1521 = vsel %vm1520, %v1519, %v1517
    %s1522 = scalar_lea.vmem %s0, 732
    %v1523 = vld [vmem:[%s1522] sm:$0x40]
    %vm1524 = vcmask 1046534
    %v1525 = vsel %vm1524, %v1523, %v1521
    %s1526 = scalar_lea.vmem %s0, 1019
    %v1527 = vld [vmem:[%s1526] sm:$0x80]
    %vm1528 = vcmask 1047559
    %v1529 = vsel %vm1528, %v1527, %v1525
    %1530 = vrot.lane.b32.xlu0 %v1529, 92
    %v1531 = vpop.permute.xlu0 %1530
    %vm1532 = vcmask 835296
    %s1533 = scalar_lea.vmem [#allocation0], 48
    %1534 = vst.msk [vmem:[%s1533] sm:$0xf] %vm1532, %v1531
    %s1535 = scalar_lea.vmem [#allocation0], 84
    %1536 = vst.msk [vmem:[%s1535] sm:$0xf0] %vm1532, %v1531
    %s1537 = scalar_lea.vmem %s0, 9
    %v1538 = vld [vmem:[%s1537] sm:$0x1]
    %s1539 = scalar_lea.vmem %s0, 296
    %v1540 = vld [vmem:[%s1539] sm:$0x2]
    %vm1541 = vcmask 1041409
    %v1542 = vsel %vm1541, %v1540, %v1538
    %s1543 = scalar_lea.vmem %s0, 583
    %v1544 = vld [vmem:[%s1543] sm:$0x4]
    %vm1545 = vcmask 1042434
    %v1546 = vsel %vm1545, %v1544, %v1542
    %s1547 = scalar_lea.vmem %s0, 3255
    %s1548 = smov 24
    %v1549 = vld [vmem:[%s1547] ss:$-794 sm:%s1548]
    %vm1550 = vcmask 1044483
    %v1551 = vsel %vm1550, %v1549, %v1546
    %s1552 = scalar_lea.vmem %s0, 362
    %v1553 = vld [vmem:[%s1552] sm:$0x20]
    %vm1554 = vcmask 1045509
    %v1555 = vsel %vm1554, %v1553, %v1551
    %s1556 = scalar_lea.vmem %s0, 649
    %v1557 = vld [vmem:[%s1556] sm:$0x40]
    %vm1558 = vcmask 1046534
    %v1559 = vsel %vm1558, %v1557, %v1555
    %s1560 = scalar_lea.vmem %s0, 936
    %v1561 = vld [vmem:[%s1560] sm:$0x80]
    %vm1562 = vcmask 1047559
    %v1563 = vsel %vm1562, %v1561, %v1559
    %1564 = vrot.lane.b32.xlu0 %v1563, 90
    %v1565 = vpop.permute.xlu0 %1564
    %vm1566 = vcmask 818896
    %1567 = vst.msk [vmem:[#allocation0] sm:$0xf] %vm1566, %v1565
    %s1568 = scalar_lea.vmem [#allocation0], 36
    %1569 = vst.msk [vmem:[%s1568] sm:$0xf0] %vm1566, %v1565
    %s1570 = scalar_lea.vmem %s0, 149
    %v1571 = vld [vmem:[%s1570] sm:$0x1]
    %s1572 = scalar_lea.vmem %s0, 436
    %v1573 = vld [vmem:[%s1572] sm:$0x2]
    %vm1574 = vcmask 1041409
    %v1575 = vsel %vm1574, %v1573, %v1571
    %s1576 = scalar_lea.vmem %s0, 723
    %v1577 = vld [vmem:[%s1576] sm:$0x4]
    %vm1578 = vcmask 1042434
    %v1579 = vsel %vm1578, %v1577, %v1575
    %s1580 = scalar_lea.vmem %s0, 3395
    %s1581 = smov 24
    %v1582 = vld [vmem:[%s1580] ss:$-794 sm:%s1581]
    %vm1583 = vcmask 1044483
    %v1584 = vsel %vm1583, %v1582, %v1579
    %s1585 = scalar_lea.vmem %s0, 502
    %v1586 = vld [vmem:[%s1585] sm:$0x20]
    %vm1587 = vcmask 1045509
    %v1588 = vsel %vm1587, %v1586, %v1584
    %s1589 = scalar_lea.vmem %s0, 789
    %v1590 = vld [vmem:[%s1589] sm:$0x40]
    %vm1591 = vcmask 1046534
    %v1592 = vsel %vm1591, %v1590, %v1588
    %s1593 = scalar_lea.vmem %s0, 1076
    %v1594 = vld [vmem:[%s1593] sm:$0x80]
    %vm1595 = vcmask 1047559
    %v1596 = vsel %vm1595, %v1594, %v1592
    %1597 = vrot.lane.b32.xlu0 %v1596, 90
    %v1598 = vpop.permute.xlu0 %1597
    %vm1599 = vcmask 818896
    %s1600 = scalar_lea.vmem [#allocation0], 80
    %1601 = vst.msk [vmem:[%s1600] sm:$0xf] %vm1599, %v1598
    %s1602 = scalar_lea.vmem [#allocation0], 116
    %1603 = vst.msk [vmem:[%s1602] sm:$0xf0] %vm1599, %v1598
    %s1604 = scalar_lea.vmem %s0, 64
    %v1605 = vld [vmem:[%s1604] sm:$0x1]
    %s1606 = scalar_lea.vmem %s0, 351
    %v1607 = vld [vmem:[%s1606] sm:$0x2]
    %vm1608 = vcmask 1041409
    %v1609 = vsel %vm1608, %v1607, %v1605
    %s1610 = scalar_lea.vmem %s0, 638
    %v1611 = vld [vmem:[%s1610] sm:$0x4]
    %vm1612 = vcmask 1042434
    %v1613 = vsel %vm1612, %v1611, %v1609
    %s1614 = scalar_lea.vmem %s0, 3310
    %s1615 = smov 24
    %v1616 = vld [vmem:[%s1614] ss:$-794 sm:%s1615]
    %vm1617 = vcmask 1044483
    %v1618 = vsel %vm1617, %v1616, %v1613
    %s1619 = scalar_lea.vmem %s0, 417
    %v1620 = vld [vmem:[%s1619] sm:$0x20]
    %vm1621 = vcmask 1045509
    %v1622 = vsel %vm1621, %v1620, %v1618
    %s1623 = scalar_lea.vmem %s0, 704
    %v1624 = vld [vmem:[%s1623] sm:$0x40]
    %vm1625 = vcmask 1046534
    %v1626 = vsel %vm1625, %v1624, %v1622
    %s1627 = scalar_lea.vmem %s0, 991
    %v1628 = vld [vmem:[%s1627] sm:$0x80]
    %vm1629 = vcmask 1047559
    %v1630 = vsel %vm1629, %v1628, %v1626
    %1631 = vrot.lane.b32.xlu0 %v1630, 88
    %v1632 = vpop.permute.xlu0 %1631
    %vm1633 = vcmask 802496
    %s1634 = scalar_lea.vmem [#allocation0], 32
    %1635 = vst.msk [vmem:[%s1634] sm:$0xf] %vm1633, %v1632
    %s1636 = scalar_lea.vmem [#allocation0], 68
    %1637 = vst.msk [vmem:[%s1636] sm:$0xf0] %vm1633, %v1632
    %s1638 = scalar_lea.vmem %s0, 204
    %v1639 = vld [vmem:[%s1638] sm:$0x1]
    %s1640 = scalar_lea.vmem %s0, 491
    %v1641 = vld [vmem:[%s1640] sm:$0x2]
    %vm1642 = vcmask 1041409
    %v1643 = vsel %vm1642, %v1641, %v1639
    %s1644 = scalar_lea.vmem %s0, 778
    %v1645 = vld [vmem:[%s1644] sm:$0x4]
    %vm1646 = vcmask 1042434
    %v1647 = vsel %vm1646, %v1645, %v1643
    %s1648 = scalar_lea.vmem %s0, 3450
    %s1649 = smov 24
    %v1650 = vld [vmem:[%s1648] ss:$-794 sm:%s1649]
    %vm1651 = vcmask 1044483
    %v1652 = vsel %vm1651, %v1650, %v1647
    %s1653 = scalar_lea.vmem %s0, 557
    %v1654 = vld [vmem:[%s1653] sm:$0x20]
    %vm1655 = vcmask 1045509
    %v1656 = vsel %vm1655, %v1654, %v1652
    %s1657 = scalar_lea.vmem %s0, 844
    %v1658 = vld [vmem:[%s1657] sm:$0x40]
    %vm1659 = vcmask 1046534
    %v1660 = vsel %vm1659, %v1658, %v1656
    %s1661 = scalar_lea.vmem %s0, 1131
    %v1662 = vld [vmem:[%s1661] sm:$0x80]
    %vm1663 = vcmask 1047559
    %v1664 = vsel %vm1663, %v1662, %v1660
    %1665 = vrot.lane.b32.xlu0 %v1664, 88
    %v1666 = vpop.permute.xlu0 %1665
    %vm1667 = vcmask 802496
    %s1668 = scalar_lea.vmem [#allocation0], 112
    %1669 = vst.msk [vmem:[%s1668] sm:$0xf] %vm1667, %v1666
    %s1670 = scalar_lea.vmem [#allocation0], 148
    %1671 = vst.msk [vmem:[%s1670] sm:$0xf0] %vm1667, %v1666
    %s1672 = scalar_lea.vmem %s0, 121
    %v1673 = vld [vmem:[%s1672] sm:$0x1]
    %s1674 = scalar_lea.vmem %s0, 408
    %v1675 = vld [vmem:[%s1674] sm:$0x2]
    %vm1676 = vcmask 1041409
    %v1677 = vsel %vm1676, %v1675, %v1673
    %s1678 = scalar_lea.vmem %s0, 695
    %v1679 = vld [vmem:[%s1678] sm:$0x4]
    %vm1680 = vcmask 1042434
    %v1681 = vsel %vm1680, %v1679, %v1677
    %s1682 = scalar_lea.vmem %s0, 3373
    %s1683 = smov 24
    %v1684 = vld [vmem:[%s1682] ss:$-796 sm:%s1683]
    %vm1685 = vcmask 1044483
    %v1686 = vsel %vm1685, %v1684, %v1681
    %s1687 = scalar_lea.vmem %s0, 472
    %v1688 = vld [vmem:[%s1687] sm:$0x20]
    %vm1689 = vcmask 1045509
    %v1690 = vsel %vm1689, %v1688, %v1686
    %s1691 = scalar_lea.vmem %s0, 759
    %v1692 = vld [vmem:[%s1691] sm:$0x40]
    %vm1693 = vcmask 1046534
    %v1694 = vsel %vm1693, %v1692, %v1690
    %s1695 = scalar_lea.vmem %s0, 1046
    %v1696 = vld [vmem:[%s1695] sm:$0x80]
    %vm1697 = vcmask 1047559
    %v1698 = vsel %vm1697, %v1696, %v1694
    %1699 = vrot.lane.b32.xlu0 %v1698, 86
    %v1700 = vpop.permute.xlu0 %1699
    %vm1701 = vcmask 786096
    %s1702 = scalar_lea.vmem [#allocation0], 64
    %1703 = vst.msk [vmem:[%s1702] sm:$0xf] %vm1701, %v1700
    %s1704 = scalar_lea.vmem [#allocation0], 100
    %1705 = vst.msk [vmem:[%s1704] sm:$0xf0] %vm1701, %v1700
    %s1706 = scalar_lea.vmem %s0, 259
    %v1707 = vld [vmem:[%s1706] sm:$0x1]
    %s1708 = scalar_lea.vmem %s0, 546
    %v1709 = vld [vmem:[%s1708] sm:$0x2]
    %vm1710 = vcmask 1041409
    %v1711 = vsel %vm1710, %v1709, %v1707
    %s1712 = scalar_lea.vmem %s0, 833
    %v1713 = vld [vmem:[%s1712] sm:$0x4]
    %vm1714 = vcmask 1042434
    %v1715 = vsel %vm1714, %v1713, %v1711
    %s1716 = scalar_lea.vmem %s0, 4339
    %s1717 = smov 24
    %v1718 = vld [vmem:[%s1716] ss:$-1072 sm:%s1717]
    %vm1719 = vcmask 1044483
    %v1720 = vsel %vm1719, %v1718, %v1715
    %s1721 = scalar_lea.vmem %s0, 334
    %v1722 = vld [vmem:[%s1721] sm:$0x20]
    %vm1723 = vcmask 1045509
    %v1724 = vsel %vm1723, %v1722, %v1720
    %s1725 = scalar_lea.vmem %s0, 621
    %v1726 = vld [vmem:[%s1725] sm:$0x40]
    %vm1727 = vcmask 1046534
    %v1728 = vsel %vm1727, %v1726, %v1724
    %s1729 = scalar_lea.vmem %s0, 908
    %v1730 = vld [vmem:[%s1729] sm:$0x80]
    %vm1731 = vcmask 1047559
    %v1732 = vsel %vm1731, %v1730, %v1728
    %1733 = vrot.lane.b32.xlu0 %v1732, 86
    %v1734 = vpop.permute.xlu0 %1733
    %vm1735 = vcmask 786096
    %s1736 = scalar_lea.vmem [#allocation0], 144
    %1737 = vst.msk [vmem:[%s1736] sm:$0xf] %vm1735, %v1734
    %s1738 = scalar_lea.vmem [#allocation0], 20
    %1739 = vst.msk [vmem:[%s1738] sm:$0xf0] %vm1735, %v1734
    %s1740 = scalar_lea.vmem %s0, 176
    %v1741 = vld [vmem:[%s1740] sm:$0x1]
    %s1742 = scalar_lea.vmem %s0, 463
    %v1743 = vld [vmem:[%s1742] sm:$0x2]
    %vm1744 = vcmask 1041409
    %v1745 = vsel %vm1744, %v1743, %v1741
    %s1746 = scalar_lea.vmem %s0, 750
    %v1747 = vld [vmem:[%s1746] sm:$0x4]
    %vm1748 = vcmask 1042434
    %v1749 = vsel %vm1748, %v1747, %v1745
    %s1750 = scalar_lea.vmem %s0, 3422
    %s1751 = smov 24
    %v1752 = vld [vmem:[%s1750] ss:$-794 sm:%s1751]
    %vm1753 = vcmask 1044483
    %v1754 = vsel %vm1753, %v1752, %v1749
    %s1755 = scalar_lea.vmem %s0, 529
    %v1756 = vld [vmem:[%s1755] sm:$0x20]
    %vm1757 = vcmask 1045509
    %v1758 = vsel %vm1757, %v1756, %v1754
    %s1759 = scalar_lea.vmem %s0, 816
    %v1760 = vld [vmem:[%s1759] sm:$0x40]
    %vm1761 = vcmask 1046534
    %v1762 = vsel %vm1761, %v1760, %v1758
    %s1763 = scalar_lea.vmem %s0, 1103
    %v1764 = vld [vmem:[%s1763] sm:$0x80]
    %vm1765 = vcmask 1047559
    %v1766 = vsel %vm1765, %v1764, %v1762
    %1767 = vrot.lane.b32.xlu0 %v1766, 84
    %v1768 = vpop.permute.xlu0 %1767
    %vm1769 = vcmask 769696
    %s1770 = scalar_lea.vmem [#allocation0], 96
    %1771 = vst.msk [vmem:[%s1770] sm:$0xf] %vm1769, %v1768
    %s1772 = scalar_lea.vmem [#allocation0], 132
    %1773 = vst.msk [vmem:[%s1772] sm:$0xf0] %vm1769, %v1768
    %s1774 = scalar_lea.vmem %s0, 36
    %v1775 = vld [vmem:[%s1774] sm:$0x1]
    %s1776 = scalar_lea.vmem %s0, 323
    %v1777 = vld [vmem:[%s1776] sm:$0x2]
    %vm1778 = vcmask 1041409
    %v1779 = vsel %vm1778, %v1777, %v1775
    %s1780 = scalar_lea.vmem %s0, 610
    %v1781 = vld [vmem:[%s1780] sm:$0x4]
    %vm1782 = vcmask 1042434
    %v1783 = vsel %vm1782, %v1781, %v1779
    %s1784 = scalar_lea.vmem %s0, 3282
    %s1785 = smov 24
    %v1786 = vld [vmem:[%s1784] ss:$-794 sm:%s1785]
    %vm1787 = vcmask 1044483
    %v1788 = vsel %vm1787, %v1786, %v1783
    %s1789 = scalar_lea.vmem %s0, 389
    %v1790 = vld [vmem:[%s1789] sm:$0x20]
    %vm1791 = vcmask 1045509
    %v1792 = vsel %vm1791, %v1790, %v1788
    %s1793 = scalar_lea.vmem %s0, 676
    %v1794 = vld [vmem:[%s1793] sm:$0x40]
    %vm1795 = vcmask 1046534
    %v1796 = vsel %vm1795, %v1794, %v1792
    %s1797 = scalar_lea.vmem %s0, 963
    %v1798 = vld [vmem:[%s1797] sm:$0x80]
    %vm1799 = vcmask 1047559
    %v1800 = vsel %vm1799, %v1798, %v1796
    %1801 = vrot.lane.b32.xlu0 %v1800, 84
    %v1802 = vpop.permute.xlu0 %1801
    %vm1803 = vcmask 769696
    %s1804 = scalar_lea.vmem [#allocation0], 16
    %1805 = vst.msk [vmem:[%s1804] sm:$0xf] %vm1803, %v1802
    %s1806 = scalar_lea.vmem [#allocation0], 52
    %1807 = vst.msk [vmem:[%s1806] sm:$0xf0] %vm1803, %v1802
    %s1808 = scalar_lea.vmem %s0, 231
    %v1809 = vld [vmem:[%s1808] sm:$0x1]
    %s1810 = scalar_lea.vmem %s0, 518
    %v1811 = vld [vmem:[%s1810] sm:$0x2]
    %vm1812 = vcmask 1041409
    %v1813 = vsel %vm1812, %v1811, %v1809
    %s1814 = scalar_lea.vmem %s0, 805
    %v1815 = vld [vmem:[%s1814] sm:$0x4]
    %vm1816 = vcmask 1042434
    %v1817 = vsel %vm1816, %v1815, %v1813
    %s1818 = scalar_lea.vmem %s0, 4317
    %s1819 = smov 24
    %v1820 = vld [vmem:[%s1818] ss:$-1074 sm:%s1819]
    %vm1821 = vcmask 1044483
    %v1822 = vsel %vm1821, %v1820, %v1817
    %s1823 = scalar_lea.vmem %s0, 304
    %v1824 = vld [vmem:[%s1823] sm:$0x20]
    %vm1825 = vcmask 1045509
    %v1826 = vsel %vm1825, %v1824, %v1822
    %s1827 = scalar_lea.vmem %s0, 591
    %v1828 = vld [vmem:[%s1827] sm:$0x40]
    %vm1829 = vcmask 1046534
    %v1830 = vsel %vm1829, %v1828, %v1826
    %s1831 = scalar_lea.vmem %s0, 878
    %v1832 = vld [vmem:[%s1831] sm:$0x80]
    %vm1833 = vcmask 1047559
    %v1834 = vsel %vm1833, %v1832, %v1830
    %1835 = vrot.lane.b32.xlu0 %v1834, 82
    %v1836 = vpop.permute.xlu0 %1835
    %vm1837 = vcmask 753296
    %s1838 = scalar_lea.vmem [#allocation0], 128
    %1839 = vst.msk [vmem:[%s1838] sm:$0xf] %vm1837, %v1836
    %s1840 = scalar_lea.vmem [#allocation0], 4
    %1841 = vst.msk [vmem:[%s1840] sm:$0xf0] %vm1837, %v1836
    %s1842 = scalar_lea.vmem %s0, 91
    %v1843 = vld [vmem:[%s1842] sm:$0x1]
    %s1844 = scalar_lea.vmem %s0, 378
    %v1845 = vld [vmem:[%s1844] sm:$0x2]
    %vm1846 = vcmask 1041409
    %v1847 = vsel %vm1846, %v1845, %v1843
    %s1848 = scalar_lea.vmem %s0, 665
    %v1849 = vld [vmem:[%s1848] sm:$0x4]
    %vm1850 = vcmask 1042434
    %v1851 = vsel %vm1850, %v1849, %v1847
    %s1852 = scalar_lea.vmem %s0, 3337
    %s1853 = smov 24
    %v1854 = vld [vmem:[%s1852] ss:$-794 sm:%s1853]
    %vm1855 = vcmask 1044483
    %v1856 = vsel %vm1855, %v1854, %v1851
    %s1857 = scalar_lea.vmem %s0, 444
    %v1858 = vld [vmem:[%s1857] sm:$0x20]
    %vm1859 = vcmask 1045509
    %v1860 = vsel %vm1859, %v1858, %v1856
    %s1861 = scalar_lea.vmem %s0, 731
    %v1862 = vld [vmem:[%s1861] sm:$0x40]
    %vm1863 = vcmask 1046534
    %v1864 = vsel %vm1863, %v1862, %v1860
    %s1865 = scalar_lea.vmem %s0, 1018
    %v1866 = vld [vmem:[%s1865] sm:$0x80]
    %vm1867 = vcmask 1047559
    %v1868 = vsel %vm1867, %v1866, %v1864
    %1869 = vrot.lane.b32.xlu0 %v1868, 82
    %v1870 = vpop.permute.xlu0 %1869
    %vm1871 = vcmask 753296
    %s1872 = scalar_lea.vmem [#allocation0], 48
    %1873 = vst.msk [vmem:[%s1872] sm:$0xf] %vm1871, %v1870
    %s1874 = scalar_lea.vmem [#allocation0], 84
    %1875 = vst.msk [vmem:[%s1874] sm:$0xf0] %vm1871, %v1870
    %s1876 = scalar_lea.vmem %s0, 8
    %v1877 = vld [vmem:[%s1876] sm:$0x1]
    %s1878 = scalar_lea.vmem %s0, 295
    %v1879 = vld [vmem:[%s1878] sm:$0x2]
    %vm1880 = vcmask 1041409
    %v1881 = vsel %vm1880, %v1879, %v1877
    %s1882 = scalar_lea.vmem %s0, 582
    %v1883 = vld [vmem:[%s1882] sm:$0x4]
    %vm1884 = vcmask 1042434
    %v1885 = vsel %vm1884, %v1883, %v1881
    %s1886 = scalar_lea.vmem %s0, 3254
    %s1887 = smov 24
    %v1888 = vld [vmem:[%s1886] ss:$-794 sm:%s1887]
    %vm1889 = vcmask 1044483
    %v1890 = vsel %vm1889, %v1888, %v1885
    %s1891 = scalar_lea.vmem %s0, 361
    %v1892 = vld [vmem:[%s1891] sm:$0x20]
    %vm1893 = vcmask 1045509
    %v1894 = vsel %vm1893, %v1892, %v1890
    %s1895 = scalar_lea.vmem %s0, 648
    %v1896 = vld [vmem:[%s1895] sm:$0x40]
    %vm1897 = vcmask 1046534
    %v1898 = vsel %vm1897, %v1896, %v1894
    %s1899 = scalar_lea.vmem %s0, 935
    %v1900 = vld [vmem:[%s1899] sm:$0x80]
    %vm1901 = vcmask 1047559
    %v1902 = vsel %vm1901, %v1900, %v1898
    %1903 = vrot.lane.b32.xlu0 %v1902, 80
    %v1904 = vpop.permute.xlu0 %1903
    %vm1905 = vcmask 736896
    %1906 = vst.msk [vmem:[#allocation0] sm:$0xf] %vm1905, %v1904
    %s1907 = scalar_lea.vmem [#allocation0], 36
    %1908 = vst.msk [vmem:[%s1907] sm:$0xf0] %vm1905, %v1904
    %s1909 = scalar_lea.vmem %s0, 148
    %v1910 = vld [vmem:[%s1909] sm:$0x1]
    %s1911 = scalar_lea.vmem %s0, 435
    %v1912 = vld [vmem:[%s1911] sm:$0x2]
    %vm1913 = vcmask 1041409
    %v1914 = vsel %vm1913, %v1912, %v1910
    %s1915 = scalar_lea.vmem %s0, 722
    %v1916 = vld [vmem:[%s1915] sm:$0x4]
    %vm1917 = vcmask 1042434
    %v1918 = vsel %vm1917, %v1916, %v1914
    %s1919 = scalar_lea.vmem %s0, 3394
    %s1920 = smov 24
    %v1921 = vld [vmem:[%s1919] ss:$-794 sm:%s1920]
    %vm1922 = vcmask 1044483
    %v1923 = vsel %vm1922, %v1921, %v1918
    %s1924 = scalar_lea.vmem %s0, 501
    %v1925 = vld [vmem:[%s1924] sm:$0x20]
    %vm1926 = vcmask 1045509
    %v1927 = vsel %vm1926, %v1925, %v1923
    %s1928 = scalar_lea.vmem %s0, 788
    %v1929 = vld [vmem:[%s1928] sm:$0x40]
    %vm1930 = vcmask 1046534
    %v1931 = vsel %vm1930, %v1929, %v1927
    %s1932 = scalar_lea.vmem %s0, 1075
    %v1933 = vld [vmem:[%s1932] sm:$0x80]
    %vm1934 = vcmask 1047559
    %v1935 = vsel %vm1934, %v1933, %v1931
    %1936 = vrot.lane.b32.xlu0 %v1935, 80
    %v1937 = vpop.permute.xlu0 %1936
    %vm1938 = vcmask 736896
    %s1939 = scalar_lea.vmem [#allocation0], 80
    %1940 = vst.msk [vmem:[%s1939] sm:$0xf] %vm1938, %v1937
    %s1941 = scalar_lea.vmem [#allocation0], 116
    %1942 = vst.msk [vmem:[%s1941] sm:$0xf0] %vm1938, %v1937
    %s1943 = scalar_lea.vmem %s0, 63
    %v1944 = vld [vmem:[%s1943] sm:$0x1]
    %s1945 = scalar_lea.vmem %s0, 350
    %v1946 = vld [vmem:[%s1945] sm:$0x2]
    %vm1947 = vcmask 1041409
    %v1948 = vsel %vm1947, %v1946, %v1944
    %s1949 = scalar_lea.vmem %s0, 637
    %v1950 = vld [vmem:[%s1949] sm:$0x4]
    %vm1951 = vcmask 1042434
    %v1952 = vsel %vm1951, %v1950, %v1948
    %s1953 = scalar_lea.vmem %s0, 3309
    %s1954 = smov 24
    %v1955 = vld [vmem:[%s1953] ss:$-794 sm:%s1954]
    %vm1956 = vcmask 1044483
    %v1957 = vsel %vm1956, %v1955, %v1952
    %s1958 = scalar_lea.vmem %s0, 416
    %v1959 = vld [vmem:[%s1958] sm:$0x20]
    %vm1960 = vcmask 1045509
    %v1961 = vsel %vm1960, %v1959, %v1957
    %s1962 = scalar_lea.vmem %s0, 703
    %v1963 = vld [vmem:[%s1962] sm:$0x40]
    %vm1964 = vcmask 1046534
    %v1965 = vsel %vm1964, %v1963, %v1961
    %s1966 = scalar_lea.vmem %s0, 990
    %v1967 = vld [vmem:[%s1966] sm:$0x80]
    %vm1968 = vcmask 1047559
    %v1969 = vsel %vm1968, %v1967, %v1965
    %1970 = vrot.lane.b32.xlu0 %v1969, 78
    %v1971 = vpop.permute.xlu0 %1970
    %vm1972 = vcmask 720496
    %s1973 = scalar_lea.vmem [#allocation0], 32
    %1974 = vst.msk [vmem:[%s1973] sm:$0xf] %vm1972, %v1971
    %s1975 = scalar_lea.vmem [#allocation0], 68
    %1976 = vst.msk [vmem:[%s1975] sm:$0xf0] %vm1972, %v1971
    %s1977 = scalar_lea.vmem %s0, 203
    %v1978 = vld [vmem:[%s1977] sm:$0x1]
    %s1979 = scalar_lea.vmem %s0, 490
    %v1980 = vld [vmem:[%s1979] sm:$0x2]
    %vm1981 = vcmask 1041409
    %v1982 = vsel %vm1981, %v1980, %v1978
    %s1983 = scalar_lea.vmem %s0, 777
    %v1984 = vld [vmem:[%s1983] sm:$0x4]
    %vm1985 = vcmask 1042434
    %v1986 = vsel %vm1985, %v1984, %v1982
    %s1987 = scalar_lea.vmem %s0, 3449
    %s1988 = smov 24
    %v1989 = vld [vmem:[%s1987] ss:$-794 sm:%s1988]
    %vm1990 = vcmask 1044483
    %v1991 = vsel %vm1990, %v1989, %v1986
    %s1992 = scalar_lea.vmem %s0, 556
    %v1993 = vld [vmem:[%s1992] sm:$0x20]
    %vm1994 = vcmask 1045509
    %v1995 = vsel %vm1994, %v1993, %v1991
    %s1996 = scalar_lea.vmem %s0, 843
    %v1997 = vld [vmem:[%s1996] sm:$0x40]
    %vm1998 = vcmask 1046534
    %v1999 = vsel %vm1998, %v1997, %v1995
    %s2000 = scalar_lea.vmem %s0, 1130
    %v2001 = vld [vmem:[%s2000] sm:$0x80]
    %vm2002 = vcmask 1047559
    %v2003 = vsel %vm2002, %v2001, %v1999
    %2004 = vrot.lane.b32.xlu0 %v2003, 78
    %v2005 = vpop.permute.xlu0 %2004
    %vm2006 = vcmask 720496
    %s2007 = scalar_lea.vmem [#allocation0], 112
    %2008 = vst.msk [vmem:[%s2007] sm:$0xf] %vm2006, %v2005
    %s2009 = scalar_lea.vmem [#allocation0], 148
    %2010 = vst.msk [vmem:[%s2009] sm:$0xf0] %vm2006, %v2005
    %s2011 = scalar_lea.vmem %s0, 120
    %v2012 = vld [vmem:[%s2011] sm:$0x1]
    %s2013 = scalar_lea.vmem %s0, 407
    %v2014 = vld [vmem:[%s2013] sm:$0x2]
    %vm2015 = vcmask 1041409
    %v2016 = vsel %vm2015, %v2014, %v2012
    %s2017 = scalar_lea.vmem %s0, 694
    %v2018 = vld [vmem:[%s2017] sm:$0x4]
    %vm2019 = vcmask 1042434
    %v2020 = vsel %vm2019, %v2018, %v2016
    %s2021 = scalar_lea.vmem %s0, 3372
    %s2022 = smov 24
    %v2023 = vld [vmem:[%s2021] ss:$-796 sm:%s2022]
    %vm2024 = vcmask 1044483
    %v2025 = vsel %vm2024, %v2023, %v2020
    %s2026 = scalar_lea.vmem %s0, 471
    %v2027 = vld [vmem:[%s2026] sm:$0x20]
    %vm2028 = vcmask 1045509
    %v2029 = vsel %vm2028, %v2027, %v2025
    %s2030 = scalar_lea.vmem %s0, 758
    %v2031 = vld [vmem:[%s2030] sm:$0x40]
    %vm2032 = vcmask 1046534
    %v2033 = vsel %vm2032, %v2031, %v2029
    %s2034 = scalar_lea.vmem %s0, 1045
    %v2035 = vld [vmem:[%s2034] sm:$0x80]
    %vm2036 = vcmask 1047559
    %v2037 = vsel %vm2036, %v2035, %v2033
    %2038 = vrot.lane.b32.xlu0 %v2037, 76
    %v2039 = vpop.permute.xlu0 %2038
    %vm2040 = vcmask 704096
    %s2041 = scalar_lea.vmem [#allocation0], 64
    %2042 = vst.msk [vmem:[%s2041] sm:$0xf] %vm2040, %v2039
    %s2043 = scalar_lea.vmem [#allocation0], 100
    %2044 = vst.msk [vmem:[%s2043] sm:$0xf0] %vm2040, %v2039
    %s2045 = scalar_lea.vmem %s0, 258
    %v2046 = vld [vmem:[%s2045] sm:$0x1]
    %s2047 = scalar_lea.vmem %s0, 545
    %v2048 = vld [vmem:[%s2047] sm:$0x2]
    %vm2049 = vcmask 1041409
    %v2050 = vsel %vm2049, %v2048, %v2046
    %s2051 = scalar_lea.vmem %s0, 832
    %v2052 = vld [vmem:[%s2051] sm:$0x4]
    %vm2053 = vcmask 1042434
    %v2054 = vsel %vm2053, %v2052, %v2050
    %s2055 = scalar_lea.vmem %s0, 4338
    %s2056 = smov 24
    %v2057 = vld [vmem:[%s2055] ss:$-1072 sm:%s2056]
    %vm2058 = vcmask 1044483
    %v2059 = vsel %vm2058, %v2057, %v2054
    %s2060 = scalar_lea.vmem %s0, 333
    %v2061 = vld [vmem:[%s2060] sm:$0x20]
    %vm2062 = vcmask 1045509
    %v2063 = vsel %vm2062, %v2061, %v2059
    %s2064 = scalar_lea.vmem %s0, 620
    %v2065 = vld [vmem:[%s2064] sm:$0x40]
    %vm2066 = vcmask 1046534
    %v2067 = vsel %vm2066, %v2065, %v2063
    %s2068 = scalar_lea.vmem %s0, 907
    %v2069 = vld [vmem:[%s2068] sm:$0x80]
    %vm2070 = vcmask 1047559
    %v2071 = vsel %vm2070, %v2069, %v2067
    %2072 = vrot.lane.b32.xlu0 %v2071, 76
    %v2073 = vpop.permute.xlu0 %2072
    %vm2074 = vcmask 704096
    %s2075 = scalar_lea.vmem [#allocation0], 144
    %2076 = vst.msk [vmem:[%s2075] sm:$0xf] %vm2074, %v2073
    %s2077 = scalar_lea.vmem [#allocation0], 20
    %2078 = vst.msk [vmem:[%s2077] sm:$0xf0] %vm2074, %v2073
    %s2079 = scalar_lea.vmem %s0, 175
    %v2080 = vld [vmem:[%s2079] sm:$0x1]
    %s2081 = scalar_lea.vmem %s0, 462
    %v2082 = vld [vmem:[%s2081] sm:$0x2]
    %vm2083 = vcmask 1041409
    %v2084 = vsel %vm2083, %v2082, %v2080
    %s2085 = scalar_lea.vmem %s0, 749
    %v2086 = vld [vmem:[%s2085] sm:$0x4]
    %vm2087 = vcmask 1042434
    %v2088 = vsel %vm2087, %v2086, %v2084
    %s2089 = scalar_lea.vmem %s0, 3421
    %s2090 = smov 24
    %v2091 = vld [vmem:[%s2089] ss:$-794 sm:%s2090]
    %vm2092 = vcmask 1044483
    %v2093 = vsel %vm2092, %v2091, %v2088
    %s2094 = scalar_lea.vmem %s0, 528
    %v2095 = vld [vmem:[%s2094] sm:$0x20]
    %vm2096 = vcmask 1045509
    %v2097 = vsel %vm2096, %v2095, %v2093
    %s2098 = scalar_lea.vmem %s0, 815
    %v2099 = vld [vmem:[%s2098] sm:$0x40]
    %vm2100 = vcmask 1046534
    %v2101 = vsel %vm2100, %v2099, %v2097
    %s2102 = scalar_lea.vmem %s0, 1102
    %v2103 = vld [vmem:[%s2102] sm:$0x80]
    %vm2104 = vcmask 1047559
    %v2105 = vsel %vm2104, %v2103, %v2101
    %2106 = vrot.lane.b32.xlu0 %v2105, 74
    %v2107 = vpop.permute.xlu0 %2106
    %vm2108 = vcmask 687696
    %s2109 = scalar_lea.vmem [#allocation0], 96
    %2110 = vst.msk [vmem:[%s2109] sm:$0xf] %vm2108, %v2107
    %s2111 = scalar_lea.vmem [#allocation0], 132
    %2112 = vst.msk [vmem:[%s2111] sm:$0xf0] %vm2108, %v2107
    %s2113 = scalar_lea.vmem %s0, 35
    %v2114 = vld [vmem:[%s2113] sm:$0x1]
    %s2115 = scalar_lea.vmem %s0, 322
    %v2116 = vld [vmem:[%s2115] sm:$0x2]
    %vm2117 = vcmask 1041409
    %v2118 = vsel %vm2117, %v2116, %v2114
    %s2119 = scalar_lea.vmem %s0, 609
    %v2120 = vld [vmem:[%s2119] sm:$0x4]
    %vm2121 = vcmask 1042434
    %v2122 = vsel %vm2121, %v2120, %v2118
    %s2123 = scalar_lea.vmem %s0, 3281
    %s2124 = smov 24
    %v2125 = vld [vmem:[%s2123] ss:$-794 sm:%s2124]
    %vm2126 = vcmask 1044483
    %v2127 = vsel %vm2126, %v2125, %v2122
    %s2128 = scalar_lea.vmem %s0, 388
    %v2129 = vld [vmem:[%s2128] sm:$0x20]
    %vm2130 = vcmask 1045509
    %v2131 = vsel %vm2130, %v2129, %v2127
    %s2132 = scalar_lea.vmem %s0, 675
    %v2133 = vld [vmem:[%s2132] sm:$0x40]
    %vm2134 = vcmask 1046534
    %v2135 = vsel %vm2134, %v2133, %v2131
    %s2136 = scalar_lea.vmem %s0, 962
    %v2137 = vld [vmem:[%s2136] sm:$0x80]
    %vm2138 = vcmask 1047559
    %v2139 = vsel %vm2138, %v2137, %v2135
    %2140 = vrot.lane.b32.xlu0 %v2139, 74
    %v2141 = vpop.permute.xlu0 %2140
    %vm2142 = vcmask 687696
    %s2143 = scalar_lea.vmem [#allocation0], 16
    %2144 = vst.msk [vmem:[%s2143] sm:$0xf] %vm2142, %v2141
    %s2145 = scalar_lea.vmem [#allocation0], 52
    %2146 = vst.msk [vmem:[%s2145] sm:$0xf0] %vm2142, %v2141
    %s2147 = scalar_lea.vmem %s0, 230
    %v2148 = vld [vmem:[%s2147] sm:$0x1]
    %s2149 = scalar_lea.vmem %s0, 517
    %v2150 = vld [vmem:[%s2149] sm:$0x2]
    %vm2151 = vcmask 1041409
    %v2152 = vsel %vm2151, %v2150, %v2148
    %s2153 = scalar_lea.vmem %s0, 804
    %v2154 = vld [vmem:[%s2153] sm:$0x4]
    %vm2155 = vcmask 1042434
    %v2156 = vsel %vm2155, %v2154, %v2152
    %s2157 = scalar_lea.vmem %s0, 4316
    %s2158 = smov 24
    %v2159 = vld [vmem:[%s2157] ss:$-1074 sm:%s2158]
    %vm2160 = vcmask 1044483
    %v2161 = vsel %vm2160, %v2159, %v2156
    %s2162 = scalar_lea.vmem %s0, 303
    %v2163 = vld [vmem:[%s2162] sm:$0x20]
    %vm2164 = vcmask 1045509
    %v2165 = vsel %vm2164, %v2163, %v2161
    %s2166 = scalar_lea.vmem %s0, 590
    %v2167 = vld [vmem:[%s2166] sm:$0x40]
    %vm2168 = vcmask 1046534
    %v2169 = vsel %vm2168, %v2167, %v2165
    %s2170 = scalar_lea.vmem %s0, 877
    %v2171 = vld [vmem:[%s2170] sm:$0x80]
    %vm2172 = vcmask 1047559
    %v2173 = vsel %vm2172, %v2171, %v2169
    %2174 = vrot.lane.b32.xlu0 %v2173, 72
    %v2175 = vpop.permute.xlu0 %2174
    %vm2176 = vcmask 671296
    %s2177 = scalar_lea.vmem [#allocation0], 128
    %2178 = vst.msk [vmem:[%s2177] sm:$0xf] %vm2176, %v2175
    %s2179 = scalar_lea.vmem [#allocation0], 4
    %2180 = vst.msk [vmem:[%s2179] sm:$0xf0] %vm2176, %v2175
    %s2181 = scalar_lea.vmem %s0, 90
    %v2182 = vld [vmem:[%s2181] sm:$0x1]
    %s2183 = scalar_lea.vmem %s0, 377
    %v2184 = vld [vmem:[%s2183] sm:$0x2]
    %vm2185 = vcmask 1041409
    %v2186 = vsel %vm2185, %v2184, %v2182
    %s2187 = scalar_lea.vmem %s0, 664
    %v2188 = vld [vmem:[%s2187] sm:$0x4]
    %vm2189 = vcmask 1042434
    %v2190 = vsel %vm2189, %v2188, %v2186
    %s2191 = scalar_lea.vmem %s0, 3336
    %s2192 = smov 24
    %v2193 = vld [vmem:[%s2191] ss:$-794 sm:%s2192]
    %vm2194 = vcmask 1044483
    %v2195 = vsel %vm2194, %v2193, %v2190
    %s2196 = scalar_lea.vmem %s0, 443
    %v2197 = vld [vmem:[%s2196] sm:$0x20]
    %vm2198 = vcmask 1045509
    %v2199 = vsel %vm2198, %v2197, %v2195
    %s2200 = scalar_lea.vmem %s0, 730
    %v2201 = vld [vmem:[%s2200] sm:$0x40]
    %vm2202 = vcmask 1046534
    %v2203 = vsel %vm2202, %v2201, %v2199
    %s2204 = scalar_lea.vmem %s0, 1017
    %v2205 = vld [vmem:[%s2204] sm:$0x80]
    %vm2206 = vcmask 1047559
    %v2207 = vsel %vm2206, %v2205, %v2203
    %2208 = vrot.lane.b32.xlu0 %v2207, 72
    %v2209 = vpop.permute.xlu0 %2208
    %vm2210 = vcmask 671296
    %s2211 = scalar_lea.vmem [#allocation0], 48
    %2212 = vst.msk [vmem:[%s2211] sm:$0xf] %vm2210, %v2209
    %s2213 = scalar_lea.vmem [#allocation0], 84
    %2214 = vst.msk [vmem:[%s2213] sm:$0xf0] %vm2210, %v2209
    %s2215 = scalar_lea.vmem %s0, 7
    %v2216 = vld [vmem:[%s2215] sm:$0x1]
    %s2217 = scalar_lea.vmem %s0, 294
    %v2218 = vld [vmem:[%s2217] sm:$0x2]
    %vm2219 = vcmask 1041409
    %v2220 = vsel %vm2219, %v2218, %v2216
    %s2221 = scalar_lea.vmem %s0, 581
    %v2222 = vld [vmem:[%s2221] sm:$0x4]
    %vm2223 = vcmask 1042434
    %v2224 = vsel %vm2223, %v2222, %v2220
    %s2225 = scalar_lea.vmem %s0, 3253
    %s2226 = smov 24
    %v2227 = vld [vmem:[%s2225] ss:$-794 sm:%s2226]
    %vm2228 = vcmask 1044483
    %v2229 = vsel %vm2228, %v2227, %v2224
    %s2230 = scalar_lea.vmem %s0, 360
    %v2231 = vld [vmem:[%s2230] sm:$0x20]
    %vm2232 = vcmask 1045509
    %v2233 = vsel %vm2232, %v2231, %v2229
    %s2234 = scalar_lea.vmem %s0, 647
    %v2235 = vld [vmem:[%s2234] sm:$0x40]
    %vm2236 = vcmask 1046534
    %v2237 = vsel %vm2236, %v2235, %v2233
    %s2238 = scalar_lea.vmem %s0, 934
    %v2239 = vld [vmem:[%s2238] sm:$0x80]
    %vm2240 = vcmask 1047559
    %v2241 = vsel %vm2240, %v2239, %v2237
    %2242 = vrot.lane.b32.xlu0 %v2241, 70
    %v2243 = vpop.permute.xlu0 %2242
    %vm2244 = vcmask 654896
    %2245 = vst.msk [vmem:[#allocation0] sm:$0xf] %vm2244, %v2243
    %s2246 = scalar_lea.vmem [#allocation0], 36
    %2247 = vst.msk [vmem:[%s2246] sm:$0xf0] %vm2244, %v2243
    %s2248 = scalar_lea.vmem %s0, 285
    %v2249 = vld [vmem:[%s2248] sm:$0x1]
    %s2250 = scalar_lea.vmem %s0, 572
    %v2251 = vld [vmem:[%s2250] sm:$0x2]
    %vm2252 = vcmask 1041409
    %v2253 = vsel %vm2252, %v2251, %v2249
    %s2254 = scalar_lea.vmem %s0, 859
    %v2255 = vld [vmem:[%s2254] sm:$0x4]
    %vm2256 = vcmask 1042434
    %v2257 = vsel %vm2256, %v2255, %v2253
    %s2258 = scalar_lea.vmem %s0, 4155
    %s2259 = smov 24
    %v2260 = vld [vmem:[%s2258] ss:$-1002 sm:%s2259]
    %vm2261 = vcmask 1044483
    %v2262 = vsel %vm2261, %v2260, %v2257
    %s2263 = scalar_lea.vmem %s0, 430
    %v2264 = vld [vmem:[%s2263] sm:$0x20]
    %vm2265 = vcmask 1045509
    %v2266 = vsel %vm2265, %v2264, %v2262
    %s2267 = scalar_lea.vmem %s0, 717
    %v2268 = vld [vmem:[%s2267] sm:$0x40]
    %vm2269 = vcmask 1046534
    %v2270 = vsel %vm2269, %v2268, %v2266
    %s2271 = scalar_lea.vmem %s0, 1004
    %v2272 = vld [vmem:[%s2271] sm:$0x80]
    %vm2273 = vcmask 1047559
    %v2274 = vsel %vm2273, %v2272, %v2270
    %2275 = vrot.lane.b32.xlu0 %v2274, 70
    %v2276 = vpop.permute.xlu0 %2275
    %vm2277 = vcmask 654896
    %s2278 = scalar_lea.vmem [#allocation0], 160
    %2279 = vst.msk [vmem:[%s2278] sm:$0xf] %vm2277, %v2276
    %s2280 = scalar_lea.vmem [#allocation0], 76
    %2281 = vst.msk [vmem:[%s2280] sm:$0xf0] %vm2277, %v2276
    %s2282 = scalar_lea.vmem %s0, 217
    %v2283 = vld [vmem:[%s2282] sm:$0x1]
    %s2284 = scalar_lea.vmem %s0, 504
    %v2285 = vld [vmem:[%s2284] sm:$0x2]
    %vm2286 = vcmask 1041409
    %v2287 = vsel %vm2286, %v2285, %v2283
    %s2288 = scalar_lea.vmem %s0, 791
    %v2289 = vld [vmem:[%s2288] sm:$0x4]
    %vm2290 = vcmask 1042434
    %v2291 = vsel %vm2290, %v2289, %v2287
    %s2292 = scalar_lea.vmem %s0, 1078
    %v2293 = vld [vmem:[%s2292] sm:$0x8]
    %vm2294 = vcmask 1043459
    %v2295 = vsel %vm2294, %v2293, %v2291
    %2296 = vrot.lane.b32.xlu0 %v2295, 70
    %v2297 = vpop.permute.xlu0 %2296
    %vm2298 = vcmask 654896
    %s2299 = scalar_lea.vmem [#allocation0], 120
    %2300 = vst.msk [vmem:[%s2299] sm:$0xf] %vm2298, %v2297
    %s2301 = scalar_lea.vmem %s0, 62
    %v2302 = vld [vmem:[%s2301] sm:$0x1]
    %s2303 = scalar_lea.vmem %s0, 349
    %v2304 = vld [vmem:[%s2303] sm:$0x2]
    %vm2305 = vcmask 1041409
    %v2306 = vsel %vm2305, %v2304, %v2302
    %s2307 = scalar_lea.vmem %s0, 636
    %v2308 = vld [vmem:[%s2307] sm:$0x4]
    %vm2309 = vcmask 1042434
    %v2310 = vsel %vm2309, %v2308, %v2306
    %s2311 = scalar_lea.vmem %s0, 3308
    %s2312 = smov 24
    %v2313 = vld [vmem:[%s2311] ss:$-794 sm:%s2312]
    %vm2314 = vcmask 1044483
    %v2315 = vsel %vm2314, %v2313, %v2310
    %s2316 = scalar_lea.vmem %s0, 415
    %v2317 = vld [vmem:[%s2316] sm:$0x20]
    %vm2318 = vcmask 1045509
    %v2319 = vsel %vm2318, %v2317, %v2315
    %s2320 = scalar_lea.vmem %s0, 702
    %v2321 = vld [vmem:[%s2320] sm:$0x40]
    %vm2322 = vcmask 1046534
    %v2323 = vsel %vm2322, %v2321, %v2319
    %s2324 = scalar_lea.vmem %s0, 989
    %v2325 = vld [vmem:[%s2324] sm:$0x80]
    %vm2326 = vcmask 1047559
    %v2327 = vsel %vm2326, %v2325, %v2323
    %2328 = vrot.lane.b32.xlu0 %v2327, 68
    %v2329 = vpop.permute.xlu0 %2328
    %vm2330 = vcmask 638496
    %s2331 = scalar_lea.vmem [#allocation0], 32
    %2332 = vst.msk [vmem:[%s2331] sm:$0xf] %vm2330, %v2329
    %s2333 = scalar_lea.vmem [#allocation0], 68
    %2334 = vst.msk [vmem:[%s2333] sm:$0xf0] %vm2330, %v2329
    %s2335 = scalar_lea.vmem %s0, 202
    %v2336 = vld [vmem:[%s2335] sm:$0x1]
    %s2337 = scalar_lea.vmem %s0, 489
    %v2338 = vld [vmem:[%s2337] sm:$0x2]
    %vm2339 = vcmask 1041409
    %v2340 = vsel %vm2339, %v2338, %v2336
    %s2341 = scalar_lea.vmem %s0, 776
    %v2342 = vld [vmem:[%s2341] sm:$0x4]
    %vm2343 = vcmask 1042434
    %v2344 = vsel %vm2343, %v2342, %v2340
    %s2345 = scalar_lea.vmem %s0, 3448
    %s2346 = smov 24
    %v2347 = vld [vmem:[%s2345] ss:$-794 sm:%s2346]
    %vm2348 = vcmask 1044483
    %v2349 = vsel %vm2348, %v2347, %v2344
    %s2350 = scalar_lea.vmem %s0, 555
    %v2351 = vld [vmem:[%s2350] sm:$0x20]
    %vm2352 = vcmask 1045509
    %v2353 = vsel %vm2352, %v2351, %v2349
    %s2354 = scalar_lea.vmem %s0, 842
    %v2355 = vld [vmem:[%s2354] sm:$0x40]
    %vm2356 = vcmask 1046534
    %v2357 = vsel %vm2356, %v2355, %v2353
    %s2358 = scalar_lea.vmem %s0, 1129
    %v2359 = vld [vmem:[%s2358] sm:$0x80]
    %vm2360 = vcmask 1047559
    %v2361 = vsel %vm2360, %v2359, %v2357
    %2362 = vrot.lane.b32.xlu0 %v2361, 68
    %v2363 = vpop.permute.xlu0 %2362
    %vm2364 = vcmask 638496
    %s2365 = scalar_lea.vmem [#allocation0], 112
    %2366 = vst.msk [vmem:[%s2365] sm:$0xf] %vm2364, %v2363
    %s2367 = scalar_lea.vmem [#allocation0], 148
    %2368 = vst.msk [vmem:[%s2367] sm:$0xf0] %vm2364, %v2363
    %s2369 = scalar_lea.vmem %s0, 117
    %v2370 = vld [vmem:[%s2369] sm:$0x1]
    %s2371 = scalar_lea.vmem %s0, 404
    %v2372 = vld [vmem:[%s2371] sm:$0x2]
    %vm2373 = vcmask 1041409
    %v2374 = vsel %vm2373, %v2372, %v2370
    %s2375 = scalar_lea.vmem %s0, 691
    %v2376 = vld [vmem:[%s2375] sm:$0x4]
    %vm2377 = vcmask 1042434
    %v2378 = vsel %vm2377, %v2376, %v2374
    %s2379 = scalar_lea.vmem %s0, 3363
    %s2380 = smov 24
    %v2381 = vld [vmem:[%s2379] ss:$-794 sm:%s2380]
    %vm2382 = vcmask 1044483
    %v2383 = vsel %vm2382, %v2381, %v2378
    %s2384 = scalar_lea.vmem %s0, 470
    %v2385 = vld [vmem:[%s2384] sm:$0x20]
    %vm2386 = vcmask 1045509
    %v2387 = vsel %vm2386, %v2385, %v2383
    %s2388 = scalar_lea.vmem %s0, 757
    %v2389 = vld [vmem:[%s2388] sm:$0x40]
    %vm2390 = vcmask 1046534
    %v2391 = vsel %vm2390, %v2389, %v2387
    %s2392 = scalar_lea.vmem %s0, 1044
    %v2393 = vld [vmem:[%s2392] sm:$0x80]
    %vm2394 = vcmask 1047559
    %v2395 = vsel %vm2394, %v2393, %v2391
    %2396 = vrot.lane.b32.xlu0 %v2395, 66
    %v2397 = vpop.permute.xlu0 %2396
    %vm2398 = vcmask 622096
    %s2399 = scalar_lea.vmem [#allocation0], 64
    %2400 = vst.msk [vmem:[%s2399] sm:$0xf] %vm2398, %v2397
    %s2401 = scalar_lea.vmem [#allocation0], 100
    %2402 = vst.msk [vmem:[%s2401] sm:$0xf0] %vm2398, %v2397
    %s2403 = scalar_lea.vmem %s0, 257
    %v2404 = vld [vmem:[%s2403] sm:$0x1]
    %s2405 = scalar_lea.vmem %s0, 544
    %v2406 = vld [vmem:[%s2405] sm:$0x2]
    %vm2407 = vcmask 1041409
    %v2408 = vsel %vm2407, %v2406, %v2404
    %s2409 = scalar_lea.vmem %s0, 831
    %v2410 = vld [vmem:[%s2409] sm:$0x4]
    %vm2411 = vcmask 1042434
    %v2412 = vsel %vm2411, %v2410, %v2408
    %s2413 = scalar_lea.vmem %s0, 4337
    %s2414 = smov 24
    %v2415 = vld [vmem:[%s2413] ss:$-1072 sm:%s2414]
    %vm2416 = vcmask 1044483
    %v2417 = vsel %vm2416, %v2415, %v2412
    %s2418 = scalar_lea.vmem %s0, 332
    %v2419 = vld [vmem:[%s2418] sm:$0x20]
    %vm2420 = vcmask 1045509
    %v2421 = vsel %vm2420, %v2419, %v2417
    %s2422 = scalar_lea.vmem %s0, 619
    %v2423 = vld [vmem:[%s2422] sm:$0x40]
    %vm2424 = vcmask 1046534
    %v2425 = vsel %vm2424, %v2423, %v2421
    %s2426 = scalar_lea.vmem %s0, 906
    %v2427 = vld [vmem:[%s2426] sm:$0x80]
    %vm2428 = vcmask 1047559
    %v2429 = vsel %vm2428, %v2427, %v2425
    %2430 = vrot.lane.b32.xlu0 %v2429, 66
    %v2431 = vpop.permute.xlu0 %2430
    %vm2432 = vcmask 622096
    %s2433 = scalar_lea.vmem [#allocation0], 144
    %2434 = vst.msk [vmem:[%s2433] sm:$0xf] %vm2432, %v2431
    %s2435 = scalar_lea.vmem [#allocation0], 20
    %2436 = vst.msk [vmem:[%s2435] sm:$0xf0] %vm2432, %v2431
    %s2437 = scalar_lea.vmem %s0, 174
    %v2438 = vld [vmem:[%s2437] sm:$0x1]
    %s2439 = scalar_lea.vmem %s0, 461
    %v2440 = vld [vmem:[%s2439] sm:$0x2]
    %vm2441 = vcmask 1041409
    %v2442 = vsel %vm2441, %v2440, %v2438
    %s2443 = scalar_lea.vmem %s0, 748
    %v2444 = vld [vmem:[%s2443] sm:$0x4]
    %vm2445 = vcmask 1042434
    %v2446 = vsel %vm2445, %v2444, %v2442
    %s2447 = scalar_lea.vmem %s0, 3420
    %s2448 = smov 24
    %v2449 = vld [vmem:[%s2447] ss:$-794 sm:%s2448]
    %vm2450 = vcmask 1044483
    %v2451 = vsel %vm2450, %v2449, %v2446
    %s2452 = scalar_lea.vmem %s0, 527
    %v2453 = vld [vmem:[%s2452] sm:$0x20]
    %vm2454 = vcmask 1045509
    %v2455 = vsel %vm2454, %v2453, %v2451
    %s2456 = scalar_lea.vmem %s0, 814
    %v2457 = vld [vmem:[%s2456] sm:$0x40]
    %vm2458 = vcmask 1046534
    %v2459 = vsel %vm2458, %v2457, %v2455
    %s2460 = scalar_lea.vmem %s0, 1101
    %v2461 = vld [vmem:[%s2460] sm:$0x80]
    %vm2462 = vcmask 1047559
    %v2463 = vsel %vm2462, %v2461, %v2459
    %2464 = vrot.lane.b32.xlu0 %v2463, 64
    %v2465 = vpop.permute.xlu0 %2464
    %vm2466 = vcmask 605696
    %s2467 = scalar_lea.vmem [#allocation0], 96
    %2468 = vst.msk [vmem:[%s2467] sm:$0xf] %vm2466, %v2465
    %s2469 = scalar_lea.vmem [#allocation0], 132
    %2470 = vst.msk [vmem:[%s2469] sm:$0xf0] %vm2466, %v2465
    %s2471 = scalar_lea.vmem %s0, 34
    %v2472 = vld [vmem:[%s2471] sm:$0x1]
    %s2473 = scalar_lea.vmem %s0, 321
    %v2474 = vld [vmem:[%s2473] sm:$0x2]
    %vm2475 = vcmask 1041409
    %v2476 = vsel %vm2475, %v2474, %v2472
    %s2477 = scalar_lea.vmem %s0, 608
    %v2478 = vld [vmem:[%s2477] sm:$0x4]
    %vm2479 = vcmask 1042434
    %v2480 = vsel %vm2479, %v2478, %v2476
    %s2481 = scalar_lea.vmem %s0, 3280
    %s2482 = smov 24
    %v2483 = vld [vmem:[%s2481] ss:$-794 sm:%s2482]
    %vm2484 = vcmask 1044483
    %v2485 = vsel %vm2484, %v2483, %v2480
    %s2486 = scalar_lea.vmem %s0, 387
    %v2487 = vld [vmem:[%s2486] sm:$0x20]
    %vm2488 = vcmask 1045509
    %v2489 = vsel %vm2488, %v2487, %v2485
    %s2490 = scalar_lea.vmem %s0, 674
    %v2491 = vld [vmem:[%s2490] sm:$0x40]
    %vm2492 = vcmask 1046534
    %v2493 = vsel %vm2492, %v2491, %v2489
    %s2494 = scalar_lea.vmem %s0, 961
    %v2495 = vld [vmem:[%s2494] sm:$0x80]
    %vm2496 = vcmask 1047559
    %v2497 = vsel %vm2496, %v2495, %v2493
    %2498 = vrot.lane.b32.xlu0 %v2497, 64
    %v2499 = vpop.permute.xlu0 %2498
    %vm2500 = vcmask 605696
    %s2501 = scalar_lea.vmem [#allocation0], 16
    %2502 = vst.msk [vmem:[%s2501] sm:$0xf] %vm2500, %v2499
    %s2503 = scalar_lea.vmem [#allocation0], 52
    %2504 = vst.msk [vmem:[%s2503] sm:$0xf0] %vm2500, %v2499
    %s2505 = scalar_lea.vmem %s0, 229
    %v2506 = vld [vmem:[%s2505] sm:$0x1]
    %s2507 = scalar_lea.vmem %s0, 516
    %v2508 = vld [vmem:[%s2507] sm:$0x2]
    %vm2509 = vcmask 1041409
    %v2510 = vsel %vm2509, %v2508, %v2506
    %s2511 = scalar_lea.vmem %s0, 803
    %v2512 = vld [vmem:[%s2511] sm:$0x4]
    %vm2513 = vcmask 1042434
    %v2514 = vsel %vm2513, %v2512, %v2510
    %s2515 = scalar_lea.vmem %s0, 4315
    %s2516 = smov 24
    %v2517 = vld [vmem:[%s2515] ss:$-1074 sm:%s2516]
    %vm2518 = vcmask 1044483
    %v2519 = vsel %vm2518, %v2517, %v2514
    %s2520 = scalar_lea.vmem %s0, 302
    %v2521 = vld [vmem:[%s2520] sm:$0x20]
    %vm2522 = vcmask 1045509
    %v2523 = vsel %vm2522, %v2521, %v2519
    %s2524 = scalar_lea.vmem %s0, 589
    %v2525 = vld [vmem:[%s2524] sm:$0x40]
    %vm2526 = vcmask 1046534
    %v2527 = vsel %vm2526, %v2525, %v2523
    %s2528 = scalar_lea.vmem %s0, 876
    %v2529 = vld [vmem:[%s2528] sm:$0x80]
    %vm2530 = vcmask 1047559
    %v2531 = vsel %vm2530, %v2529, %v2527
    %2532 = vrot.lane.b32.xlu0 %v2531, 62
    %v2533 = vpop.permute.xlu0 %2532
    %vm2534 = vcmask 589296
    %s2535 = scalar_lea.vmem [#allocation0], 128
    %2536 = vst.msk [vmem:[%s2535] sm:$0xf] %vm2534, %v2533
    %s2537 = scalar_lea.vmem [#allocation0], 4
    %2538 = vst.msk [vmem:[%s2537] sm:$0xf0] %vm2534, %v2533
    %s2539 = scalar_lea.vmem %s0, 89
    %v2540 = vld [vmem:[%s2539] sm:$0x1]
    %s2541 = scalar_lea.vmem %s0, 376
    %v2542 = vld [vmem:[%s2541] sm:$0x2]
    %vm2543 = vcmask 1041409
    %v2544 = vsel %vm2543, %v2542, %v2540
    %s2545 = scalar_lea.vmem %s0, 663
    %v2546 = vld [vmem:[%s2545] sm:$0x4]
    %vm2547 = vcmask 1042434
    %v2548 = vsel %vm2547, %v2546, %v2544
    %s2549 = scalar_lea.vmem %s0, 3335
    %s2550 = smov 24
    %v2551 = vld [vmem:[%s2549] ss:$-794 sm:%s2550]
    %vm2552 = vcmask 1044483
    %v2553 = vsel %vm2552, %v2551, %v2548
    %s2554 = scalar_lea.vmem %s0, 442
    %v2555 = vld [vmem:[%s2554] sm:$0x20]
    %vm2556 = vcmask 1045509
    %v2557 = vsel %vm2556, %v2555, %v2553
    %s2558 = scalar_lea.vmem %s0, 729
    %v2559 = vld [vmem:[%s2558] sm:$0x40]
    %vm2560 = vcmask 1046534
    %v2561 = vsel %vm2560, %v2559, %v2557
    %s2562 = scalar_lea.vmem %s0, 1016
    %v2563 = vld [vmem:[%s2562] sm:$0x80]
    %vm2564 = vcmask 1047559
    %v2565 = vsel %vm2564, %v2563, %v2561
    %2566 = vrot.lane.b32.xlu0 %v2565, 62
    %v2567 = vpop.permute.xlu0 %2566
    %vm2568 = vcmask 589296
    %s2569 = scalar_lea.vmem [#allocation0], 48
    %2570 = vst.msk [vmem:[%s2569] sm:$0xf] %vm2568, %v2567
    %s2571 = scalar_lea.vmem [#allocation0], 84
    %2572 = vst.msk [vmem:[%s2571] sm:$0xf0] %vm2568, %v2567
    %s2573 = scalar_lea.vmem %s0, 6
    %v2574 = vld [vmem:[%s2573] sm:$0x1]
    %s2575 = scalar_lea.vmem %s0, 293
    %v2576 = vld [vmem:[%s2575] sm:$0x2]
    %vm2577 = vcmask 1041409
    %v2578 = vsel %vm2577, %v2576, %v2574
    %s2579 = scalar_lea.vmem %s0, 580
    %v2580 = vld [vmem:[%s2579] sm:$0x4]
    %vm2581 = vcmask 1042434
    %v2582 = vsel %vm2581, %v2580, %v2578
    %s2583 = scalar_lea.vmem %s0, 3252
    %s2584 = smov 24
    %v2585 = vld [vmem:[%s2583] ss:$-794 sm:%s2584]
    %vm2586 = vcmask 1044483
    %v2587 = vsel %vm2586, %v2585, %v2582
    %s2588 = scalar_lea.vmem %s0, 359
    %v2589 = vld [vmem:[%s2588] sm:$0x20]
    %vm2590 = vcmask 1045509
    %v2591 = vsel %vm2590, %v2589, %v2587
    %s2592 = scalar_lea.vmem %s0, 646
    %v2593 = vld [vmem:[%s2592] sm:$0x40]
    %vm2594 = vcmask 1046534
    %v2595 = vsel %vm2594, %v2593, %v2591
    %s2596 = scalar_lea.vmem %s0, 933
    %v2597 = vld [vmem:[%s2596] sm:$0x80]
    %vm2598 = vcmask 1047559
    %v2599 = vsel %vm2598, %v2597, %v2595
    %2600 = vrot.lane.b32.xlu0 %v2599, 60
    %v2601 = vpop.permute.xlu0 %2600
    %vm2602 = vcmask 572896
    %2603 = vst.msk [vmem:[#allocation0] sm:$0xf] %vm2602, %v2601
    %s2604 = scalar_lea.vmem [#allocation0], 36
    %2605 = vst.msk [vmem:[%s2604] sm:$0xf0] %vm2602, %v2601
    %s2606 = scalar_lea.vmem %s0, 284
    %v2607 = vld [vmem:[%s2606] sm:$0x1]
    %s2608 = scalar_lea.vmem %s0, 571
    %v2609 = vld [vmem:[%s2608] sm:$0x2]
    %vm2610 = vcmask 1041409
    %v2611 = vsel %vm2610, %v2609, %v2607
    %s2612 = scalar_lea.vmem %s0, 858
    %v2613 = vld [vmem:[%s2612] sm:$0x4]
    %vm2614 = vcmask 1042434
    %v2615 = vsel %vm2614, %v2613, %v2611
    %s2616 = scalar_lea.vmem %s0, 4154
    %s2617 = smov 24
    %v2618 = vld [vmem:[%s2616] ss:$-1002 sm:%s2617]
    %vm2619 = vcmask 1044483
    %v2620 = vsel %vm2619, %v2618, %v2615
    %s2621 = scalar_lea.vmem %s0, 429
    %v2622 = vld [vmem:[%s2621] sm:$0x20]
    %vm2623 = vcmask 1045509
    %v2624 = vsel %vm2623, %v2622, %v2620
    %s2625 = scalar_lea.vmem %s0, 716
    %v2626 = vld [vmem:[%s2625] sm:$0x40]
    %vm2627 = vcmask 1046534
    %v2628 = vsel %vm2627, %v2626, %v2624
    %s2629 = scalar_lea.vmem %s0, 1003
    %v2630 = vld [vmem:[%s2629] sm:$0x80]
    %vm2631 = vcmask 1047559
    %v2632 = vsel %vm2631, %v2630, %v2628
    %2633 = vrot.lane.b32.xlu0 %v2632, 60
    %v2634 = vpop.permute.xlu0 %2633
    %vm2635 = vcmask 572896
    %s2636 = scalar_lea.vmem [#allocation0], 160
    %2637 = vst.msk [vmem:[%s2636] sm:$0xf] %vm2635, %v2634
    %s2638 = scalar_lea.vmem [#allocation0], 76
    %2639 = vst.msk [vmem:[%s2638] sm:$0xf0] %vm2635, %v2634
    %s2640 = scalar_lea.vmem %s0, 216
    %v2641 = vld [vmem:[%s2640] sm:$0x1]
    %s2642 = scalar_lea.vmem %s0, 503
    %v2643 = vld [vmem:[%s2642] sm:$0x2]
    %vm2644 = vcmask 1041409
    %v2645 = vsel %vm2644, %v2643, %v2641
    %s2646 = scalar_lea.vmem %s0, 790
    %v2647 = vld [vmem:[%s2646] sm:$0x4]
    %vm2648 = vcmask 1042434
    %v2649 = vsel %vm2648, %v2647, %v2645
    %s2650 = scalar_lea.vmem %s0, 1077
    %v2651 = vld [vmem:[%s2650] sm:$0x8]
    %vm2652 = vcmask 1043459
    %v2653 = vsel %vm2652, %v2651, %v2649
    %2654 = vrot.lane.b32.xlu0 %v2653, 60
    %v2655 = vpop.permute.xlu0 %2654
    %vm2656 = vcmask 572896
    %s2657 = scalar_lea.vmem [#allocation0], 120
    %2658 = vst.msk [vmem:[%s2657] sm:$0xf] %vm2656, %v2655
    %s2659 = scalar_lea.vmem %s0, 61
    %v2660 = vld [vmem:[%s2659] sm:$0x1]
    %s2661 = scalar_lea.vmem %s0, 348
    %v2662 = vld [vmem:[%s2661] sm:$0x2]
    %vm2663 = vcmask 1041409
    %v2664 = vsel %vm2663, %v2662, %v2660
    %s2665 = scalar_lea.vmem %s0, 635
    %v2666 = vld [vmem:[%s2665] sm:$0x4]
    %vm2667 = vcmask 1042434
    %v2668 = vsel %vm2667, %v2666, %v2664
    %s2669 = scalar_lea.vmem %s0, 3307
    %s2670 = smov 24
    %v2671 = vld [vmem:[%s2669] ss:$-794 sm:%s2670]
    %vm2672 = vcmask 1044483
    %v2673 = vsel %vm2672, %v2671, %v2668
    %s2674 = scalar_lea.vmem %s0, 414
    %v2675 = vld [vmem:[%s2674] sm:$0x20]
    %vm2676 = vcmask 1045509
    %v2677 = vsel %vm2676, %v2675, %v2673
    %s2678 = scalar_lea.vmem %s0, 701
    %v2679 = vld [vmem:[%s2678] sm:$0x40]
    %vm2680 = vcmask 1046534
    %v2681 = vsel %vm2680, %v2679, %v2677
    %s2682 = scalar_lea.vmem %s0, 988
    %v2683 = vld [vmem:[%s2682] sm:$0x80]
    %vm2684 = vcmask 1047559
    %v2685 = vsel %vm2684, %v2683, %v2681
    %2686 = vrot.lane.b32.xlu0 %v2685, 58
    %v2687 = vpop.permute.xlu0 %2686
    %vm2688 = vcmask 556496
    %s2689 = scalar_lea.vmem [#allocation0], 32
    %2690 = vst.msk [vmem:[%s2689] sm:$0xf] %vm2688, %v2687
    %s2691 = scalar_lea.vmem [#allocation0], 68
    %2692 = vst.msk [vmem:[%s2691] sm:$0xf0] %vm2688, %v2687
    %s2693 = scalar_lea.vmem %s0, 201
    %v2694 = vld [vmem:[%s2693] sm:$0x1]
    %s2695 = scalar_lea.vmem %s0, 488
    %v2696 = vld [vmem:[%s2695] sm:$0x2]
    %vm2697 = vcmask 1041409
    %v2698 = vsel %vm2697, %v2696, %v2694
    %s2699 = scalar_lea.vmem %s0, 775
    %v2700 = vld [vmem:[%s2699] sm:$0x4]
    %vm2701 = vcmask 1042434
    %v2702 = vsel %vm2701, %v2700, %v2698
    %s2703 = scalar_lea.vmem %s0, 3447
    %s2704 = smov 24
    %v2705 = vld [vmem:[%s2703] ss:$-794 sm:%s2704]
    %vm2706 = vcmask 1044483
    %v2707 = vsel %vm2706, %v2705, %v2702
    %s2708 = scalar_lea.vmem %s0, 554
    %v2709 = vld [vmem:[%s2708] sm:$0x20]
    %vm2710 = vcmask 1045509
    %v2711 = vsel %vm2710, %v2709, %v2707
    %s2712 = scalar_lea.vmem %s0, 841
    %v2713 = vld [vmem:[%s2712] sm:$0x40]
    %vm2714 = vcmask 1046534
    %v2715 = vsel %vm2714, %v2713, %v2711
    %s2716 = scalar_lea.vmem %s0, 1128
    %v2717 = vld [vmem:[%s2716] sm:$0x80]
    %vm2718 = vcmask 1047559
    %v2719 = vsel %vm2718, %v2717, %v2715
    %2720 = vrot.lane.b32.xlu0 %v2719, 58
    %v2721 = vpop.permute.xlu0 %2720
    %vm2722 = vcmask 556496
    %s2723 = scalar_lea.vmem [#allocation0], 112
    %2724 = vst.msk [vmem:[%s2723] sm:$0xf] %vm2722, %v2721
    %s2725 = scalar_lea.vmem [#allocation0], 148
    %2726 = vst.msk [vmem:[%s2725] sm:$0xf0] %vm2722, %v2721
    %s2727 = scalar_lea.vmem %s0, 116
    %v2728 = vld [vmem:[%s2727] sm:$0x1]
    %s2729 = scalar_lea.vmem %s0, 403
    %v2730 = vld [vmem:[%s2729] sm:$0x2]
    %vm2731 = vcmask 1041409
    %v2732 = vsel %vm2731, %v2730, %v2728
    %s2733 = scalar_lea.vmem %s0, 690
    %v2734 = vld [vmem:[%s2733] sm:$0x4]
    %vm2735 = vcmask 1042434
    %v2736 = vsel %vm2735, %v2734, %v2732
    %s2737 = scalar_lea.vmem %s0, 3362
    %s2738 = smov 24
    %v2739 = vld [vmem:[%s2737] ss:$-794 sm:%s2738]
    %vm2740 = vcmask 1044483
    %v2741 = vsel %vm2740, %v2739, %v2736
    %s2742 = scalar_lea.vmem %s0, 469
    %v2743 = vld [vmem:[%s2742] sm:$0x20]
    %vm2744 = vcmask 1045509
    %v2745 = vsel %vm2744, %v2743, %v2741
    %s2746 = scalar_lea.vmem %s0, 756
    %v2747 = vld [vmem:[%s2746] sm:$0x40]
    %vm2748 = vcmask 1046534
    %v2749 = vsel %vm2748, %v2747, %v2745
    %s2750 = scalar_lea.vmem %s0, 1043
    %v2751 = vld [vmem:[%s2750] sm:$0x80]
    %vm2752 = vcmask 1047559
    %v2753 = vsel %vm2752, %v2751, %v2749
    %2754 = vrot.lane.b32.xlu0 %v2753, 56
    %v2755 = vpop.permute.xlu0 %2754
    %vm2756 = vcmask 540096
    %s2757 = scalar_lea.vmem [#allocation0], 64
    %2758 = vst.msk [vmem:[%s2757] sm:$0xf] %vm2756, %v2755
    %s2759 = scalar_lea.vmem [#allocation0], 100
    %2760 = vst.msk [vmem:[%s2759] sm:$0xf0] %vm2756, %v2755
    %s2761 = scalar_lea.vmem %s0, 256
    %v2762 = vld [vmem:[%s2761] sm:$0x1]
    %s2763 = scalar_lea.vmem %s0, 543
    %v2764 = vld [vmem:[%s2763] sm:$0x2]
    %vm2765 = vcmask 1041409
    %v2766 = vsel %vm2765, %v2764, %v2762
    %s2767 = scalar_lea.vmem %s0, 830
    %v2768 = vld [vmem:[%s2767] sm:$0x4]
    %vm2769 = vcmask 1042434
    %v2770 = vsel %vm2769, %v2768, %v2766
    %s2771 = scalar_lea.vmem %s0, 4336
    %s2772 = smov 24
    %v2773 = vld [vmem:[%s2771] ss:$-1072 sm:%s2772]
    %vm2774 = vcmask 1044483
    %v2775 = vsel %vm2774, %v2773, %v2770
    %s2776 = scalar_lea.vmem %s0, 331
    %v2777 = vld [vmem:[%s2776] sm:$0x20]
    %vm2778 = vcmask 1045509
    %v2779 = vsel %vm2778, %v2777, %v2775
    %s2780 = scalar_lea.vmem %s0, 618
    %v2781 = vld [vmem:[%s2780] sm:$0x40]
    %vm2782 = vcmask 1046534
    %v2783 = vsel %vm2782, %v2781, %v2779
    %s2784 = scalar_lea.vmem %s0, 905
    %v2785 = vld [vmem:[%s2784] sm:$0x80]
    %vm2786 = vcmask 1047559
    %v2787 = vsel %vm2786, %v2785, %v2783
    %2788 = vrot.lane.b32.xlu0 %v2787, 56
    %v2789 = vpop.permute.xlu0 %2788
    %vm2790 = vcmask 540096
    %s2791 = scalar_lea.vmem [#allocation0], 144
    %2792 = vst.msk [vmem:[%s2791] sm:$0xf] %vm2790, %v2789
    %s2793 = scalar_lea.vmem [#allocation0], 20
    %2794 = vst.msk [vmem:[%s2793] sm:$0xf0] %vm2790, %v2789
    %s2795 = scalar_lea.vmem %s0, 173
    %v2796 = vld [vmem:[%s2795] sm:$0x1]
    %s2797 = scalar_lea.vmem %s0, 460
    %v2798 = vld [vmem:[%s2797] sm:$0x2]
    %vm2799 = vcmask 1041409
    %v2800 = vsel %vm2799, %v2798, %v2796
    %s2801 = scalar_lea.vmem %s0, 747
    %v2802 = vld [vmem:[%s2801] sm:$0x4]
    %vm2803 = vcmask 1042434
    %v2804 = vsel %vm2803, %v2802, %v2800
    %s2805 = scalar_lea.vmem %s0, 3419
    %s2806 = smov 24
    %v2807 = vld [vmem:[%s2805] ss:$-794 sm:%s2806]
    %vm2808 = vcmask 1044483
    %v2809 = vsel %vm2808, %v2807, %v2804
    %s2810 = scalar_lea.vmem %s0, 526
    %v2811 = vld [vmem:[%s2810] sm:$0x20]
    %vm2812 = vcmask 1045509
    %v2813 = vsel %vm2812, %v2811, %v2809
    %s2814 = scalar_lea.vmem %s0, 813
    %v2815 = vld [vmem:[%s2814] sm:$0x40]
    %vm2816 = vcmask 1046534
    %v2817 = vsel %vm2816, %v2815, %v2813
    %s2818 = scalar_lea.vmem %s0, 1100
    %v2819 = vld [vmem:[%s2818] sm:$0x80]
    %vm2820 = vcmask 1047559
    %v2821 = vsel %vm2820, %v2819, %v2817
    %2822 = vrot.lane.b32.xlu0 %v2821, 54
    %v2823 = vpop.permute.xlu0 %2822
    %vm2824 = vcmask 523696
    %s2825 = scalar_lea.vmem [#allocation0], 96
    %2826 = vst.msk [vmem:[%s2825] sm:$0xf] %vm2824, %v2823
    %s2827 = scalar_lea.vmem [#allocation0], 132
    %2828 = vst.msk [vmem:[%s2827] sm:$0xf0] %vm2824, %v2823
    %s2829 = scalar_lea.vmem %s0, 33
    %v2830 = vld [vmem:[%s2829] sm:$0x1]
    %s2831 = scalar_lea.vmem %s0, 320
    %v2832 = vld [vmem:[%s2831] sm:$0x2]
    %vm2833 = vcmask 1041409
    %v2834 = vsel %vm2833, %v2832, %v2830
    %s2835 = scalar_lea.vmem %s0, 607
    %v2836 = vld [vmem:[%s2835] sm:$0x4]
    %vm2837 = vcmask 1042434
    %v2838 = vsel %vm2837, %v2836, %v2834
    %s2839 = scalar_lea.vmem %s0, 3279
    %s2840 = smov 24
    %v2841 = vld [vmem:[%s2839] ss:$-794 sm:%s2840]
    %vm2842 = vcmask 1044483
    %v2843 = vsel %vm2842, %v2841, %v2838
    %s2844 = scalar_lea.vmem %s0, 386
    %v2845 = vld [vmem:[%s2844] sm:$0x20]
    %vm2846 = vcmask 1045509
    %v2847 = vsel %vm2846, %v2845, %v2843
    %s2848 = scalar_lea.vmem %s0, 673
    %v2849 = vld [vmem:[%s2848] sm:$0x40]
    %vm2850 = vcmask 1046534
    %v2851 = vsel %vm2850, %v2849, %v2847
    %s2852 = scalar_lea.vmem %s0, 960
    %v2853 = vld [vmem:[%s2852] sm:$0x80]
    %vm2854 = vcmask 1047559
    %v2855 = vsel %vm2854, %v2853, %v2851
    %2856 = vrot.lane.b32.xlu0 %v2855, 54
    %v2857 = vpop.permute.xlu0 %2856
    %vm2858 = vcmask 523696
    %s2859 = scalar_lea.vmem [#allocation0], 16
    %2860 = vst.msk [vmem:[%s2859] sm:$0xf] %vm2858, %v2857
    %s2861 = scalar_lea.vmem [#allocation0], 52
    %2862 = vst.msk [vmem:[%s2861] sm:$0xf0] %vm2858, %v2857
    %s2863 = scalar_lea.vmem %s0, 228
    %v2864 = vld [vmem:[%s2863] sm:$0x1]
    %s2865 = scalar_lea.vmem %s0, 515
    %v2866 = vld [vmem:[%s2865] sm:$0x2]
    %vm2867 = vcmask 1041409
    %v2868 = vsel %vm2867, %v2866, %v2864
    %s2869 = scalar_lea.vmem %s0, 802
    %v2870 = vld [vmem:[%s2869] sm:$0x4]
    %vm2871 = vcmask 1042434
    %v2872 = vsel %vm2871, %v2870, %v2868
    %s2873 = scalar_lea.vmem %s0, 4314
    %s2874 = smov 24
    %v2875 = vld [vmem:[%s2873] ss:$-1074 sm:%s2874]
    %vm2876 = vcmask 1044483
    %v2877 = vsel %vm2876, %v2875, %v2872
    %s2878 = scalar_lea.vmem %s0, 301
    %v2879 = vld [vmem:[%s2878] sm:$0x20]
    %vm2880 = vcmask 1045509
    %v2881 = vsel %vm2880, %v2879, %v2877
    %s2882 = scalar_lea.vmem %s0, 588
    %v2883 = vld [vmem:[%s2882] sm:$0x40]
    %vm2884 = vcmask 1046534
    %v2885 = vsel %vm2884, %v2883, %v2881
    %s2886 = scalar_lea.vmem %s0, 875
    %v2887 = vld [vmem:[%s2886] sm:$0x80]
    %vm2888 = vcmask 1047559
    %v2889 = vsel %vm2888, %v2887, %v2885
    %2890 = vrot.lane.b32.xlu0 %v2889, 52
    %v2891 = vpop.permute.xlu0 %2890
    %vm2892 = vcmask 507296
    %s2893 = scalar_lea.vmem [#allocation0], 128
    %2894 = vst.msk [vmem:[%s2893] sm:$0xf] %vm2892, %v2891
    %s2895 = scalar_lea.vmem [#allocation0], 4
    %2896 = vst.msk [vmem:[%s2895] sm:$0xf0] %vm2892, %v2891
    %s2897 = scalar_lea.vmem %s0, 88
    %v2898 = vld [vmem:[%s2897] sm:$0x1]
    %s2899 = scalar_lea.vmem %s0, 375
    %v2900 = vld [vmem:[%s2899] sm:$0x2]
    %vm2901 = vcmask 1041409
    %v2902 = vsel %vm2901, %v2900, %v2898
    %s2903 = scalar_lea.vmem %s0, 662
    %v2904 = vld [vmem:[%s2903] sm:$0x4]
    %vm2905 = vcmask 1042434
    %v2906 = vsel %vm2905, %v2904, %v2902
    %s2907 = scalar_lea.vmem %s0, 3334
    %s2908 = smov 24
    %v2909 = vld [vmem:[%s2907] ss:$-794 sm:%s2908]
    %vm2910 = vcmask 1044483
    %v2911 = vsel %vm2910, %v2909, %v2906
    %s2912 = scalar_lea.vmem %s0, 441
    %v2913 = vld [vmem:[%s2912] sm:$0x20]
    %vm2914 = vcmask 1045509
    %v2915 = vsel %vm2914, %v2913, %v2911
    %s2916 = scalar_lea.vmem %s0, 728
    %v2917 = vld [vmem:[%s2916] sm:$0x40]
    %vm2918 = vcmask 1046534
    %v2919 = vsel %vm2918, %v2917, %v2915
    %s2920 = scalar_lea.vmem %s0, 1015
    %v2921 = vld [vmem:[%s2920] sm:$0x80]
    %vm2922 = vcmask 1047559
    %v2923 = vsel %vm2922, %v2921, %v2919
    %2924 = vrot.lane.b32.xlu0 %v2923, 52
    %v2925 = vpop.permute.xlu0 %2924
    %vm2926 = vcmask 507296
    %s2927 = scalar_lea.vmem [#allocation0], 48
    %2928 = vst.msk [vmem:[%s2927] sm:$0xf] %vm2926, %v2925
    %s2929 = scalar_lea.vmem [#allocation0], 84
    %2930 = vst.msk [vmem:[%s2929] sm:$0xf0] %vm2926, %v2925
    %s2931 = scalar_lea.vmem %s0, 5
    %v2932 = vld [vmem:[%s2931] sm:$0x1]
    %s2933 = scalar_lea.vmem %s0, 292
    %v2934 = vld [vmem:[%s2933] sm:$0x2]
    %vm2935 = vcmask 1041409
    %v2936 = vsel %vm2935, %v2934, %v2932
    %s2937 = scalar_lea.vmem %s0, 579
    %v2938 = vld [vmem:[%s2937] sm:$0x4]
    %vm2939 = vcmask 1042434
    %v2940 = vsel %vm2939, %v2938, %v2936
    %s2941 = scalar_lea.vmem %s0, 3251
    %s2942 = smov 24
    %v2943 = vld [vmem:[%s2941] ss:$-794 sm:%s2942]
    %vm2944 = vcmask 1044483
    %v2945 = vsel %vm2944, %v2943, %v2940
    %s2946 = scalar_lea.vmem %s0, 358
    %v2947 = vld [vmem:[%s2946] sm:$0x20]
    %vm2948 = vcmask 1045509
    %v2949 = vsel %vm2948, %v2947, %v2945
    %s2950 = scalar_lea.vmem %s0, 645
    %v2951 = vld [vmem:[%s2950] sm:$0x40]
    %vm2952 = vcmask 1046534
    %v2953 = vsel %vm2952, %v2951, %v2949
    %s2954 = scalar_lea.vmem %s0, 932
    %v2955 = vld [vmem:[%s2954] sm:$0x80]
    %vm2956 = vcmask 1047559
    %v2957 = vsel %vm2956, %v2955, %v2953
    %2958 = vrot.lane.b32.xlu0 %v2957, 50
    %v2959 = vpop.permute.xlu0 %2958
    %vm2960 = vcmask 490896
    %2961 = vst.msk [vmem:[#allocation0] sm:$0xf] %vm2960, %v2959
    %s2962 = scalar_lea.vmem [#allocation0], 36
    %2963 = vst.msk [vmem:[%s2962] sm:$0xf0] %vm2960, %v2959
    %s2964 = scalar_lea.vmem %s0, 283
    %v2965 = vld [vmem:[%s2964] sm:$0x1]
    %s2966 = scalar_lea.vmem %s0, 570
    %v2967 = vld [vmem:[%s2966] sm:$0x2]
    %vm2968 = vcmask 1041409
    %v2969 = vsel %vm2968, %v2967, %v2965
    %s2970 = scalar_lea.vmem %s0, 857
    %v2971 = vld [vmem:[%s2970] sm:$0x4]
    %vm2972 = vcmask 1042434
    %v2973 = vsel %vm2972, %v2971, %v2969
    %s2974 = scalar_lea.vmem %s0, 4153
    %s2975 = smov 24
    %v2976 = vld [vmem:[%s2974] ss:$-1002 sm:%s2975]
    %vm2977 = vcmask 1044483
    %v2978 = vsel %vm2977, %v2976, %v2973
    %s2979 = scalar_lea.vmem %s0, 428
    %v2980 = vld [vmem:[%s2979] sm:$0x20]
    %vm2981 = vcmask 1045509
    %v2982 = vsel %vm2981, %v2980, %v2978
    %s2983 = scalar_lea.vmem %s0, 715
    %v2984 = vld [vmem:[%s2983] sm:$0x40]
    %vm2985 = vcmask 1046534
    %v2986 = vsel %vm2985, %v2984, %v2982
    %s2987 = scalar_lea.vmem %s0, 1002
    %v2988 = vld [vmem:[%s2987] sm:$0x80]
    %vm2989 = vcmask 1047559
    %v2990 = vsel %vm2989, %v2988, %v2986
    %2991 = vrot.lane.b32.xlu0 %v2990, 50
    %v2992 = vpop.permute.xlu0 %2991
    %vm2993 = vcmask 490896
    %s2994 = scalar_lea.vmem [#allocation0], 160
    %2995 = vst.msk [vmem:[%s2994] sm:$0xf] %vm2993, %v2992
    %s2996 = scalar_lea.vmem [#allocation0], 76
    %2997 = vst.msk [vmem:[%s2996] sm:$0xf0] %vm2993, %v2992
    %s2998 = scalar_lea.vmem %s0, 213
    %v2999 = vld [vmem:[%s2998] sm:$0x1]
    %s3000 = scalar_lea.vmem %s0, 500
    %v3001 = vld [vmem:[%s3000] sm:$0x2]
    %vm3002 = vcmask 1041409
    %v3003 = vsel %vm3002, %v3001, %v2999
    %s3004 = scalar_lea.vmem %s0, 787
    %v3005 = vld [vmem:[%s3004] sm:$0x4]
    %vm3006 = vcmask 1042434
    %v3007 = vsel %vm3006, %v3005, %v3003
    %s3008 = scalar_lea.vmem %s0, 1074
    %v3009 = vld [vmem:[%s3008] sm:$0x8]
    %vm3010 = vcmask 1043459
    %v3011 = vsel %vm3010, %v3009, %v3007
    %3012 = vrot.lane.b32.xlu0 %v3011, 50
    %v3013 = vpop.permute.xlu0 %3012
    %vm3014 = vcmask 490896
    %s3015 = scalar_lea.vmem [#allocation0], 120
    %3016 = vst.msk [vmem:[%s3015] sm:$0xf] %vm3014, %v3013
    %s3017 = scalar_lea.vmem %s0, 60
    %v3018 = vld [vmem:[%s3017] sm:$0x1]
    %s3019 = scalar_lea.vmem %s0, 347
    %v3020 = vld [vmem:[%s3019] sm:$0x2]
    %vm3021 = vcmask 1041409
    %v3022 = vsel %vm3021, %v3020, %v3018
    %s3023 = scalar_lea.vmem %s0, 634
    %v3024 = vld [vmem:[%s3023] sm:$0x4]
    %vm3025 = vcmask 1042434
    %v3026 = vsel %vm3025, %v3024, %v3022
    %s3027 = scalar_lea.vmem %s0, 3306
    %s3028 = smov 24
    %v3029 = vld [vmem:[%s3027] ss:$-794 sm:%s3028]
    %vm3030 = vcmask 1044483
    %v3031 = vsel %vm3030, %v3029, %v3026
    %s3032 = scalar_lea.vmem %s0, 413
    %v3033 = vld [vmem:[%s3032] sm:$0x20]
    %vm3034 = vcmask 1045509
    %v3035 = vsel %vm3034, %v3033, %v3031
    %s3036 = scalar_lea.vmem %s0, 700
    %v3037 = vld [vmem:[%s3036] sm:$0x40]
    %vm3038 = vcmask 1046534
    %v3039 = vsel %vm3038, %v3037, %v3035
    %s3040 = scalar_lea.vmem %s0, 987
    %v3041 = vld [vmem:[%s3040] sm:$0x80]
    %vm3042 = vcmask 1047559
    %v3043 = vsel %vm3042, %v3041, %v3039
    %3044 = vrot.lane.b32.xlu0 %v3043, 48
    %v3045 = vpop.permute.xlu0 %3044
    %vm3046 = vcmask 474496
    %s3047 = scalar_lea.vmem [#allocation0], 32
    %3048 = vst.msk [vmem:[%s3047] sm:$0xf] %vm3046, %v3045
    %s3049 = scalar_lea.vmem [#allocation0], 68
    %3050 = vst.msk [vmem:[%s3049] sm:$0xf0] %vm3046, %v3045
    %s3051 = scalar_lea.vmem %s0, 200
    %v3052 = vld [vmem:[%s3051] sm:$0x1]
    %s3053 = scalar_lea.vmem %s0, 487
    %v3054 = vld [vmem:[%s3053] sm:$0x2]
    %vm3055 = vcmask 1041409
    %v3056 = vsel %vm3055, %v3054, %v3052
    %s3057 = scalar_lea.vmem %s0, 774
    %v3058 = vld [vmem:[%s3057] sm:$0x4]
    %vm3059 = vcmask 1042434
    %v3060 = vsel %vm3059, %v3058, %v3056
    %s3061 = scalar_lea.vmem %s0, 3446
    %s3062 = smov 24
    %v3063 = vld [vmem:[%s3061] ss:$-794 sm:%s3062]
    %vm3064 = vcmask 1044483
    %v3065 = vsel %vm3064, %v3063, %v3060
    %s3066 = scalar_lea.vmem %s0, 553
    %v3067 = vld [vmem:[%s3066] sm:$0x20]
    %vm3068 = vcmask 1045509
    %v3069 = vsel %vm3068, %v3067, %v3065
    %s3070 = scalar_lea.vmem %s0, 840
    %v3071 = vld [vmem:[%s3070] sm:$0x40]
    %vm3072 = vcmask 1046534
    %v3073 = vsel %vm3072, %v3071, %v3069
    %s3074 = scalar_lea.vmem %s0, 1127
    %v3075 = vld [vmem:[%s3074] sm:$0x80]
    %vm3076 = vcmask 1047559
    %v3077 = vsel %vm3076, %v3075, %v3073
    %3078 = vrot.lane.b32.xlu0 %v3077, 48
    %v3079 = vpop.permute.xlu0 %3078
    %vm3080 = vcmask 474496
    %s3081 = scalar_lea.vmem [#allocation0], 112
    %3082 = vst.msk [vmem:[%s3081] sm:$0xf] %vm3080, %v3079
    %s3083 = scalar_lea.vmem [#allocation0], 148
    %3084 = vst.msk [vmem:[%s3083] sm:$0xf0] %vm3080, %v3079
    %s3085 = scalar_lea.vmem %s0, 115
    %v3086 = vld [vmem:[%s3085] sm:$0x1]
    %s3087 = scalar_lea.vmem %s0, 402
    %v3088 = vld [vmem:[%s3087] sm:$0x2]
    %vm3089 = vcmask 1041409
    %v3090 = vsel %vm3089, %v3088, %v3086
    %s3091 = scalar_lea.vmem %s0, 689
    %v3092 = vld [vmem:[%s3091] sm:$0x4]
    %vm3093 = vcmask 1042434
    %v3094 = vsel %vm3093, %v3092, %v3090
    %s3095 = scalar_lea.vmem %s0, 3361
    %s3096 = smov 24
    %v3097 = vld [vmem:[%s3095] ss:$-794 sm:%s3096]
    %vm3098 = vcmask 1044483
    %v3099 = vsel %vm3098, %v3097, %v3094
    %s3100 = scalar_lea.vmem %s0, 468
    %v3101 = vld [vmem:[%s3100] sm:$0x20]
    %vm3102 = vcmask 1045509
    %v3103 = vsel %vm3102, %v3101, %v3099
    %s3104 = scalar_lea.vmem %s0, 755
    %v3105 = vld [vmem:[%s3104] sm:$0x40]
    %vm3106 = vcmask 1046534
    %v3107 = vsel %vm3106, %v3105, %v3103
    %s3108 = scalar_lea.vmem %s0, 1042
    %v3109 = vld [vmem:[%s3108] sm:$0x80]
    %vm3110 = vcmask 1047559
    %v3111 = vsel %vm3110, %v3109, %v3107
    %3112 = vrot.lane.b32.xlu0 %v3111, 46
    %v3113 = vpop.permute.xlu0 %3112
    %vm3114 = vcmask 458096
    %s3115 = scalar_lea.vmem [#allocation0], 64
    %3116 = vst.msk [vmem:[%s3115] sm:$0xf] %vm3114, %v3113
    %s3117 = scalar_lea.vmem [#allocation0], 100
    %3118 = vst.msk [vmem:[%s3117] sm:$0xf0] %vm3114, %v3113
    %s3119 = scalar_lea.vmem %s0, 255
    %v3120 = vld [vmem:[%s3119] sm:$0x1]
    %s3121 = scalar_lea.vmem %s0, 542
    %v3122 = vld [vmem:[%s3121] sm:$0x2]
    %vm3123 = vcmask 1041409
    %v3124 = vsel %vm3123, %v3122, %v3120
    %s3125 = scalar_lea.vmem %s0, 829
    %v3126 = vld [vmem:[%s3125] sm:$0x4]
    %vm3127 = vcmask 1042434
    %v3128 = vsel %vm3127, %v3126, %v3124
    %s3129 = scalar_lea.vmem %s0, 4341
    %s3130 = smov 24
    %v3131 = vld [vmem:[%s3129] ss:$-1074 sm:%s3130]
    %vm3132 = vcmask 1044483
    %v3133 = vsel %vm3132, %v3131, %v3128
    %s3134 = scalar_lea.vmem %s0, 328
    %v3135 = vld [vmem:[%s3134] sm:$0x20]
    %vm3136 = vcmask 1045509
    %v3137 = vsel %vm3136, %v3135, %v3133
    %s3138 = scalar_lea.vmem %s0, 615
    %v3139 = vld [vmem:[%s3138] sm:$0x40]
    %vm3140 = vcmask 1046534
    %v3141 = vsel %vm3140, %v3139, %v3137
    %s3142 = scalar_lea.vmem %s0, 902
    %v3143 = vld [vmem:[%s3142] sm:$0x80]
    %vm3144 = vcmask 1047559
    %v3145 = vsel %vm3144, %v3143, %v3141
    %3146 = vrot.lane.b32.xlu0 %v3145, 46
    %v3147 = vpop.permute.xlu0 %3146
    %vm3148 = vcmask 458096
    %s3149 = scalar_lea.vmem [#allocation0], 144
    %3150 = vst.msk [vmem:[%s3149] sm:$0xf] %vm3148, %v3147
    %s3151 = scalar_lea.vmem [#allocation0], 20
    %3152 = vst.msk [vmem:[%s3151] sm:$0xf0] %vm3148, %v3147
    %s3153 = scalar_lea.vmem %s0, 172
    %v3154 = vld [vmem:[%s3153] sm:$0x1]
    %s3155 = scalar_lea.vmem %s0, 459
    %v3156 = vld [vmem:[%s3155] sm:$0x2]
    %vm3157 = vcmask 1041409
    %v3158 = vsel %vm3157, %v3156, %v3154
    %s3159 = scalar_lea.vmem %s0, 746
    %v3160 = vld [vmem:[%s3159] sm:$0x4]
    %vm3161 = vcmask 1042434
    %v3162 = vsel %vm3161, %v3160, %v3158
    %s3163 = scalar_lea.vmem %s0, 3418
    %s3164 = smov 24
    %v3165 = vld [vmem:[%s3163] ss:$-794 sm:%s3164]
    %vm3166 = vcmask 1044483
    %v3167 = vsel %vm3166, %v3165, %v3162
    %s3168 = scalar_lea.vmem %s0, 525
    %v3169 = vld [vmem:[%s3168] sm:$0x20]
    %vm3170 = vcmask 1045509
    %v3171 = vsel %vm3170, %v3169, %v3167
    %s3172 = scalar_lea.vmem %s0, 812
    %v3173 = vld [vmem:[%s3172] sm:$0x40]
    %vm3174 = vcmask 1046534
    %v3175 = vsel %vm3174, %v3173, %v3171
    %s3176 = scalar_lea.vmem %s0, 1099
    %v3177 = vld [vmem:[%s3176] sm:$0x80]
    %vm3178 = vcmask 1047559
    %v3179 = vsel %vm3178, %v3177, %v3175
    %3180 = vrot.lane.b32.xlu0 %v3179, 44
    %v3181 = vpop.permute.xlu0 %3180
    %vm3182 = vcmask 441696
    %s3183 = scalar_lea.vmem [#allocation0], 96
    %3184 = vst.msk [vmem:[%s3183] sm:$0xf] %vm3182, %v3181
    %s3185 = scalar_lea.vmem [#allocation0], 132
    %3186 = vst.msk [vmem:[%s3185] sm:$0xf0] %vm3182, %v3181
    %s3187 = scalar_lea.vmem %s0, 32
    %v3188 = vld [vmem:[%s3187] sm:$0x1]
    %s3189 = scalar_lea.vmem %s0, 319
    %v3190 = vld [vmem:[%s3189] sm:$0x2]
    %vm3191 = vcmask 1041409
    %v3192 = vsel %vm3191, %v3190, %v3188
    %s3193 = scalar_lea.vmem %s0, 606
    %v3194 = vld [vmem:[%s3193] sm:$0x4]
    %vm3195 = vcmask 1042434
    %v3196 = vsel %vm3195, %v3194, %v3192
    %s3197 = scalar_lea.vmem %s0, 3278
    %s3198 = smov 24
    %v3199 = vld [vmem:[%s3197] ss:$-794 sm:%s3198]
    %vm3200 = vcmask 1044483
    %v3201 = vsel %vm3200, %v3199, %v3196
    %s3202 = scalar_lea.vmem %s0, 385
    %v3203 = vld [vmem:[%s3202] sm:$0x20]
    %vm3204 = vcmask 1045509
    %v3205 = vsel %vm3204, %v3203, %v3201
    %s3206 = scalar_lea.vmem %s0, 672
    %v3207 = vld [vmem:[%s3206] sm:$0x40]
    %vm3208 = vcmask 1046534
    %v3209 = vsel %vm3208, %v3207, %v3205
    %s3210 = scalar_lea.vmem %s0, 959
    %v3211 = vld [vmem:[%s3210] sm:$0x80]
    %vm3212 = vcmask 1047559
    %v3213 = vsel %vm3212, %v3211, %v3209
    %3214 = vrot.lane.b32.xlu0 %v3213, 44
    %v3215 = vpop.permute.xlu0 %3214
    %vm3216 = vcmask 441696
    %s3217 = scalar_lea.vmem [#allocation0], 16
    %3218 = vst.msk [vmem:[%s3217] sm:$0xf] %vm3216, %v3215
    %s3219 = scalar_lea.vmem [#allocation0], 52
    %3220 = vst.msk [vmem:[%s3219] sm:$0xf0] %vm3216, %v3215
    %s3221 = scalar_lea.vmem %s0, 227
    %v3222 = vld [vmem:[%s3221] sm:$0x1]
    %s3223 = scalar_lea.vmem %s0, 514
    %v3224 = vld [vmem:[%s3223] sm:$0x2]
    %vm3225 = vcmask 1041409
    %v3226 = vsel %vm3225, %v3224, %v3222
    %s3227 = scalar_lea.vmem %s0, 801
    %v3228 = vld [vmem:[%s3227] sm:$0x4]
    %vm3229 = vcmask 1042434
    %v3230 = vsel %vm3229, %v3228, %v3226
    %s3231 = scalar_lea.vmem %s0, 4313
    %s3232 = smov 24
    %v3233 = vld [vmem:[%s3231] ss:$-1074 sm:%s3232]
    %vm3234 = vcmask 1044483
    %v3235 = vsel %vm3234, %v3233, %v3230
    %s3236 = scalar_lea.vmem %s0, 300
    %v3237 = vld [vmem:[%s3236] sm:$0x20]
    %vm3238 = vcmask 1045509
    %v3239 = vsel %vm3238, %v3237, %v3235
    %s3240 = scalar_lea.vmem %s0, 587
    %v3241 = vld [vmem:[%s3240] sm:$0x40]
    %vm3242 = vcmask 1046534
    %v3243 = vsel %vm3242, %v3241, %v3239
    %s3244 = scalar_lea.vmem %s0, 874
    %v3245 = vld [vmem:[%s3244] sm:$0x80]
    %vm3246 = vcmask 1047559
    %v3247 = vsel %vm3246, %v3245, %v3243
    %3248 = vrot.lane.b32.xlu0 %v3247, 42
    %v3249 = vpop.permute.xlu0 %3248
    %vm3250 = vcmask 425296
    %s3251 = scalar_lea.vmem [#allocation0], 128
    %3252 = vst.msk [vmem:[%s3251] sm:$0xf] %vm3250, %v3249
    %s3253 = scalar_lea.vmem [#allocation0], 4
    %3254 = vst.msk [vmem:[%s3253] sm:$0xf0] %vm3250, %v3249
    %s3255 = scalar_lea.vmem %s0, 87
    %v3256 = vld [vmem:[%s3255] sm:$0x1]
    %s3257 = scalar_lea.vmem %s0, 374
    %v3258 = vld [vmem:[%s3257] sm:$0x2]
    %vm3259 = vcmask 1041409
    %v3260 = vsel %vm3259, %v3258, %v3256
    %s3261 = scalar_lea.vmem %s0, 661
    %v3262 = vld [vmem:[%s3261] sm:$0x4]
    %vm3263 = vcmask 1042434
    %v3264 = vsel %vm3263, %v3262, %v3260
    %s3265 = scalar_lea.vmem %s0, 3333
    %s3266 = smov 24
    %v3267 = vld [vmem:[%s3265] ss:$-794 sm:%s3266]
    %vm3268 = vcmask 1044483
    %v3269 = vsel %vm3268, %v3267, %v3264
    %s3270 = scalar_lea.vmem %s0, 440
    %v3271 = vld [vmem:[%s3270] sm:$0x20]
    %vm3272 = vcmask 1045509
    %v3273 = vsel %vm3272, %v3271, %v3269
    %s3274 = scalar_lea.vmem %s0, 727
    %v3275 = vld [vmem:[%s3274] sm:$0x40]
    %vm3276 = vcmask 1046534
    %v3277 = vsel %vm3276, %v3275, %v3273
    %s3278 = scalar_lea.vmem %s0, 1014
    %v3279 = vld [vmem:[%s3278] sm:$0x80]
    %vm3280 = vcmask 1047559
    %v3281 = vsel %vm3280, %v3279, %v3277
    %3282 = vrot.lane.b32.xlu0 %v3281, 42
    %v3283 = vpop.permute.xlu0 %3282
    %vm3284 = vcmask 425296
    %s3285 = scalar_lea.vmem [#allocation0], 48
    %3286 = vst.msk [vmem:[%s3285] sm:$0xf] %vm3284, %v3283
    %s3287 = scalar_lea.vmem [#allocation0], 84
    %3288 = vst.msk [vmem:[%s3287] sm:$0xf0] %vm3284, %v3283
    %s3289 = scalar_lea.vmem %s0, 4
    %v3290 = vld [vmem:[%s3289] sm:$0x1]
    %s3291 = scalar_lea.vmem %s0, 291
    %v3292 = vld [vmem:[%s3291] sm:$0x2]
    %vm3293 = vcmask 1041409
    %v3294 = vsel %vm3293, %v3292, %v3290
    %s3295 = scalar_lea.vmem %s0, 578
    %v3296 = vld [vmem:[%s3295] sm:$0x4]
    %vm3297 = vcmask 1042434
    %v3298 = vsel %vm3297, %v3296, %v3294
    %s3299 = scalar_lea.vmem %s0, 3250
    %s3300 = smov 24
    %v3301 = vld [vmem:[%s3299] ss:$-794 sm:%s3300]
    %vm3302 = vcmask 1044483
    %v3303 = vsel %vm3302, %v3301, %v3298
    %s3304 = scalar_lea.vmem %s0, 357
    %v3305 = vld [vmem:[%s3304] sm:$0x20]
    %vm3306 = vcmask 1045509
    %v3307 = vsel %vm3306, %v3305, %v3303
    %s3308 = scalar_lea.vmem %s0, 644
    %v3309 = vld [vmem:[%s3308] sm:$0x40]
    %vm3310 = vcmask 1046534
    %v3311 = vsel %vm3310, %v3309, %v3307
    %s3312 = scalar_lea.vmem %s0, 931
    %v3313 = vld [vmem:[%s3312] sm:$0x80]
    %vm3314 = vcmask 1047559
    %v3315 = vsel %vm3314, %v3313, %v3311
    %3316 = vrot.lane.b32.xlu0 %v3315, 40
    %v3317 = vpop.permute.xlu0 %3316
    %vm3318 = vcmask 408896
    %3319 = vst.msk [vmem:[#allocation0] sm:$0xf] %vm3318, %v3317
    %s3320 = scalar_lea.vmem [#allocation0], 36
    %3321 = vst.msk [vmem:[%s3320] sm:$0xf0] %vm3318, %v3317
    %s3322 = scalar_lea.vmem %s0, 282
    %v3323 = vld [vmem:[%s3322] sm:$0x1]
    %s3324 = scalar_lea.vmem %s0, 569
    %v3325 = vld [vmem:[%s3324] sm:$0x2]
    %vm3326 = vcmask 1041409
    %v3327 = vsel %vm3326, %v3325, %v3323
    %s3328 = scalar_lea.vmem %s0, 856
    %v3329 = vld [vmem:[%s3328] sm:$0x4]
    %vm3330 = vcmask 1042434
    %v3331 = vsel %vm3330, %v3329, %v3327
    %s3332 = scalar_lea.vmem %s0, 4152
    %s3333 = smov 24
    %v3334 = vld [vmem:[%s3332] ss:$-1002 sm:%s3333]
    %vm3335 = vcmask 1044483
    %v3336 = vsel %vm3335, %v3334, %v3331
    %s3337 = scalar_lea.vmem %s0, 427
    %v3338 = vld [vmem:[%s3337] sm:$0x20]
    %vm3339 = vcmask 1045509
    %v3340 = vsel %vm3339, %v3338, %v3336
    %s3341 = scalar_lea.vmem %s0, 714
    %v3342 = vld [vmem:[%s3341] sm:$0x40]
    %vm3343 = vcmask 1046534
    %v3344 = vsel %vm3343, %v3342, %v3340
    %s3345 = scalar_lea.vmem %s0, 1001
    %v3346 = vld [vmem:[%s3345] sm:$0x80]
    %vm3347 = vcmask 1047559
    %v3348 = vsel %vm3347, %v3346, %v3344
    %3349 = vrot.lane.b32.xlu0 %v3348, 40
    %v3350 = vpop.permute.xlu0 %3349
    %vm3351 = vcmask 408896
    %s3352 = scalar_lea.vmem [#allocation0], 160
    %3353 = vst.msk [vmem:[%s3352] sm:$0xf] %vm3351, %v3350
    %s3354 = scalar_lea.vmem [#allocation0], 76
    %3355 = vst.msk [vmem:[%s3354] sm:$0xf0] %vm3351, %v3350
    %s3356 = scalar_lea.vmem %s0, 212
    %v3357 = vld [vmem:[%s3356] sm:$0x1]
    %s3358 = scalar_lea.vmem %s0, 499
    %v3359 = vld [vmem:[%s3358] sm:$0x2]
    %vm3360 = vcmask 1041409
    %v3361 = vsel %vm3360, %v3359, %v3357
    %s3362 = scalar_lea.vmem %s0, 786
    %v3363 = vld [vmem:[%s3362] sm:$0x4]
    %vm3364 = vcmask 1042434
    %v3365 = vsel %vm3364, %v3363, %v3361
    %s3366 = scalar_lea.vmem %s0, 1073
    %v3367 = vld [vmem:[%s3366] sm:$0x8]
    %vm3368 = vcmask 1043459
    %v3369 = vsel %vm3368, %v3367, %v3365
    %3370 = vrot.lane.b32.xlu0 %v3369, 40
    %v3371 = vpop.permute.xlu0 %3370
    %vm3372 = vcmask 408896
    %s3373 = scalar_lea.vmem [#allocation0], 120
    %3374 = vst.msk [vmem:[%s3373] sm:$0xf] %vm3372, %v3371
    %s3375 = scalar_lea.vmem %s0, 59
    %v3376 = vld [vmem:[%s3375] sm:$0x1]
    %s3377 = scalar_lea.vmem %s0, 346
    %v3378 = vld [vmem:[%s3377] sm:$0x2]
    %vm3379 = vcmask 1041409
    %v3380 = vsel %vm3379, %v3378, %v3376
    %s3381 = scalar_lea.vmem %s0, 633
    %v3382 = vld [vmem:[%s3381] sm:$0x4]
    %vm3383 = vcmask 1042434
    %v3384 = vsel %vm3383, %v3382, %v3380
    %s3385 = scalar_lea.vmem %s0, 3305
    %s3386 = smov 24
    %v3387 = vld [vmem:[%s3385] ss:$-794 sm:%s3386]
    %vm3388 = vcmask 1044483
    %v3389 = vsel %vm3388, %v3387, %v3384
    %s3390 = scalar_lea.vmem %s0, 412
    %v3391 = vld [vmem:[%s3390] sm:$0x20]
    %vm3392 = vcmask 1045509
    %v3393 = vsel %vm3392, %v3391, %v3389
    %s3394 = scalar_lea.vmem %s0, 699
    %v3395 = vld [vmem:[%s3394] sm:$0x40]
    %vm3396 = vcmask 1046534
    %v3397 = vsel %vm3396, %v3395, %v3393
    %s3398 = scalar_lea.vmem %s0, 986
    %v3399 = vld [vmem:[%s3398] sm:$0x80]
    %vm3400 = vcmask 1047559
    %v3401 = vsel %vm3400, %v3399, %v3397
    %3402 = vrot.lane.b32.xlu0 %v3401, 38
    %v3403 = vpop.permute.xlu0 %3402
    %vm3404 = vcmask 392496
    %s3405 = scalar_lea.vmem [#allocation0], 32
    %3406 = vst.msk [vmem:[%s3405] sm:$0xf] %vm3404, %v3403
    %s3407 = scalar_lea.vmem [#allocation0], 68
    %3408 = vst.msk [vmem:[%s3407] sm:$0xf0] %vm3404, %v3403
    %s3409 = scalar_lea.vmem %s0, 199
    %v3410 = vld [vmem:[%s3409] sm:$0x1]
    %s3411 = scalar_lea.vmem %s0, 486
    %v3412 = vld [vmem:[%s3411] sm:$0x2]
    %vm3413 = vcmask 1041409
    %v3414 = vsel %vm3413, %v3412, %v3410
    %s3415 = scalar_lea.vmem %s0, 773
    %v3416 = vld [vmem:[%s3415] sm:$0x4]
    %vm3417 = vcmask 1042434
    %v3418 = vsel %vm3417, %v3416, %v3414
    %s3419 = scalar_lea.vmem %s0, 3445
    %s3420 = smov 24
    %v3421 = vld [vmem:[%s3419] ss:$-794 sm:%s3420]
    %vm3422 = vcmask 1044483
    %v3423 = vsel %vm3422, %v3421, %v3418
    %s3424 = scalar_lea.vmem %s0, 552
    %v3425 = vld [vmem:[%s3424] sm:$0x20]
    %vm3426 = vcmask 1045509
    %v3427 = vsel %vm3426, %v3425, %v3423
    %s3428 = scalar_lea.vmem %s0, 839
    %v3429 = vld [vmem:[%s3428] sm:$0x40]
    %vm3430 = vcmask 1046534
    %v3431 = vsel %vm3430, %v3429, %v3427
    %s3432 = scalar_lea.vmem %s0, 1126
    %v3433 = vld [vmem:[%s3432] sm:$0x80]
    %vm3434 = vcmask 1047559
    %v3435 = vsel %vm3434, %v3433, %v3431
    %3436 = vrot.lane.b32.xlu0 %v3435, 38
    %v3437 = vpop.permute.xlu0 %3436
    %vm3438 = vcmask 392496
    %s3439 = scalar_lea.vmem [#allocation0], 112
    %3440 = vst.msk [vmem:[%s3439] sm:$0xf] %vm3438, %v3437
    %s3441 = scalar_lea.vmem [#allocation0], 148
    %3442 = vst.msk [vmem:[%s3441] sm:$0xf0] %vm3438, %v3437
    %s3443 = scalar_lea.vmem %s0, 114
    %v3444 = vld [vmem:[%s3443] sm:$0x1]
    %s3445 = scalar_lea.vmem %s0, 401
    %v3446 = vld [vmem:[%s3445] sm:$0x2]
    %vm3447 = vcmask 1041409
    %v3448 = vsel %vm3447, %v3446, %v3444
    %s3449 = scalar_lea.vmem %s0, 688
    %v3450 = vld [vmem:[%s3449] sm:$0x4]
    %vm3451 = vcmask 1042434
    %v3452 = vsel %vm3451, %v3450, %v3448
    %s3453 = scalar_lea.vmem %s0, 3360
    %s3454 = smov 24
    %v3455 = vld [vmem:[%s3453] ss:$-794 sm:%s3454]
    %vm3456 = vcmask 1044483
    %v3457 = vsel %vm3456, %v3455, %v3452
    %s3458 = scalar_lea.vmem %s0, 467
    %v3459 = vld [vmem:[%s3458] sm:$0x20]
    %vm3460 = vcmask 1045509
    %v3461 = vsel %vm3460, %v3459, %v3457
    %s3462 = scalar_lea.vmem %s0, 754
    %v3463 = vld [vmem:[%s3462] sm:$0x40]
    %vm3464 = vcmask 1046534
    %v3465 = vsel %vm3464, %v3463, %v3461
    %s3466 = scalar_lea.vmem %s0, 1041
    %v3467 = vld [vmem:[%s3466] sm:$0x80]
    %vm3468 = vcmask 1047559
    %v3469 = vsel %vm3468, %v3467, %v3465
    %3470 = vrot.lane.b32.xlu0 %v3469, 36
    %v3471 = vpop.permute.xlu0 %3470
    %vm3472 = vcmask 376096
    %s3473 = scalar_lea.vmem [#allocation0], 64
    %3474 = vst.msk [vmem:[%s3473] sm:$0xf] %vm3472, %v3471
    %s3475 = scalar_lea.vmem [#allocation0], 100
    %3476 = vst.msk [vmem:[%s3475] sm:$0xf0] %vm3472, %v3471
    %s3477 = scalar_lea.vmem %s0, 254
    %v3478 = vld [vmem:[%s3477] sm:$0x1]
    %s3479 = scalar_lea.vmem %s0, 541
    %v3480 = vld [vmem:[%s3479] sm:$0x2]
    %vm3481 = vcmask 1041409
    %v3482 = vsel %vm3481, %v3480, %v3478
    %s3483 = scalar_lea.vmem %s0, 828
    %v3484 = vld [vmem:[%s3483] sm:$0x4]
    %vm3485 = vcmask 1042434
    %v3486 = vsel %vm3485, %v3484, %v3482
    %s3487 = scalar_lea.vmem %s0, 4340
    %s3488 = smov 24
    %v3489 = vld [vmem:[%s3487] ss:$-1074 sm:%s3488]
    %vm3490 = vcmask 1044483
    %v3491 = vsel %vm3490, %v3489, %v3486
    %s3492 = scalar_lea.vmem %s0, 327
    %v3493 = vld [vmem:[%s3492] sm:$0x20]
    %vm3494 = vcmask 1045509
    %v3495 = vsel %vm3494, %v3493, %v3491
    %s3496 = scalar_lea.vmem %s0, 614
    %v3497 = vld [vmem:[%s3496] sm:$0x40]
    %vm3498 = vcmask 1046534
    %v3499 = vsel %vm3498, %v3497, %v3495
    %s3500 = scalar_lea.vmem %s0, 901
    %v3501 = vld [vmem:[%s3500] sm:$0x80]
    %vm3502 = vcmask 1047559
    %v3503 = vsel %vm3502, %v3501, %v3499
    %3504 = vrot.lane.b32.xlu0 %v3503, 36
    %v3505 = vpop.permute.xlu0 %3504
    %vm3506 = vcmask 376096
    %s3507 = scalar_lea.vmem [#allocation0], 144
    %3508 = vst.msk [vmem:[%s3507] sm:$0xf] %vm3506, %v3505
    %s3509 = scalar_lea.vmem [#allocation0], 20
    %3510 = vst.msk [vmem:[%s3509] sm:$0xf0] %vm3506, %v3505
    %s3511 = scalar_lea.vmem %s0, 171
    %v3512 = vld [vmem:[%s3511] sm:$0x1]
    %s3513 = scalar_lea.vmem %s0, 458
    %v3514 = vld [vmem:[%s3513] sm:$0x2]
    %vm3515 = vcmask 1041409
    %v3516 = vsel %vm3515, %v3514, %v3512
    %s3517 = scalar_lea.vmem %s0, 745
    %v3518 = vld [vmem:[%s3517] sm:$0x4]
    %vm3519 = vcmask 1042434
    %v3520 = vsel %vm3519, %v3518, %v3516
    %s3521 = scalar_lea.vmem %s0, 3417
    %s3522 = smov 24
    %v3523 = vld [vmem:[%s3521] ss:$-794 sm:%s3522]
    %vm3524 = vcmask 1044483
    %v3525 = vsel %vm3524, %v3523, %v3520
    %s3526 = scalar_lea.vmem %s0, 524
    %v3527 = vld [vmem:[%s3526] sm:$0x20]
    %vm3528 = vcmask 1045509
    %v3529 = vsel %vm3528, %v3527, %v3525
    %s3530 = scalar_lea.vmem %s0, 811
    %v3531 = vld [vmem:[%s3530] sm:$0x40]
    %vm3532 = vcmask 1046534
    %v3533 = vsel %vm3532, %v3531, %v3529
    %s3534 = scalar_lea.vmem %s0, 1098
    %v3535 = vld [vmem:[%s3534] sm:$0x80]
    %vm3536 = vcmask 1047559
    %v3537 = vsel %vm3536, %v3535, %v3533
    %3538 = vrot.lane.b32.xlu0 %v3537, 34
    %v3539 = vpop.permute.xlu0 %3538
    %vm3540 = vcmask 359696
    %s3541 = scalar_lea.vmem [#allocation0], 96
    %3542 = vst.msk [vmem:[%s3541] sm:$0xf] %vm3540, %v3539
    %s3543 = scalar_lea.vmem [#allocation0], 132
    %3544 = vst.msk [vmem:[%s3543] sm:$0xf0] %vm3540, %v3539
    %s3545 = scalar_lea.vmem %s0, 31
    %v3546 = vld [vmem:[%s3545] sm:$0x1]
    %s3547 = scalar_lea.vmem %s0, 318
    %v3548 = vld [vmem:[%s3547] sm:$0x2]
    %vm3549 = vcmask 1041409
    %v3550 = vsel %vm3549, %v3548, %v3546
    %s3551 = scalar_lea.vmem %s0, 605
    %v3552 = vld [vmem:[%s3551] sm:$0x4]
    %vm3553 = vcmask 1042434
    %v3554 = vsel %vm3553, %v3552, %v3550
    %s3555 = scalar_lea.vmem %s0, 3277
    %s3556 = smov 24
    %v3557 = vld [vmem:[%s3555] ss:$-794 sm:%s3556]
    %vm3558 = vcmask 1044483
    %v3559 = vsel %vm3558, %v3557, %v3554
    %s3560 = scalar_lea.vmem %s0, 384
    %v3561 = vld [vmem:[%s3560] sm:$0x20]
    %vm3562 = vcmask 1045509
    %v3563 = vsel %vm3562, %v3561, %v3559
    %s3564 = scalar_lea.vmem %s0, 671
    %v3565 = vld [vmem:[%s3564] sm:$0x40]
    %vm3566 = vcmask 1046534
    %v3567 = vsel %vm3566, %v3565, %v3563
    %s3568 = scalar_lea.vmem %s0, 958
    %v3569 = vld [vmem:[%s3568] sm:$0x80]
    %vm3570 = vcmask 1047559
    %v3571 = vsel %vm3570, %v3569, %v3567
    %3572 = vrot.lane.b32.xlu0 %v3571, 34
    %v3573 = vpop.permute.xlu0 %3572
    %vm3574 = vcmask 359696
    %s3575 = scalar_lea.vmem [#allocation0], 16
    %3576 = vst.msk [vmem:[%s3575] sm:$0xf] %vm3574, %v3573
    %s3577 = scalar_lea.vmem [#allocation0], 52
    %3578 = vst.msk [vmem:[%s3577] sm:$0xf0] %vm3574, %v3573
    %s3579 = scalar_lea.vmem %s0, 226
    %v3580 = vld [vmem:[%s3579] sm:$0x1]
    %s3581 = scalar_lea.vmem %s0, 513
    %v3582 = vld [vmem:[%s3581] sm:$0x2]
    %vm3583 = vcmask 1041409
    %v3584 = vsel %vm3583, %v3582, %v3580
    %s3585 = scalar_lea.vmem %s0, 800
    %v3586 = vld [vmem:[%s3585] sm:$0x4]
    %vm3587 = vcmask 1042434
    %v3588 = vsel %vm3587, %v3586, %v3584
    %s3589 = scalar_lea.vmem %s0, 4312
    %s3590 = smov 24
    %v3591 = vld [vmem:[%s3589] ss:$-1074 sm:%s3590]
    %vm3592 = vcmask 1044483
    %v3593 = vsel %vm3592, %v3591, %v3588
    %s3594 = scalar_lea.vmem %s0, 299
    %v3595 = vld [vmem:[%s3594] sm:$0x20]
    %vm3596 = vcmask 1045509
    %v3597 = vsel %vm3596, %v3595, %v3593
    %s3598 = scalar_lea.vmem %s0, 586
    %v3599 = vld [vmem:[%s3598] sm:$0x40]
    %vm3600 = vcmask 1046534
    %v3601 = vsel %vm3600, %v3599, %v3597
    %s3602 = scalar_lea.vmem %s0, 873
    %v3603 = vld [vmem:[%s3602] sm:$0x80]
    %vm3604 = vcmask 1047559
    %v3605 = vsel %vm3604, %v3603, %v3601
    %3606 = vrot.lane.b32.xlu0 %v3605, 32
    %v3607 = vpop.permute.xlu0 %3606
    %vm3608 = vcmask 343296
    %s3609 = scalar_lea.vmem [#allocation0], 128
    %3610 = vst.msk [vmem:[%s3609] sm:$0xf] %vm3608, %v3607
    %s3611 = scalar_lea.vmem [#allocation0], 4
    %3612 = vst.msk [vmem:[%s3611] sm:$0xf0] %vm3608, %v3607
    %s3613 = scalar_lea.vmem %s0, 86
    %v3614 = vld [vmem:[%s3613] sm:$0x1]
    %s3615 = scalar_lea.vmem %s0, 373
    %v3616 = vld [vmem:[%s3615] sm:$0x2]
    %vm3617 = vcmask 1041409
    %v3618 = vsel %vm3617, %v3616, %v3614
    %s3619 = scalar_lea.vmem %s0, 660
    %v3620 = vld [vmem:[%s3619] sm:$0x4]
    %vm3621 = vcmask 1042434
    %v3622 = vsel %vm3621, %v3620, %v3618
    %s3623 = scalar_lea.vmem %s0, 3332
    %s3624 = smov 24
    %v3625 = vld [vmem:[%s3623] ss:$-794 sm:%s3624]
    %vm3626 = vcmask 1044483
    %v3627 = vsel %vm3626, %v3625, %v3622
    %s3628 = scalar_lea.vmem %s0, 439
    %v3629 = vld [vmem:[%s3628] sm:$0x20]
    %vm3630 = vcmask 1045509
    %v3631 = vsel %vm3630, %v3629, %v3627
    %s3632 = scalar_lea.vmem %s0, 726
    %v3633 = vld [vmem:[%s3632] sm:$0x40]
    %vm3634 = vcmask 1046534
    %v3635 = vsel %vm3634, %v3633, %v3631
    %s3636 = scalar_lea.vmem %s0, 1013
    %v3637 = vld [vmem:[%s3636] sm:$0x80]
    %vm3638 = vcmask 1047559
    %v3639 = vsel %vm3638, %v3637, %v3635
    %3640 = vrot.lane.b32.xlu0 %v3639, 32
    %v3641 = vpop.permute.xlu0 %3640
    %vm3642 = vcmask 343296
    %s3643 = scalar_lea.vmem [#allocation0], 48
    %3644 = vst.msk [vmem:[%s3643] sm:$0xf] %vm3642, %v3641
    %s3645 = scalar_lea.vmem [#allocation0], 84
    %3646 = vst.msk [vmem:[%s3645] sm:$0xf0] %vm3642, %v3641
    %s3647 = scalar_lea.vmem %s0, 3
    %v3648 = vld [vmem:[%s3647] sm:$0x1]
    %s3649 = scalar_lea.vmem %s0, 290
    %v3650 = vld [vmem:[%s3649] sm:$0x2]
    %vm3651 = vcmask 1041409
    %v3652 = vsel %vm3651, %v3650, %v3648
    %s3653 = scalar_lea.vmem %s0, 577
    %v3654 = vld [vmem:[%s3653] sm:$0x4]
    %vm3655 = vcmask 1042434
    %v3656 = vsel %vm3655, %v3654, %v3652
    %s3657 = scalar_lea.vmem %s0, 3249
    %s3658 = smov 24
    %v3659 = vld [vmem:[%s3657] ss:$-794 sm:%s3658]
    %vm3660 = vcmask 1044483
    %v3661 = vsel %vm3660, %v3659, %v3656
    %s3662 = scalar_lea.vmem %s0, 356
    %v3663 = vld [vmem:[%s3662] sm:$0x20]
    %vm3664 = vcmask 1045509
    %v3665 = vsel %vm3664, %v3663, %v3661
    %s3666 = scalar_lea.vmem %s0, 643
    %v3667 = vld [vmem:[%s3666] sm:$0x40]
    %vm3668 = vcmask 1046534
    %v3669 = vsel %vm3668, %v3667, %v3665
    %s3670 = scalar_lea.vmem %s0, 930
    %v3671 = vld [vmem:[%s3670] sm:$0x80]
    %vm3672 = vcmask 1047559
    %v3673 = vsel %vm3672, %v3671, %v3669
    %3674 = vrot.lane.b32.xlu0 %v3673, 30
    %v3675 = vpop.permute.xlu0 %3674
    %vm3676 = vcmask 326896
    %3677 = vst.msk [vmem:[#allocation0] sm:$0xf] %vm3676, %v3675
    %s3678 = scalar_lea.vmem [#allocation0], 36
    %3679 = vst.msk [vmem:[%s3678] sm:$0xf0] %vm3676, %v3675
    %s3680 = scalar_lea.vmem %s0, 281
    %v3681 = vld [vmem:[%s3680] sm:$0x1]
    %s3682 = scalar_lea.vmem %s0, 568
    %v3683 = vld [vmem:[%s3682] sm:$0x2]
    %vm3684 = vcmask 1041409
    %v3685 = vsel %vm3684, %v3683, %v3681
    %s3686 = scalar_lea.vmem %s0, 855
    %v3687 = vld [vmem:[%s3686] sm:$0x4]
    %vm3688 = vcmask 1042434
    %v3689 = vsel %vm3688, %v3687, %v3685
    %s3690 = scalar_lea.vmem %s0, 4157
    %s3691 = smov 24
    %v3692 = vld [vmem:[%s3690] ss:$-1004 sm:%s3691]
    %vm3693 = vcmask 1044483
    %v3694 = vsel %vm3693, %v3692, %v3689
    %s3695 = scalar_lea.vmem %s0, 424
    %v3696 = vld [vmem:[%s3695] sm:$0x20]
    %vm3697 = vcmask 1045509
    %v3698 = vsel %vm3697, %v3696, %v3694
    %s3699 = scalar_lea.vmem %s0, 711
    %v3700 = vld [vmem:[%s3699] sm:$0x40]
    %vm3701 = vcmask 1046534
    %v3702 = vsel %vm3701, %v3700, %v3698
    %s3703 = scalar_lea.vmem %s0, 998
    %v3704 = vld [vmem:[%s3703] sm:$0x80]
    %vm3705 = vcmask 1047559
    %v3706 = vsel %vm3705, %v3704, %v3702
    %3707 = vrot.lane.b32.xlu0 %v3706, 30
    %v3708 = vpop.permute.xlu0 %3707
    %vm3709 = vcmask 326896
    %s3710 = scalar_lea.vmem [#allocation0], 160
    %3711 = vst.msk [vmem:[%s3710] sm:$0xf] %vm3709, %v3708
    %s3712 = scalar_lea.vmem [#allocation0], 76
    %3713 = vst.msk [vmem:[%s3712] sm:$0xf0] %vm3709, %v3708
    %s3714 = scalar_lea.vmem %s0, 211
    %v3715 = vld [vmem:[%s3714] sm:$0x1]
    %s3716 = scalar_lea.vmem %s0, 498
    %v3717 = vld [vmem:[%s3716] sm:$0x2]
    %vm3718 = vcmask 1041409
    %v3719 = vsel %vm3718, %v3717, %v3715
    %s3720 = scalar_lea.vmem %s0, 785
    %v3721 = vld [vmem:[%s3720] sm:$0x4]
    %vm3722 = vcmask 1042434
    %v3723 = vsel %vm3722, %v3721, %v3719
    %s3724 = scalar_lea.vmem %s0, 1072
    %v3725 = vld [vmem:[%s3724] sm:$0x8]
    %vm3726 = vcmask 1043459
    %v3727 = vsel %vm3726, %v3725, %v3723
    %3728 = vrot.lane.b32.xlu0 %v3727, 30
    %v3729 = vpop.permute.xlu0 %3728
    %vm3730 = vcmask 326896
    %s3731 = scalar_lea.vmem [#allocation0], 120
    %3732 = vst.msk [vmem:[%s3731] sm:$0xf] %vm3730, %v3729
    %s3733 = scalar_lea.vmem %s0, 58
    %v3734 = vld [vmem:[%s3733] sm:$0x1]
    %s3735 = scalar_lea.vmem %s0, 345
    %v3736 = vld [vmem:[%s3735] sm:$0x2]
    %vm3737 = vcmask 1041409
    %v3738 = vsel %vm3737, %v3736, %v3734
    %s3739 = scalar_lea.vmem %s0, 632
    %v3740 = vld [vmem:[%s3739] sm:$0x4]
    %vm3741 = vcmask 1042434
    %v3742 = vsel %vm3741, %v3740, %v3738
    %s3743 = scalar_lea.vmem %s0, 3304
    %s3744 = smov 24
    %v3745 = vld [vmem:[%s3743] ss:$-794 sm:%s3744]
    %vm3746 = vcmask 1044483
    %v3747 = vsel %vm3746, %v3745, %v3742
    %s3748 = scalar_lea.vmem %s0, 411
    %v3749 = vld [vmem:[%s3748] sm:$0x20]
    %vm3750 = vcmask 1045509
    %v3751 = vsel %vm3750, %v3749, %v3747
    %s3752 = scalar_lea.vmem %s0, 698
    %v3753 = vld [vmem:[%s3752] sm:$0x40]
    %vm3754 = vcmask 1046534
    %v3755 = vsel %vm3754, %v3753, %v3751
    %s3756 = scalar_lea.vmem %s0, 985
    %v3757 = vld [vmem:[%s3756] sm:$0x80]
    %vm3758 = vcmask 1047559
    %v3759 = vsel %vm3758, %v3757, %v3755
    %3760 = vrot.lane.b32.xlu0 %v3759, 28
    %v3761 = vpop.permute.xlu0 %3760
    %vm3762 = vcmask 310496
    %s3763 = scalar_lea.vmem [#allocation0], 32
    %3764 = vst.msk [vmem:[%s3763] sm:$0xf] %vm3762, %v3761
    %s3765 = scalar_lea.vmem [#allocation0], 68
    %3766 = vst.msk [vmem:[%s3765] sm:$0xf0] %vm3762, %v3761
    %s3767 = scalar_lea.vmem %s0, 198
    %v3768 = vld [vmem:[%s3767] sm:$0x1]
    %s3769 = scalar_lea.vmem %s0, 485
    %v3770 = vld [vmem:[%s3769] sm:$0x2]
    %vm3771 = vcmask 1041409
    %v3772 = vsel %vm3771, %v3770, %v3768
    %s3773 = scalar_lea.vmem %s0, 772
    %v3774 = vld [vmem:[%s3773] sm:$0x4]
    %vm3775 = vcmask 1042434
    %v3776 = vsel %vm3775, %v3774, %v3772
    %s3777 = scalar_lea.vmem %s0, 3444
    %s3778 = smov 24
    %v3779 = vld [vmem:[%s3777] ss:$-794 sm:%s3778]
    %vm3780 = vcmask 1044483
    %v3781 = vsel %vm3780, %v3779, %v3776
    %s3782 = scalar_lea.vmem %s0, 551
    %v3783 = vld [vmem:[%s3782] sm:$0x20]
    %vm3784 = vcmask 1045509
    %v3785 = vsel %vm3784, %v3783, %v3781
    %s3786 = scalar_lea.vmem %s0, 838
    %v3787 = vld [vmem:[%s3786] sm:$0x40]
    %vm3788 = vcmask 1046534
    %v3789 = vsel %vm3788, %v3787, %v3785
    %s3790 = scalar_lea.vmem %s0, 1125
    %v3791 = vld [vmem:[%s3790] sm:$0x80]
    %vm3792 = vcmask 1047559
    %v3793 = vsel %vm3792, %v3791, %v3789
    %3794 = vrot.lane.b32.xlu0 %v3793, 28
    %v3795 = vpop.permute.xlu0 %3794
    %vm3796 = vcmask 310496
    %s3797 = scalar_lea.vmem [#allocation0], 112
    %3798 = vst.msk [vmem:[%s3797] sm:$0xf] %vm3796, %v3795
    %s3799 = scalar_lea.vmem [#allocation0], 148
    %3800 = vst.msk [vmem:[%s3799] sm:$0xf0] %vm3796, %v3795
    %s3801 = scalar_lea.vmem %s0, 113
    %v3802 = vld [vmem:[%s3801] sm:$0x1]
    %s3803 = scalar_lea.vmem %s0, 400
    %v3804 = vld [vmem:[%s3803] sm:$0x2]
    %vm3805 = vcmask 1041409
    %v3806 = vsel %vm3805, %v3804, %v3802
    %s3807 = scalar_lea.vmem %s0, 687
    %v3808 = vld [vmem:[%s3807] sm:$0x4]
    %vm3809 = vcmask 1042434
    %v3810 = vsel %vm3809, %v3808, %v3806
    %s3811 = scalar_lea.vmem %s0, 3359
    %s3812 = smov 24
    %v3813 = vld [vmem:[%s3811] ss:$-794 sm:%s3812]
    %vm3814 = vcmask 1044483
    %v3815 = vsel %vm3814, %v3813, %v3810
    %s3816 = scalar_lea.vmem %s0, 466
    %v3817 = vld [vmem:[%s3816] sm:$0x20]
    %vm3818 = vcmask 1045509
    %v3819 = vsel %vm3818, %v3817, %v3815
    %s3820 = scalar_lea.vmem %s0, 753
    %v3821 = vld [vmem:[%s3820] sm:$0x40]
    %vm3822 = vcmask 1046534
    %v3823 = vsel %vm3822, %v3821, %v3819
    %s3824 = scalar_lea.vmem %s0, 1040
    %v3825 = vld [vmem:[%s3824] sm:$0x80]
    %vm3826 = vcmask 1047559
    %v3827 = vsel %vm3826, %v3825, %v3823
    %3828 = vrot.lane.b32.xlu0 %v3827, 26
    %v3829 = vpop.permute.xlu0 %3828
    %vm3830 = vcmask 294096
    %s3831 = scalar_lea.vmem [#allocation0], 64
    %3832 = vst.msk [vmem:[%s3831] sm:$0xf] %vm3830, %v3829
    %s3833 = scalar_lea.vmem [#allocation0], 100
    %3834 = vst.msk [vmem:[%s3833] sm:$0xf0] %vm3830, %v3829
    %s3835 = scalar_lea.vmem %s0, 253
    %v3836 = vld [vmem:[%s3835] sm:$0x1]
    %s3837 = scalar_lea.vmem %s0, 540
    %v3838 = vld [vmem:[%s3837] sm:$0x2]
    %vm3839 = vcmask 1041409
    %v3840 = vsel %vm3839, %v3838, %v3836
    %s3841 = scalar_lea.vmem %s0, 827
    %v3842 = vld [vmem:[%s3841] sm:$0x4]
    %vm3843 = vcmask 1042434
    %v3844 = vsel %vm3843, %v3842, %v3840
    %s3845 = scalar_lea.vmem %s0, 4339
    %s3846 = smov 24
    %v3847 = vld [vmem:[%s3845] ss:$-1074 sm:%s3846]
    %vm3848 = vcmask 1044483
    %v3849 = vsel %vm3848, %v3847, %v3844
    %s3850 = scalar_lea.vmem %s0, 326
    %v3851 = vld [vmem:[%s3850] sm:$0x20]
    %vm3852 = vcmask 1045509
    %v3853 = vsel %vm3852, %v3851, %v3849
    %s3854 = scalar_lea.vmem %s0, 613
    %v3855 = vld [vmem:[%s3854] sm:$0x40]
    %vm3856 = vcmask 1046534
    %v3857 = vsel %vm3856, %v3855, %v3853
    %s3858 = scalar_lea.vmem %s0, 900
    %v3859 = vld [vmem:[%s3858] sm:$0x80]
    %vm3860 = vcmask 1047559
    %v3861 = vsel %vm3860, %v3859, %v3857
    %3862 = vrot.lane.b32.xlu0 %v3861, 26
    %v3863 = vpop.permute.xlu0 %3862
    %vm3864 = vcmask 294096
    %s3865 = scalar_lea.vmem [#allocation0], 144
    %3866 = vst.msk [vmem:[%s3865] sm:$0xf] %vm3864, %v3863
    %s3867 = scalar_lea.vmem [#allocation0], 20
    %3868 = vst.msk [vmem:[%s3867] sm:$0xf0] %vm3864, %v3863
    %s3869 = scalar_lea.vmem %s0, 170
    %v3870 = vld [vmem:[%s3869] sm:$0x1]
    %s3871 = scalar_lea.vmem %s0, 457
    %v3872 = vld [vmem:[%s3871] sm:$0x2]
    %vm3873 = vcmask 1041409
    %v3874 = vsel %vm3873, %v3872, %v3870
    %s3875 = scalar_lea.vmem %s0, 744
    %v3876 = vld [vmem:[%s3875] sm:$0x4]
    %vm3877 = vcmask 1042434
    %v3878 = vsel %vm3877, %v3876, %v3874
    %s3879 = scalar_lea.vmem %s0, 3416
    %s3880 = smov 24
    %v3881 = vld [vmem:[%s3879] ss:$-794 sm:%s3880]
    %vm3882 = vcmask 1044483
    %v3883 = vsel %vm3882, %v3881, %v3878
    %s3884 = scalar_lea.vmem %s0, 523
    %v3885 = vld [vmem:[%s3884] sm:$0x20]
    %vm3886 = vcmask 1045509
    %v3887 = vsel %vm3886, %v3885, %v3883
    %s3888 = scalar_lea.vmem %s0, 810
    %v3889 = vld [vmem:[%s3888] sm:$0x40]
    %vm3890 = vcmask 1046534
    %v3891 = vsel %vm3890, %v3889, %v3887
    %s3892 = scalar_lea.vmem %s0, 1097
    %v3893 = vld [vmem:[%s3892] sm:$0x80]
    %vm3894 = vcmask 1047559
    %v3895 = vsel %vm3894, %v3893, %v3891
    %3896 = vrot.lane.b32.xlu0 %v3895, 24
    %v3897 = vpop.permute.xlu0 %3896
    %vm3898 = vcmask 277696
    %s3899 = scalar_lea.vmem [#allocation0], 96
    %3900 = vst.msk [vmem:[%s3899] sm:$0xf] %vm3898, %v3897
    %s3901 = scalar_lea.vmem [#allocation0], 132
    %3902 = vst.msk [vmem:[%s3901] sm:$0xf0] %vm3898, %v3897
    %s3903 = scalar_lea.vmem %s0, 30
    %v3904 = vld [vmem:[%s3903] sm:$0x1]
    %s3905 = scalar_lea.vmem %s0, 317
    %v3906 = vld [vmem:[%s3905] sm:$0x2]
    %vm3907 = vcmask 1041409
    %v3908 = vsel %vm3907, %v3906, %v3904
    %s3909 = scalar_lea.vmem %s0, 604
    %v3910 = vld [vmem:[%s3909] sm:$0x4]
    %vm3911 = vcmask 1042434
    %v3912 = vsel %vm3911, %v3910, %v3908
    %s3913 = scalar_lea.vmem %s0, 3276
    %s3914 = smov 24
    %v3915 = vld [vmem:[%s3913] ss:$-794 sm:%s3914]
    %vm3916 = vcmask 1044483
    %v3917 = vsel %vm3916, %v3915, %v3912
    %s3918 = scalar_lea.vmem %s0, 383
    %v3919 = vld [vmem:[%s3918] sm:$0x20]
    %vm3920 = vcmask 1045509
    %v3921 = vsel %vm3920, %v3919, %v3917
    %s3922 = scalar_lea.vmem %s0, 670
    %v3923 = vld [vmem:[%s3922] sm:$0x40]
    %vm3924 = vcmask 1046534
    %v3925 = vsel %vm3924, %v3923, %v3921
    %s3926 = scalar_lea.vmem %s0, 957
    %v3927 = vld [vmem:[%s3926] sm:$0x80]
    %vm3928 = vcmask 1047559
    %v3929 = vsel %vm3928, %v3927, %v3925
    %3930 = vrot.lane.b32.xlu0 %v3929, 24
    %v3931 = vpop.permute.xlu0 %3930
    %vm3932 = vcmask 277696
    %s3933 = scalar_lea.vmem [#allocation0], 16
    %3934 = vst.msk [vmem:[%s3933] sm:$0xf] %vm3932, %v3931
    %s3935 = scalar_lea.vmem [#allocation0], 52
    %3936 = vst.msk [vmem:[%s3935] sm:$0xf0] %vm3932, %v3931
    %s3937 = scalar_lea.vmem %s0, 225
    %v3938 = vld [vmem:[%s3937] sm:$0x1]
    %s3939 = scalar_lea.vmem %s0, 512
    %v3940 = vld [vmem:[%s3939] sm:$0x2]
    %vm3941 = vcmask 1041409
    %v3942 = vsel %vm3941, %v3940, %v3938
    %s3943 = scalar_lea.vmem %s0, 799
    %v3944 = vld [vmem:[%s3943] sm:$0x4]
    %vm3945 = vcmask 1042434
    %v3946 = vsel %vm3945, %v3944, %v3942
    %s3947 = scalar_lea.vmem %s0, 4311
    %s3948 = smov 24
    %v3949 = vld [vmem:[%s3947] ss:$-1074 sm:%s3948]
    %vm3950 = vcmask 1044483
    %v3951 = vsel %vm3950, %v3949, %v3946
    %s3952 = scalar_lea.vmem %s0, 298
    %v3953 = vld [vmem:[%s3952] sm:$0x20]
    %vm3954 = vcmask 1045509
    %v3955 = vsel %vm3954, %v3953, %v3951
    %s3956 = scalar_lea.vmem %s0, 585
    %v3957 = vld [vmem:[%s3956] sm:$0x40]
    %vm3958 = vcmask 1046534
    %v3959 = vsel %vm3958, %v3957, %v3955
    %s3960 = scalar_lea.vmem %s0, 872
    %v3961 = vld [vmem:[%s3960] sm:$0x80]
    %vm3962 = vcmask 1047559
    %v3963 = vsel %vm3962, %v3961, %v3959
    %3964 = vrot.lane.b32.xlu0 %v3963, 22
    %v3965 = vpop.permute.xlu0 %3964
    %vm3966 = vcmask 261296
    %s3967 = scalar_lea.vmem [#allocation0], 128
    %3968 = vst.msk [vmem:[%s3967] sm:$0xf] %vm3966, %v3965
    %s3969 = scalar_lea.vmem [#allocation0], 4
    %3970 = vst.msk [vmem:[%s3969] sm:$0xf0] %vm3966, %v3965
    %s3971 = scalar_lea.vmem %s0, 85
    %v3972 = vld [vmem:[%s3971] sm:$0x1]
    %s3973 = scalar_lea.vmem %s0, 372
    %v3974 = vld [vmem:[%s3973] sm:$0x2]
    %vm3975 = vcmask 1041409
    %v3976 = vsel %vm3975, %v3974, %v3972
    %s3977 = scalar_lea.vmem %s0, 659
    %v3978 = vld [vmem:[%s3977] sm:$0x4]
    %vm3979 = vcmask 1042434
    %v3980 = vsel %vm3979, %v3978, %v3976
    %s3981 = scalar_lea.vmem %s0, 3331
    %s3982 = smov 24
    %v3983 = vld [vmem:[%s3981] ss:$-794 sm:%s3982]
    %vm3984 = vcmask 1044483
    %v3985 = vsel %vm3984, %v3983, %v3980
    %s3986 = scalar_lea.vmem %s0, 438
    %v3987 = vld [vmem:[%s3986] sm:$0x20]
    %vm3988 = vcmask 1045509
    %v3989 = vsel %vm3988, %v3987, %v3985
    %s3990 = scalar_lea.vmem %s0, 725
    %v3991 = vld [vmem:[%s3990] sm:$0x40]
    %vm3992 = vcmask 1046534
    %v3993 = vsel %vm3992, %v3991, %v3989
    %s3994 = scalar_lea.vmem %s0, 1012
    %v3995 = vld [vmem:[%s3994] sm:$0x80]
    %vm3996 = vcmask 1047559
    %v3997 = vsel %vm3996, %v3995, %v3993
    %3998 = vrot.lane.b32.xlu0 %v3997, 22
    %v3999 = vpop.permute.xlu0 %3998
    %vm4000 = vcmask 261296
    %s4001 = scalar_lea.vmem [#allocation0], 48
    %4002 = vst.msk [vmem:[%s4001] sm:$0xf] %vm4000, %v3999
    %s4003 = scalar_lea.vmem [#allocation0], 84
    %4004 = vst.msk [vmem:[%s4003] sm:$0xf0] %vm4000, %v3999
    %s4005 = scalar_lea.vmem %s0, 2
    %v4006 = vld [vmem:[%s4005] sm:$0x1]
    %s4007 = scalar_lea.vmem %s0, 289
    %v4008 = vld [vmem:[%s4007] sm:$0x2]
    %vm4009 = vcmask 1041409
    %v4010 = vsel %vm4009, %v4008, %v4006
    %s4011 = scalar_lea.vmem %s0, 576
    %v4012 = vld [vmem:[%s4011] sm:$0x4]
    %vm4013 = vcmask 1042434
    %v4014 = vsel %vm4013, %v4012, %v4010
    %s4015 = scalar_lea.vmem %s0, 3248
    %s4016 = smov 24
    %v4017 = vld [vmem:[%s4015] ss:$-794 sm:%s4016]
    %vm4018 = vcmask 1044483
    %v4019 = vsel %vm4018, %v4017, %v4014
    %s4020 = scalar_lea.vmem %s0, 355
    %v4021 = vld [vmem:[%s4020] sm:$0x20]
    %vm4022 = vcmask 1045509
    %v4023 = vsel %vm4022, %v4021, %v4019
    %s4024 = scalar_lea.vmem %s0, 642
    %v4025 = vld [vmem:[%s4024] sm:$0x40]
    %vm4026 = vcmask 1046534
    %v4027 = vsel %vm4026, %v4025, %v4023
    %s4028 = scalar_lea.vmem %s0, 929
    %v4029 = vld [vmem:[%s4028] sm:$0x80]
    %vm4030 = vcmask 1047559
    %v4031 = vsel %vm4030, %v4029, %v4027
    %4032 = vrot.lane.b32.xlu0 %v4031, 20
    %v4033 = vpop.permute.xlu0 %4032
    %vm4034 = vcmask 244896
    %4035 = vst.msk [vmem:[#allocation0] sm:$0xf] %vm4034, %v4033
    %s4036 = scalar_lea.vmem [#allocation0], 36
    %4037 = vst.msk [vmem:[%s4036] sm:$0xf0] %vm4034, %v4033
    %s4038 = scalar_lea.vmem %s0, 280
    %v4039 = vld [vmem:[%s4038] sm:$0x1]
    %s4040 = scalar_lea.vmem %s0, 567
    %v4041 = vld [vmem:[%s4040] sm:$0x2]
    %vm4042 = vcmask 1041409
    %v4043 = vsel %vm4042, %v4041, %v4039
    %s4044 = scalar_lea.vmem %s0, 854
    %v4045 = vld [vmem:[%s4044] sm:$0x4]
    %vm4046 = vcmask 1042434
    %v4047 = vsel %vm4046, %v4045, %v4043
    %s4048 = scalar_lea.vmem %s0, 4156
    %s4049 = smov 24
    %v4050 = vld [vmem:[%s4048] ss:$-1004 sm:%s4049]
    %vm4051 = vcmask 1044483
    %v4052 = vsel %vm4051, %v4050, %v4047
    %s4053 = scalar_lea.vmem %s0, 423
    %v4054 = vld [vmem:[%s4053] sm:$0x20]
    %vm4055 = vcmask 1045509
    %v4056 = vsel %vm4055, %v4054, %v4052
    %s4057 = scalar_lea.vmem %s0, 710
    %v4058 = vld [vmem:[%s4057] sm:$0x40]
    %vm4059 = vcmask 1046534
    %v4060 = vsel %vm4059, %v4058, %v4056
    %s4061 = scalar_lea.vmem %s0, 997
    %v4062 = vld [vmem:[%s4061] sm:$0x80]
    %vm4063 = vcmask 1047559
    %v4064 = vsel %vm4063, %v4062, %v4060
    %4065 = vrot.lane.b32.xlu0 %v4064, 20
    %v4066 = vpop.permute.xlu0 %4065
    %vm4067 = vcmask 244896
    %s4068 = scalar_lea.vmem [#allocation0], 160
    %4069 = vst.msk [vmem:[%s4068] sm:$0xf] %vm4067, %v4066
    %s4070 = scalar_lea.vmem [#allocation0], 76
    %4071 = vst.msk [vmem:[%s4070] sm:$0xf0] %vm4067, %v4066
    %s4072 = scalar_lea.vmem %s0, 210
    %v4073 = vld [vmem:[%s4072] sm:$0x1]
    %s4074 = scalar_lea.vmem %s0, 497
    %v4075 = vld [vmem:[%s4074] sm:$0x2]
    %vm4076 = vcmask 1041409
    %v4077 = vsel %vm4076, %v4075, %v4073
    %s4078 = scalar_lea.vmem %s0, 784
    %v4079 = vld [vmem:[%s4078] sm:$0x4]
    %vm4080 = vcmask 1042434
    %v4081 = vsel %vm4080, %v4079, %v4077
    %s4082 = scalar_lea.vmem %s0, 1071
    %v4083 = vld [vmem:[%s4082] sm:$0x8]
    %vm4084 = vcmask 1043459
    %v4085 = vsel %vm4084, %v4083, %v4081
    %4086 = vrot.lane.b32.xlu0 %v4085, 20
    %v4087 = vpop.permute.xlu0 %4086
    %vm4088 = vcmask 244896
    %s4089 = scalar_lea.vmem [#allocation0], 120
    %4090 = vst.msk [vmem:[%s4089] sm:$0xf] %vm4088, %v4087
    %s4091 = scalar_lea.vmem %s0, 57
    %v4092 = vld [vmem:[%s4091] sm:$0x1]
    %s4093 = scalar_lea.vmem %s0, 344
    %v4094 = vld [vmem:[%s4093] sm:$0x2]
    %vm4095 = vcmask 1041409
    %v4096 = vsel %vm4095, %v4094, %v4092
    %s4097 = scalar_lea.vmem %s0, 631
    %v4098 = vld [vmem:[%s4097] sm:$0x4]
    %vm4099 = vcmask 1042434
    %v4100 = vsel %vm4099, %v4098, %v4096
    %s4101 = scalar_lea.vmem %s0, 3303
    %s4102 = smov 24
    %v4103 = vld [vmem:[%s4101] ss:$-794 sm:%s4102]
    %vm4104 = vcmask 1044483
    %v4105 = vsel %vm4104, %v4103, %v4100
    %s4106 = scalar_lea.vmem %s0, 410
    %v4107 = vld [vmem:[%s4106] sm:$0x20]
    %vm4108 = vcmask 1045509
    %v4109 = vsel %vm4108, %v4107, %v4105
    %s4110 = scalar_lea.vmem %s0, 697
    %v4111 = vld [vmem:[%s4110] sm:$0x40]
    %vm4112 = vcmask 1046534
    %v4113 = vsel %vm4112, %v4111, %v4109
    %s4114 = scalar_lea.vmem %s0, 984
    %v4115 = vld [vmem:[%s4114] sm:$0x80]
    %vm4116 = vcmask 1047559
    %v4117 = vsel %vm4116, %v4115, %v4113
    %4118 = vrot.lane.b32.xlu0 %v4117, 18
    %v4119 = vpop.permute.xlu0 %4118
    %vm4120 = vcmask 228496
    %s4121 = scalar_lea.vmem [#allocation0], 32
    %4122 = vst.msk [vmem:[%s4121] sm:$0xf] %vm4120, %v4119
    %s4123 = scalar_lea.vmem [#allocation0], 68
    %4124 = vst.msk [vmem:[%s4123] sm:$0xf0] %vm4120, %v4119
    %s4125 = scalar_lea.vmem %s0, 197
    %v4126 = vld [vmem:[%s4125] sm:$0x1]
    %s4127 = scalar_lea.vmem %s0, 484
    %v4128 = vld [vmem:[%s4127] sm:$0x2]
    %vm4129 = vcmask 1041409
    %v4130 = vsel %vm4129, %v4128, %v4126
    %s4131 = scalar_lea.vmem %s0, 771
    %v4132 = vld [vmem:[%s4131] sm:$0x4]
    %vm4133 = vcmask 1042434
    %v4134 = vsel %vm4133, %v4132, %v4130
    %s4135 = scalar_lea.vmem %s0, 3443
    %s4136 = smov 24
    %v4137 = vld [vmem:[%s4135] ss:$-794 sm:%s4136]
    %vm4138 = vcmask 1044483
    %v4139 = vsel %vm4138, %v4137, %v4134
    %s4140 = scalar_lea.vmem %s0, 550
    %v4141 = vld [vmem:[%s4140] sm:$0x20]
    %vm4142 = vcmask 1045509
    %v4143 = vsel %vm4142, %v4141, %v4139
    %s4144 = scalar_lea.vmem %s0, 837
    %v4145 = vld [vmem:[%s4144] sm:$0x40]
    %vm4146 = vcmask 1046534
    %v4147 = vsel %vm4146, %v4145, %v4143
    %s4148 = scalar_lea.vmem %s0, 1124
    %v4149 = vld [vmem:[%s4148] sm:$0x80]
    %vm4150 = vcmask 1047559
    %v4151 = vsel %vm4150, %v4149, %v4147
    %4152 = vrot.lane.b32.xlu0 %v4151, 18
    %v4153 = vpop.permute.xlu0 %4152
    %vm4154 = vcmask 228496
    %s4155 = scalar_lea.vmem [#allocation0], 112
    %4156 = vst.msk [vmem:[%s4155] sm:$0xf] %vm4154, %v4153
    %s4157 = scalar_lea.vmem [#allocation0], 148
    %4158 = vst.msk [vmem:[%s4157] sm:$0xf0] %vm4154, %v4153
    %s4159 = scalar_lea.vmem %s0, 112
    %v4160 = vld [vmem:[%s4159] sm:$0x1]
    %s4161 = scalar_lea.vmem %s0, 399
    %v4162 = vld [vmem:[%s4161] sm:$0x2]
    %vm4163 = vcmask 1041409
    %v4164 = vsel %vm4163, %v4162, %v4160
    %s4165 = scalar_lea.vmem %s0, 686
    %v4166 = vld [vmem:[%s4165] sm:$0x4]
    %vm4167 = vcmask 1042434
    %v4168 = vsel %vm4167, %v4166, %v4164
    %s4169 = scalar_lea.vmem %s0, 3358
    %s4170 = smov 24
    %v4171 = vld [vmem:[%s4169] ss:$-794 sm:%s4170]
    %vm4172 = vcmask 1044483
    %v4173 = vsel %vm4172, %v4171, %v4168
    %s4174 = scalar_lea.vmem %s0, 465
    %v4175 = vld [vmem:[%s4174] sm:$0x20]
    %vm4176 = vcmask 1045509
    %v4177 = vsel %vm4176, %v4175, %v4173
    %s4178 = scalar_lea.vmem %s0, 752
    %v4179 = vld [vmem:[%s4178] sm:$0x40]
    %vm4180 = vcmask 1046534
    %v4181 = vsel %vm4180, %v4179, %v4177
    %s4182 = scalar_lea.vmem %s0, 1039
    %v4183 = vld [vmem:[%s4182] sm:$0x80]
    %vm4184 = vcmask 1047559
    %v4185 = vsel %vm4184, %v4183, %v4181
    %4186 = vrot.lane.b32.xlu0 %v4185, 16
    %v4187 = vpop.permute.xlu0 %4186
    %vm4188 = vcmask 212096
    %s4189 = scalar_lea.vmem [#allocation0], 64
    %4190 = vst.msk [vmem:[%s4189] sm:$0xf] %vm4188, %v4187
    %s4191 = scalar_lea.vmem [#allocation0], 100
    %4192 = vst.msk [vmem:[%s4191] sm:$0xf0] %vm4188, %v4187
    %s4193 = scalar_lea.vmem %s0, 252
    %v4194 = vld [vmem:[%s4193] sm:$0x1]
    %s4195 = scalar_lea.vmem %s0, 539
    %v4196 = vld [vmem:[%s4195] sm:$0x2]
    %vm4197 = vcmask 1041409
    %v4198 = vsel %vm4197, %v4196, %v4194
    %s4199 = scalar_lea.vmem %s0, 826
    %v4200 = vld [vmem:[%s4199] sm:$0x4]
    %vm4201 = vcmask 1042434
    %v4202 = vsel %vm4201, %v4200, %v4198
    %s4203 = scalar_lea.vmem %s0, 4338
    %s4204 = smov 24
    %v4205 = vld [vmem:[%s4203] ss:$-1074 sm:%s4204]
    %vm4206 = vcmask 1044483
    %v4207 = vsel %vm4206, %v4205, %v4202
    %s4208 = scalar_lea.vmem %s0, 325
    %v4209 = vld [vmem:[%s4208] sm:$0x20]
    %vm4210 = vcmask 1045509
    %v4211 = vsel %vm4210, %v4209, %v4207
    %s4212 = scalar_lea.vmem %s0, 612
    %v4213 = vld [vmem:[%s4212] sm:$0x40]
    %vm4214 = vcmask 1046534
    %v4215 = vsel %vm4214, %v4213, %v4211
    %s4216 = scalar_lea.vmem %s0, 899
    %v4217 = vld [vmem:[%s4216] sm:$0x80]
    %vm4218 = vcmask 1047559
    %v4219 = vsel %vm4218, %v4217, %v4215
    %4220 = vrot.lane.b32.xlu0 %v4219, 16
    %v4221 = vpop.permute.xlu0 %4220
    %vm4222 = vcmask 212096
    %s4223 = scalar_lea.vmem [#allocation0], 144
    %4224 = vst.msk [vmem:[%s4223] sm:$0xf] %vm4222, %v4221
    %s4225 = scalar_lea.vmem [#allocation0], 20
    %4226 = vst.msk [vmem:[%s4225] sm:$0xf0] %vm4222, %v4221
    %s4227 = scalar_lea.vmem %s0, 169
    %v4228 = vld [vmem:[%s4227] sm:$0x1]
    %s4229 = scalar_lea.vmem %s0, 456
    %v4230 = vld [vmem:[%s4229] sm:$0x2]
    %vm4231 = vcmask 1041409
    %v4232 = vsel %vm4231, %v4230, %v4228
    %s4233 = scalar_lea.vmem %s0, 743
    %v4234 = vld [vmem:[%s4233] sm:$0x4]
    %vm4235 = vcmask 1042434
    %v4236 = vsel %vm4235, %v4234, %v4232
    %s4237 = scalar_lea.vmem %s0, 3421
    %s4238 = smov 24
    %v4239 = vld [vmem:[%s4237] ss:$-796 sm:%s4238]
    %vm4240 = vcmask 1044483
    %v4241 = vsel %vm4240, %v4239, %v4236
    %s4242 = scalar_lea.vmem %s0, 520
    %v4243 = vld [vmem:[%s4242] sm:$0x20]
    %vm4244 = vcmask 1045509
    %v4245 = vsel %vm4244, %v4243, %v4241
    %s4246 = scalar_lea.vmem %s0, 807
    %v4247 = vld [vmem:[%s4246] sm:$0x40]
    %vm4248 = vcmask 1046534
    %v4249 = vsel %vm4248, %v4247, %v4245
    %s4250 = scalar_lea.vmem %s0, 1094
    %v4251 = vld [vmem:[%s4250] sm:$0x80]
    %vm4252 = vcmask 1047559
    %v4253 = vsel %vm4252, %v4251, %v4249
    %4254 = vrot.lane.b32.xlu0 %v4253, 14
    %v4255 = vpop.permute.xlu0 %4254
    %vm4256 = vcmask 195696
    %s4257 = scalar_lea.vmem [#allocation0], 96
    %4258 = vst.msk [vmem:[%s4257] sm:$0xf] %vm4256, %v4255
    %s4259 = scalar_lea.vmem [#allocation0], 132
    %4260 = vst.msk [vmem:[%s4259] sm:$0xf0] %vm4256, %v4255
    %s4261 = scalar_lea.vmem %s0, 29
    %v4262 = vld [vmem:[%s4261] sm:$0x1]
    %s4263 = scalar_lea.vmem %s0, 316
    %v4264 = vld [vmem:[%s4263] sm:$0x2]
    %vm4265 = vcmask 1041409
    %v4266 = vsel %vm4265, %v4264, %v4262
    %s4267 = scalar_lea.vmem %s0, 603
    %v4268 = vld [vmem:[%s4267] sm:$0x4]
    %vm4269 = vcmask 1042434
    %v4270 = vsel %vm4269, %v4268, %v4266
    %s4271 = scalar_lea.vmem %s0, 3275
    %s4272 = smov 24
    %v4273 = vld [vmem:[%s4271] ss:$-794 sm:%s4272]
    %vm4274 = vcmask 1044483
    %v4275 = vsel %vm4274, %v4273, %v4270
    %s4276 = scalar_lea.vmem %s0, 382
    %v4277 = vld [vmem:[%s4276] sm:$0x20]
    %vm4278 = vcmask 1045509
    %v4279 = vsel %vm4278, %v4277, %v4275
    %s4280 = scalar_lea.vmem %s0, 669
    %v4281 = vld [vmem:[%s4280] sm:$0x40]
    %vm4282 = vcmask 1046534
    %v4283 = vsel %vm4282, %v4281, %v4279
    %s4284 = scalar_lea.vmem %s0, 956
    %v4285 = vld [vmem:[%s4284] sm:$0x80]
    %vm4286 = vcmask 1047559
    %v4287 = vsel %vm4286, %v4285, %v4283
    %4288 = vrot.lane.b32.xlu0 %v4287, 14
    %v4289 = vpop.permute.xlu0 %4288
    %vm4290 = vcmask 195696
    %s4291 = scalar_lea.vmem [#allocation0], 16
    %4292 = vst.msk [vmem:[%s4291] sm:$0xf] %vm4290, %v4289
    %s4293 = scalar_lea.vmem [#allocation0], 52
    %4294 = vst.msk [vmem:[%s4293] sm:$0xf0] %vm4290, %v4289
    %s4295 = scalar_lea.vmem %s0, 224
    %v4296 = vld [vmem:[%s4295] sm:$0x1]
    %s4297 = scalar_lea.vmem %s0, 511
    %v4298 = vld [vmem:[%s4297] sm:$0x2]
    %vm4299 = vcmask 1041409
    %v4300 = vsel %vm4299, %v4298, %v4296
    %s4301 = scalar_lea.vmem %s0, 798
    %v4302 = vld [vmem:[%s4301] sm:$0x4]
    %vm4303 = vcmask 1042434
    %v4304 = vsel %vm4303, %v4302, %v4300
    %s4305 = scalar_lea.vmem %s0, 4310
    %s4306 = smov 24
    %v4307 = vld [vmem:[%s4305] ss:$-1074 sm:%s4306]
    %vm4308 = vcmask 1044483
    %v4309 = vsel %vm4308, %v4307, %v4304
    %s4310 = scalar_lea.vmem %s0, 297
    %v4311 = vld [vmem:[%s4310] sm:$0x20]
    %vm4312 = vcmask 1045509
    %v4313 = vsel %vm4312, %v4311, %v4309
    %s4314 = scalar_lea.vmem %s0, 584
    %v4315 = vld [vmem:[%s4314] sm:$0x40]
    %vm4316 = vcmask 1046534
    %v4317 = vsel %vm4316, %v4315, %v4313
    %s4318 = scalar_lea.vmem %s0, 871
    %v4319 = vld [vmem:[%s4318] sm:$0x80]
    %vm4320 = vcmask 1047559
    %v4321 = vsel %vm4320, %v4319, %v4317
    %4322 = vrot.lane.b32.xlu0 %v4321, 12
    %v4323 = vpop.permute.xlu0 %4322
    %vm4324 = vcmask 179296
    %s4325 = scalar_lea.vmem [#allocation0], 128
    %4326 = vst.msk [vmem:[%s4325] sm:$0xf] %vm4324, %v4323
    %s4327 = scalar_lea.vmem [#allocation0], 4
    %4328 = vst.msk [vmem:[%s4327] sm:$0xf0] %vm4324, %v4323
    %s4329 = scalar_lea.vmem %s0, 84
    %v4330 = vld [vmem:[%s4329] sm:$0x1]
    %s4331 = scalar_lea.vmem %s0, 371
    %v4332 = vld [vmem:[%s4331] sm:$0x2]
    %vm4333 = vcmask 1041409
    %v4334 = vsel %vm4333, %v4332, %v4330
    %s4335 = scalar_lea.vmem %s0, 658
    %v4336 = vld [vmem:[%s4335] sm:$0x4]
    %vm4337 = vcmask 1042434
    %v4338 = vsel %vm4337, %v4336, %v4334
    %s4339 = scalar_lea.vmem %s0, 3330
    %s4340 = smov 24
    %v4341 = vld [vmem:[%s4339] ss:$-794 sm:%s4340]
    %vm4342 = vcmask 1044483
    %v4343 = vsel %vm4342, %v4341, %v4338
    %s4344 = scalar_lea.vmem %s0, 437
    %v4345 = vld [vmem:[%s4344] sm:$0x20]
    %vm4346 = vcmask 1045509
    %v4347 = vsel %vm4346, %v4345, %v4343
    %s4348 = scalar_lea.vmem %s0, 724
    %v4349 = vld [vmem:[%s4348] sm:$0x40]
    %vm4350 = vcmask 1046534
    %v4351 = vsel %vm4350, %v4349, %v4347
    %s4352 = scalar_lea.vmem %s0, 1011
    %v4353 = vld [vmem:[%s4352] sm:$0x80]
    %vm4354 = vcmask 1047559
    %v4355 = vsel %vm4354, %v4353, %v4351
    %4356 = vrot.lane.b32.xlu0 %v4355, 12
    %v4357 = vpop.permute.xlu0 %4356
    %vm4358 = vcmask 179296
    %s4359 = scalar_lea.vmem [#allocation0], 48
    %4360 = vst.msk [vmem:[%s4359] sm:$0xf] %vm4358, %v4357
    %s4361 = scalar_lea.vmem [#allocation0], 84
    %4362 = vst.msk [vmem:[%s4361] sm:$0xf0] %vm4358, %v4357
    %s4363 = scalar_lea.vmem %s0, 1
    %v4364 = vld [vmem:[%s4363] sm:$0x1]
    %s4365 = scalar_lea.vmem %s0, 288
    %v4366 = vld [vmem:[%s4365] sm:$0x2]
    %vm4367 = vcmask 1041409
    %v4368 = vsel %vm4367, %v4366, %v4364
    %s4369 = scalar_lea.vmem %s0, 575
    %v4370 = vld [vmem:[%s4369] sm:$0x4]
    %vm4371 = vcmask 1042434
    %v4372 = vsel %vm4371, %v4370, %v4368
    %s4373 = scalar_lea.vmem %s0, 3253
    %s4374 = smov 24
    %v4375 = vld [vmem:[%s4373] ss:$-796 sm:%s4374]
    %vm4376 = vcmask 1044483
    %v4377 = vsel %vm4376, %v4375, %v4372
    %s4378 = scalar_lea.vmem %s0, 352
    %v4379 = vld [vmem:[%s4378] sm:$0x20]
    %vm4380 = vcmask 1045509
    %v4381 = vsel %vm4380, %v4379, %v4377
    %s4382 = scalar_lea.vmem %s0, 639
    %v4383 = vld [vmem:[%s4382] sm:$0x40]
    %vm4384 = vcmask 1046534
    %v4385 = vsel %vm4384, %v4383, %v4381
    %s4386 = scalar_lea.vmem %s0, 926
    %v4387 = vld [vmem:[%s4386] sm:$0x80]
    %vm4388 = vcmask 1047559
    %v4389 = vsel %vm4388, %v4387, %v4385
    %4390 = vrot.lane.b32.xlu0 %v4389, 10
    %v4391 = vpop.permute.xlu0 %4390
    %vm4392 = vcmask 162896
    %4393 = vst.msk [vmem:[#allocation0] sm:$0xf] %vm4392, %v4391
    %s4394 = scalar_lea.vmem [#allocation0], 36
    %4395 = vst.msk [vmem:[%s4394] sm:$0xf0] %vm4392, %v4391
    %s4396 = scalar_lea.vmem %s0, 279
    %v4397 = vld [vmem:[%s4396] sm:$0x1]
    %s4398 = scalar_lea.vmem %s0, 566
    %v4399 = vld [vmem:[%s4398] sm:$0x2]
    %vm4400 = vcmask 1041409
    %v4401 = vsel %vm4400, %v4399, %v4397
    %s4402 = scalar_lea.vmem %s0, 853
    %v4403 = vld [vmem:[%s4402] sm:$0x4]
    %vm4404 = vcmask 1042434
    %v4405 = vsel %vm4404, %v4403, %v4401
    %s4406 = scalar_lea.vmem %s0, 4155
    %s4407 = smov 24
    %v4408 = vld [vmem:[%s4406] ss:$-1004 sm:%s4407]
    %vm4409 = vcmask 1044483
    %v4410 = vsel %vm4409, %v4408, %v4405
    %s4411 = scalar_lea.vmem %s0, 422
    %v4412 = vld [vmem:[%s4411] sm:$0x20]
    %vm4413 = vcmask 1045509
    %v4414 = vsel %vm4413, %v4412, %v4410
    %s4415 = scalar_lea.vmem %s0, 709
    %v4416 = vld [vmem:[%s4415] sm:$0x40]
    %vm4417 = vcmask 1046534
    %v4418 = vsel %vm4417, %v4416, %v4414
    %s4419 = scalar_lea.vmem %s0, 996
    %v4420 = vld [vmem:[%s4419] sm:$0x80]
    %vm4421 = vcmask 1047559
    %v4422 = vsel %vm4421, %v4420, %v4418
    %4423 = vrot.lane.b32.xlu0 %v4422, 10
    %v4424 = vpop.permute.xlu0 %4423
    %vm4425 = vcmask 162896
    %s4426 = scalar_lea.vmem [#allocation0], 160
    %4427 = vst.msk [vmem:[%s4426] sm:$0xf] %vm4425, %v4424
    %s4428 = scalar_lea.vmem [#allocation0], 76
    %4429 = vst.msk [vmem:[%s4428] sm:$0xf0] %vm4425, %v4424
    %s4430 = scalar_lea.vmem %s0, 209
    %v4431 = vld [vmem:[%s4430] sm:$0x1]
    %s4432 = scalar_lea.vmem %s0, 496
    %v4433 = vld [vmem:[%s4432] sm:$0x2]
    %vm4434 = vcmask 1041409
    %v4435 = vsel %vm4434, %v4433, %v4431
    %s4436 = scalar_lea.vmem %s0, 783
    %v4437 = vld [vmem:[%s4436] sm:$0x4]
    %vm4438 = vcmask 1042434
    %v4439 = vsel %vm4438, %v4437, %v4435
    %s4440 = scalar_lea.vmem %s0, 1070
    %v4441 = vld [vmem:[%s4440] sm:$0x8]
    %vm4442 = vcmask 1043459
    %v4443 = vsel %vm4442, %v4441, %v4439
    %4444 = vrot.lane.b32.xlu0 %v4443, 10
    %v4445 = vpop.permute.xlu0 %4444
    %vm4446 = vcmask 162896
    %s4447 = scalar_lea.vmem [#allocation0], 120
    %4448 = vst.msk [vmem:[%s4447] sm:$0xf] %vm4446, %v4445
    %s4449 = scalar_lea.vmem %s0, 56
    %v4450 = vld [vmem:[%s4449] sm:$0x1]
    %s4451 = scalar_lea.vmem %s0, 343
    %v4452 = vld [vmem:[%s4451] sm:$0x2]
    %vm4453 = vcmask 1041409
    %v4454 = vsel %vm4453, %v4452, %v4450
    %s4455 = scalar_lea.vmem %s0, 630
    %v4456 = vld [vmem:[%s4455] sm:$0x4]
    %vm4457 = vcmask 1042434
    %v4458 = vsel %vm4457, %v4456, %v4454
    %s4459 = scalar_lea.vmem %s0, 3302
    %s4460 = smov 24
    %v4461 = vld [vmem:[%s4459] ss:$-794 sm:%s4460]
    %vm4462 = vcmask 1044483
    %v4463 = vsel %vm4462, %v4461, %v4458
    %s4464 = scalar_lea.vmem %s0, 409
    %v4465 = vld [vmem:[%s4464] sm:$0x20]
    %vm4466 = vcmask 1045509
    %v4467 = vsel %vm4466, %v4465, %v4463
    %s4468 = scalar_lea.vmem %s0, 696
    %v4469 = vld [vmem:[%s4468] sm:$0x40]
    %vm4470 = vcmask 1046534
    %v4471 = vsel %vm4470, %v4469, %v4467
    %s4472 = scalar_lea.vmem %s0, 983
    %v4473 = vld [vmem:[%s4472] sm:$0x80]
    %vm4474 = vcmask 1047559
    %v4475 = vsel %vm4474, %v4473, %v4471
    %4476 = vrot.lane.b32.xlu0 %v4475, 8
    %v4477 = vpop.permute.xlu0 %4476
    %vm4478 = vcmask 146496
    %s4479 = scalar_lea.vmem [#allocation0], 32
    %4480 = vst.msk [vmem:[%s4479] sm:$0xf] %vm4478, %v4477
    %s4481 = scalar_lea.vmem [#allocation0], 68
    %4482 = vst.msk [vmem:[%s4481] sm:$0xf0] %vm4478, %v4477
    %s4483 = scalar_lea.vmem %s0, 196
    %v4484 = vld [vmem:[%s4483] sm:$0x1]
    %s4485 = scalar_lea.vmem %s0, 483
    %v4486 = vld [vmem:[%s4485] sm:$0x2]
    %vm4487 = vcmask 1041409
    %v4488 = vsel %vm4487, %v4486, %v4484
    %s4489 = scalar_lea.vmem %s0, 770
    %v4490 = vld [vmem:[%s4489] sm:$0x4]
    %vm4491 = vcmask 1042434
    %v4492 = vsel %vm4491, %v4490, %v4488
    %s4493 = scalar_lea.vmem %s0, 3442
    %s4494 = smov 24
    %v4495 = vld [vmem:[%s4493] ss:$-794 sm:%s4494]
    %vm4496 = vcmask 1044483
    %v4497 = vsel %vm4496, %v4495, %v4492
    %s4498 = scalar_lea.vmem %s0, 549
    %v4499 = vld [vmem:[%s4498] sm:$0x20]
    %vm4500 = vcmask 1045509
    %v4501 = vsel %vm4500, %v4499, %v4497
    %s4502 = scalar_lea.vmem %s0, 836
    %v4503 = vld [vmem:[%s4502] sm:$0x40]
    %vm4504 = vcmask 1046534
    %v4505 = vsel %vm4504, %v4503, %v4501
    %s4506 = scalar_lea.vmem %s0, 1123
    %v4507 = vld [vmem:[%s4506] sm:$0x80]
    %vm4508 = vcmask 1047559
    %v4509 = vsel %vm4508, %v4507, %v4505
    %4510 = vrot.lane.b32.xlu0 %v4509, 8
    %v4511 = vpop.permute.xlu0 %4510
    %vm4512 = vcmask 146496
    %s4513 = scalar_lea.vmem [#allocation0], 112
    %4514 = vst.msk [vmem:[%s4513] sm:$0xf] %vm4512, %v4511
    %s4515 = scalar_lea.vmem [#allocation0], 148
    %4516 = vst.msk [vmem:[%s4515] sm:$0xf0] %vm4512, %v4511
    %s4517 = scalar_lea.vmem %s0, 111
    %v4518 = vld [vmem:[%s4517] sm:$0x1]
    %s4519 = scalar_lea.vmem %s0, 398
    %v4520 = vld [vmem:[%s4519] sm:$0x2]
    %vm4521 = vcmask 1041409
    %v4522 = vsel %vm4521, %v4520, %v4518
    %s4523 = scalar_lea.vmem %s0, 685
    %v4524 = vld [vmem:[%s4523] sm:$0x4]
    %vm4525 = vcmask 1042434
    %v4526 = vsel %vm4525, %v4524, %v4522
    %s4527 = scalar_lea.vmem %s0, 3357
    %s4528 = smov 24
    %v4529 = vld [vmem:[%s4527] ss:$-794 sm:%s4528]
    %vm4530 = vcmask 1044483
    %v4531 = vsel %vm4530, %v4529, %v4526
    %s4532 = scalar_lea.vmem %s0, 464
    %v4533 = vld [vmem:[%s4532] sm:$0x20]
    %vm4534 = vcmask 1045509
    %v4535 = vsel %vm4534, %v4533, %v4531
    %s4536 = scalar_lea.vmem %s0, 751
    %v4537 = vld [vmem:[%s4536] sm:$0x40]
    %vm4538 = vcmask 1046534
    %v4539 = vsel %vm4538, %v4537, %v4535
    %s4540 = scalar_lea.vmem %s0, 1038
    %v4541 = vld [vmem:[%s4540] sm:$0x80]
    %vm4542 = vcmask 1047559
    %v4543 = vsel %vm4542, %v4541, %v4539
    %4544 = vrot.lane.b32.xlu0 %v4543, 6
    %v4545 = vpop.permute.xlu0 %4544
    %vm4546 = vcmask 130096
    %s4547 = scalar_lea.vmem [#allocation0], 64
    %4548 = vst.msk [vmem:[%s4547] sm:$0xf] %vm4546, %v4545
    %s4549 = scalar_lea.vmem [#allocation0], 100
    %4550 = vst.msk [vmem:[%s4549] sm:$0xf0] %vm4546, %v4545
    %s4551 = scalar_lea.vmem %s0, 251
    %v4552 = vld [vmem:[%s4551] sm:$0x1]
    %s4553 = scalar_lea.vmem %s0, 538
    %v4554 = vld [vmem:[%s4553] sm:$0x2]
    %vm4555 = vcmask 1041409
    %v4556 = vsel %vm4555, %v4554, %v4552
    %s4557 = scalar_lea.vmem %s0, 825
    %v4558 = vld [vmem:[%s4557] sm:$0x4]
    %vm4559 = vcmask 1042434
    %v4560 = vsel %vm4559, %v4558, %v4556
    %s4561 = scalar_lea.vmem %s0, 4337
    %s4562 = smov 24
    %v4563 = vld [vmem:[%s4561] ss:$-1074 sm:%s4562]
    %vm4564 = vcmask 1044483
    %v4565 = vsel %vm4564, %v4563, %v4560
    %s4566 = scalar_lea.vmem %s0, 324
    %v4567 = vld [vmem:[%s4566] sm:$0x20]
    %vm4568 = vcmask 1045509
    %v4569 = vsel %vm4568, %v4567, %v4565
    %s4570 = scalar_lea.vmem %s0, 611
    %v4571 = vld [vmem:[%s4570] sm:$0x40]
    %vm4572 = vcmask 1046534
    %v4573 = vsel %vm4572, %v4571, %v4569
    %s4574 = scalar_lea.vmem %s0, 898
    %v4575 = vld [vmem:[%s4574] sm:$0x80]
    %vm4576 = vcmask 1047559
    %v4577 = vsel %vm4576, %v4575, %v4573
    %4578 = vrot.lane.b32.xlu0 %v4577, 6
    %v4579 = vpop.permute.xlu0 %4578
    %vm4580 = vcmask 130096
    %s4581 = scalar_lea.vmem [#allocation0], 144
    %4582 = vst.msk [vmem:[%s4581] sm:$0xf] %vm4580, %v4579
    %s4583 = scalar_lea.vmem [#allocation0], 20
    %4584 = vst.msk [vmem:[%s4583] sm:$0xf0] %vm4580, %v4579
    %s4585 = scalar_lea.vmem %s0, 168
    %v4586 = vld [vmem:[%s4585] sm:$0x1]
    %s4587 = scalar_lea.vmem %s0, 455
    %v4588 = vld [vmem:[%s4587] sm:$0x2]
    %vm4589 = vcmask 1041409
    %v4590 = vsel %vm4589, %v4588, %v4586
    %s4591 = scalar_lea.vmem %s0, 742
    %v4592 = vld [vmem:[%s4591] sm:$0x4]
    %vm4593 = vcmask 1042434
    %v4594 = vsel %vm4593, %v4592, %v4590
    %s4595 = scalar_lea.vmem %s0, 3420
    %s4596 = smov 24
    %v4597 = vld [vmem:[%s4595] ss:$-796 sm:%s4596]
    %vm4598 = vcmask 1044483
    %v4599 = vsel %vm4598, %v4597, %v4594
    %s4600 = scalar_lea.vmem %s0, 519
    %v4601 = vld [vmem:[%s4600] sm:$0x20]
    %vm4602 = vcmask 1045509
    %v4603 = vsel %vm4602, %v4601, %v4599
    %s4604 = scalar_lea.vmem %s0, 806
    %v4605 = vld [vmem:[%s4604] sm:$0x40]
    %vm4606 = vcmask 1046534
    %v4607 = vsel %vm4606, %v4605, %v4603
    %s4608 = scalar_lea.vmem %s0, 1093
    %v4609 = vld [vmem:[%s4608] sm:$0x80]
    %vm4610 = vcmask 1047559
    %v4611 = vsel %vm4610, %v4609, %v4607
    %4612 = vrot.lane.b32.xlu0 %v4611, 4
    %v4613 = vpop.permute.xlu0 %4612
    %vm4614 = vcmask 113696
    %s4615 = scalar_lea.vmem [#allocation0], 96
    %4616 = vst.msk [vmem:[%s4615] sm:$0xf] %vm4614, %v4613
    %s4617 = scalar_lea.vmem [#allocation0], 132
    %4618 = vst.msk [vmem:[%s4617] sm:$0xf0] %vm4614, %v4613
    %s4619 = scalar_lea.vmem %s0, 28
    %v4620 = vld [vmem:[%s4619] sm:$0x1]
    %s4621 = scalar_lea.vmem %s0, 315
    %v4622 = vld [vmem:[%s4621] sm:$0x2]
    %vm4623 = vcmask 1041409
    %v4624 = vsel %vm4623, %v4622, %v4620
    %s4625 = scalar_lea.vmem %s0, 602
    %v4626 = vld [vmem:[%s4625] sm:$0x4]
    %vm4627 = vcmask 1042434
    %v4628 = vsel %vm4627, %v4626, %v4624
    %s4629 = scalar_lea.vmem %s0, 3274
    %s4630 = smov 24
    %v4631 = vld [vmem:[%s4629] ss:$-794 sm:%s4630]
    %vm4632 = vcmask 1044483
    %v4633 = vsel %vm4632, %v4631, %v4628
    %s4634 = scalar_lea.vmem %s0, 381
    %v4635 = vld [vmem:[%s4634] sm:$0x20]
    %vm4636 = vcmask 1045509
    %v4637 = vsel %vm4636, %v4635, %v4633
    %s4638 = scalar_lea.vmem %s0, 668
    %v4639 = vld [vmem:[%s4638] sm:$0x40]
    %vm4640 = vcmask 1046534
    %v4641 = vsel %vm4640, %v4639, %v4637
    %s4642 = scalar_lea.vmem %s0, 955
    %v4643 = vld [vmem:[%s4642] sm:$0x80]
    %vm4644 = vcmask 1047559
    %v4645 = vsel %vm4644, %v4643, %v4641
    %4646 = vrot.lane.b32.xlu0 %v4645, 4
    %v4647 = vpop.permute.xlu0 %4646
    %vm4648 = vcmask 113696
    %s4649 = scalar_lea.vmem [#allocation0], 16
    %4650 = vst.msk [vmem:[%s4649] sm:$0xf] %vm4648, %v4647
    %s4651 = scalar_lea.vmem [#allocation0], 52
    %4652 = vst.msk [vmem:[%s4651] sm:$0xf0] %vm4648, %v4647
    %s4653 = scalar_lea.vmem %s0, 223
    %v4654 = vld [vmem:[%s4653] sm:$0x1]
    %s4655 = scalar_lea.vmem %s0, 510
    %v4656 = vld [vmem:[%s4655] sm:$0x2]
    %vm4657 = vcmask 1041409
    %v4658 = vsel %vm4657, %v4656, %v4654
    %s4659 = scalar_lea.vmem %s0, 797
    %v4660 = vld [vmem:[%s4659] sm:$0x4]
    %vm4661 = vcmask 1042434
    %v4662 = vsel %vm4661, %v4660, %v4658
    %s4663 = scalar_lea.vmem %s0, 4309
    %s4664 = smov 24
    %v4665 = vld [vmem:[%s4663] ss:$-1074 sm:%s4664]
    %vm4666 = vcmask 1044483
    %v4667 = vsel %vm4666, %v4665, %v4662
    %s4668 = scalar_lea.vmem %s0, 296
    %v4669 = vld [vmem:[%s4668] sm:$0x20]
    %vm4670 = vcmask 1045509
    %v4671 = vsel %vm4670, %v4669, %v4667
    %s4672 = scalar_lea.vmem %s0, 583
    %v4673 = vld [vmem:[%s4672] sm:$0x40]
    %vm4674 = vcmask 1046534
    %v4675 = vsel %vm4674, %v4673, %v4671
    %s4676 = scalar_lea.vmem %s0, 870
    %v4677 = vld [vmem:[%s4676] sm:$0x80]
    %vm4678 = vcmask 1047559
    %v4679 = vsel %vm4678, %v4677, %v4675
    %4680 = vrot.lane.b32.xlu0 %v4679, 2
    %v4681 = vpop.permute.xlu0 %4680
    %vm4682 = vcmask 97296
    %s4683 = scalar_lea.vmem [#allocation0], 128
    %4684 = vst.msk [vmem:[%s4683] sm:$0xf] %vm4682, %v4681
    %s4685 = scalar_lea.vmem [#allocation0], 4
    %4686 = vst.msk [vmem:[%s4685] sm:$0xf0] %vm4682, %v4681
    %s4687 = scalar_lea.vmem %s0, 83
    %v4688 = vld [vmem:[%s4687] sm:$0x1]
    %s4689 = scalar_lea.vmem %s0, 370
    %v4690 = vld [vmem:[%s4689] sm:$0x2]
    %vm4691 = vcmask 1041409
    %v4692 = vsel %vm4691, %v4690, %v4688
    %s4693 = scalar_lea.vmem %s0, 657
    %v4694 = vld [vmem:[%s4693] sm:$0x4]
    %vm4695 = vcmask 1042434
    %v4696 = vsel %vm4695, %v4694, %v4692
    %s4697 = scalar_lea.vmem %s0, 3329
    %s4698 = smov 24
    %v4699 = vld [vmem:[%s4697] ss:$-794 sm:%s4698]
    %vm4700 = vcmask 1044483
    %v4701 = vsel %vm4700, %v4699, %v4696
    %s4702 = scalar_lea.vmem %s0, 436
    %v4703 = vld [vmem:[%s4702] sm:$0x20]
    %vm4704 = vcmask 1045509
    %v4705 = vsel %vm4704, %v4703, %v4701
    %s4706 = scalar_lea.vmem %s0, 723
    %v4707 = vld [vmem:[%s4706] sm:$0x40]
    %vm4708 = vcmask 1046534
    %v4709 = vsel %vm4708, %v4707, %v4705
    %s4710 = scalar_lea.vmem %s0, 1010
    %v4711 = vld [vmem:[%s4710] sm:$0x80]
    %vm4712 = vcmask 1047559
    %v4713 = vsel %vm4712, %v4711, %v4709
    %4714 = vrot.lane.b32.xlu0 %v4713, 2
    %v4715 = vpop.permute.xlu0 %4714
    %vm4716 = vcmask 97296
    %s4717 = scalar_lea.vmem [#allocation0], 48
    %4718 = vst.msk [vmem:[%s4717] sm:$0xf] %vm4716, %v4715
    %s4719 = scalar_lea.vmem [#allocation0], 84
    %4720 = vst.msk [vmem:[%s4719] sm:$0xf0] %vm4716, %v4715
    %s4722 = ssub.s32 16, 1
    %v4723 = vld [vmem:[#allocation0] sm:%s4722]
    %s4725 = ssub.s32 16, 1
    %4726 = vst [vmem:[%s1] sm:%s4725] %v4723
    %s4727 = scalar_lea.vmem [#allocation0], 8
    %v4728 = vld [vmem:[%s4727] sm:%s4722]
    %s4730 = ssub.s32 16, 1
    %s4731 = scalar_lea.vmem %s1, 4
    %4732 = vst [vmem:[%s4731] sm:%s4730] %v4728
    %s4733 = scalar_lea.vmem [#allocation0], 16
    %v4734 = vld [vmem:[%s4733] sm:%s4722]
    %s4736 = ssub.s32 16, 1
    %s4737 = scalar_lea.vmem %s1, 8
    %4738 = vst [vmem:[%s4737] sm:%s4736] %v4734
    %s4739 = scalar_lea.vmem [#allocation0], 24
    %v4740 = vld [vmem:[%s4739] sm:%s4722]
    %s4742 = ssub.s32 16, 1
    %s4743 = scalar_lea.vmem %s1, 12
    %4744 = vst [vmem:[%s4743] sm:%s4742] %v4740
    %s4745 = scalar_lea.vmem [#allocation0], 32
    %v4746 = vld [vmem:[%s4745] sm:%s4722]
    %s4748 = ssub.s32 16, 1
    %s4749 = scalar_lea.vmem %s1, 16
    %4750 = vst [vmem:[%s4749] sm:%s4748] %v4746
    %s4751 = scalar_lea.vmem [#allocation0], 40
    %v4752 = vld [vmem:[%s4751] sm:%s4722]
    %s4754 = ssub.s32 16, 1
    %s4755 = scalar_lea.vmem %s1, 20
    %4756 = vst [vmem:[%s4755] sm:%s4754] %v4752
    %s4757 = scalar_lea.vmem [#allocation0], 48
    %v4758 = vld [vmem:[%s4757] sm:%s4722]
    %s4760 = ssub.s32 16, 1
    %s4761 = scalar_lea.vmem %s1, 24
    %4762 = vst [vmem:[%s4761] sm:%s4760] %v4758
    %s4763 = scalar_lea.vmem [#allocation0], 56
    %v4764 = vld [vmem:[%s4763] sm:%s4722]
    %s4766 = ssub.s32 16, 1
    %s4767 = scalar_lea.vmem %s1, 28
    %4768 = vst [vmem:[%s4767] sm:%s4766] %v4764
    %s4769 = scalar_lea.vmem [#allocation0], 64
    %v4770 = vld [vmem:[%s4769] sm:%s4722]
    %s4772 = ssub.s32 16, 1
    %s4773 = scalar_lea.vmem %s1, 32
    %4774 = vst [vmem:[%s4773] sm:%s4772] %v4770
    %s4775 = scalar_lea.vmem [#allocation0], 72
    %v4776 = vld [vmem:[%s4775] sm:%s4722]
    %s4778 = ssub.s32 16, 1
    %s4779 = scalar_lea.vmem %s1, 36
    %4780 = vst [vmem:[%s4779] sm:%s4778] %v4776
    %s4781 = scalar_lea.vmem [#allocation0], 80
    %v4782 = vld [vmem:[%s4781] sm:%s4722]
    %s4784 = ssub.s32 16, 1
    %s4785 = scalar_lea.vmem %s1, 40
    %4786 = vst [vmem:[%s4785] sm:%s4784] %v4782
    %s4787 = scalar_lea.vmem [#allocation0], 88
    %v4788 = vld [vmem:[%s4787] sm:%s4722]
    %s4790 = ssub.s32 16, 1
    %s4791 = scalar_lea.vmem %s1, 44
    %4792 = vst [vmem:[%s4791] sm:%s4790] %v4788
    %s4793 = scalar_lea.vmem [#allocation0], 96
    %v4794 = vld [vmem:[%s4793] sm:%s4722]
    %s4796 = ssub.s32 16, 1
    %s4797 = scalar_lea.vmem %s1, 48
    %4798 = vst [vmem:[%s4797] sm:%s4796] %v4794
    %s4799 = scalar_lea.vmem [#allocation0], 104
    %v4800 = vld [vmem:[%s4799] sm:%s4722]
    %s4802 = ssub.s32 16, 1
    %s4803 = scalar_lea.vmem %s1, 52
    %4804 = vst [vmem:[%s4803] sm:%s4802] %v4800
    %s4805 = scalar_lea.vmem [#allocation0], 112
    %v4806 = vld [vmem:[%s4805] sm:%s4722]
    %s4808 = ssub.s32 16, 1
    %s4809 = scalar_lea.vmem %s1, 56
    %4810 = vst [vmem:[%s4809] sm:%s4808] %v4806
    %s4811 = scalar_lea.vmem [#allocation0], 120
    %v4812 = vld [vmem:[%s4811] sm:%s4722]
    %s4814 = ssub.s32 16, 1
    %s4815 = scalar_lea.vmem %s1, 60
    %4816 = vst [vmem:[%s4815] sm:%s4814] %v4812
    %s4817 = scalar_lea.vmem [#allocation0], 128
    %v4818 = vld [vmem:[%s4817] sm:%s4722]
    %s4820 = ssub.s32 16, 1
    %s4821 = scalar_lea.vmem %s1, 64
    %4822 = vst [vmem:[%s4821] sm:%s4820] %v4818
    %s4823 = scalar_lea.vmem [#allocation0], 136
    %v4824 = vld [vmem:[%s4823] sm:%s4722]
    %s4826 = ssub.s32 16, 1
    %s4827 = scalar_lea.vmem %s1, 68
    %4828 = vst [vmem:[%s4827] sm:%s4826] %v4824
    %s4829 = scalar_lea.vmem [#allocation0], 144
    %v4830 = vld [vmem:[%s4829] sm:%s4722]
    %s4832 = ssub.s32 16, 1
    %s4833 = scalar_lea.vmem %s1, 72
    %4834 = vst [vmem:[%s4833] sm:%s4832] %v4830
    %s4835 = scalar_lea.vmem [#allocation0], 152
    %v4836 = vld [vmem:[%s4835] sm:%s4722]
    %s4838 = ssub.s32 16, 1
    %s4839 = scalar_lea.vmem %s1, 76
    %4840 = vst [vmem:[%s4839] sm:%s4838] %v4836
    %s4841 = scalar_lea.vmem [#allocation0], 160
    %v4842 = vld [vmem:[%s4841] sm:%s4722]
    %s4844 = ssub.s32 16, 1
    %s4845 = scalar_lea.vmem %s1, 80
    %4846 = vst [vmem:[%s4845] sm:%s4844] %v4842

// kernel: _lambda_.1
$region0: #{_lambda_.1}
  #allocation0 [shape = 'u32[]', space=smem, size = 0x4, offset = 0x4, fixed_abs, tag = 'smem constant byte address 0x4 - core index']
  #allocation1 [shape = 'u32[72,128]{1,0:T(1,128)}', space=vmem, size = 0x9000, scoped, tag = 'internal scratch']
  %s0 = inlined_call_operand.vmem [shape: f32[48,8], index: 0, kind: input, shape index: {}]
  %s1 = inlined_call_operand.vmem [shape: f32[8,2640], index: 1, kind: input, shape index: {}]
  %s2 = inlined_call_operand.vmem [shape: f32[48,2640], index: 2, kind: output, shape index: {}]
  %s3 = sld [smem:[#allocation0]]
  $region41: #{_lambda_.1} parent=0
    _
  %s5 = ssub.s32 1, %s3
  %s6 = scalar_select 0, %s5, %s3
  loop: start=0, step=1, limit=4
  $region2: #{_lambda_.1} parent=0 // loop_pre_header
    _
  $region3: #{_lambda_.1} parent=0 // loop_header
    %s8 = sphi 0, %s12
    %p9 = scmp.ge.s32.totalorder %s8, 4
    %s18 = sphi 0, %s20
    %s21 = sphi 0, %s18
    %s22 = sphi 0, %s21
    %s38 = sphi 0, %s22
    %s42 = sphi 0, %s42
    %s44 = sphi 0, %s42
    %s45 = sphi 0, %s44
    %s59 = sphi 0, %s45
    %s65 = sphi 0, %s67
    %s68 = sphi 0, %s65
    %s69 = sphi 0, %s68
    %s85 = sphi 0, %s69
  $region4: #{_lambda_.1} parent=0 // loop_header_branch
    %11 = sbr.rel (%p9) target = $region8
  $region5: #{_lambda_.1} parent=0 // loop_body
    %s13 = ssub.s32 %s8, 1
    %s14 = ssub.s32 %s8, 2
    %s15 = sadd.s32 %s8, 1
    %s16 = ssub.s32 %s8, %s15
    %p17 = scmp.eq.s32.totalorder %s16, 0
    %s19 = sadd.s32 %s18, 1
    %s20 = scalar_select %p17, %s18, %s19
    %p23 = pneg %p17
    %p24 = scmp.eq.s32.totalorder %s8, 1
    %p25 = por %p23, %p24
    %p26 = scmp.ne.s32.totalorder %s18, %s21
    %p27 = scmp.eq.s32.totalorder %s8, 0
    %p28 = por %p26, %p27
    %p29 = scmp.ne.s32.totalorder %s18, %s21
    %p30 = scmp.eq.s32.totalorder %s13, 1
    %p31 = por %p29, %p30
    %p32 = scmp.ne.s32.totalorder %s21, %s22
    %p33 = scmp.eq.s32.totalorder %s13, 0
    %p34 = por %p32, %p33
    %p35 = scmp.ne.s32.totalorder %s21, %s22
    %p36 = scmp.eq.s32.totalorder %s14, 1
    %p37 = por %p35, %p36
    %p39 = scmp.ne.s32.totalorder %s22, %s38
    %p40 = scmp.eq.s32.totalorder %s14, 0
    %p41 = por %p39, %p40
    %s43 = sadd.s32 %s42, 1
    %p46 = scmp.eq.s32.totalorder %s8, 1
    %p47 = scmp.ne.s32.totalorder %s42, %s44
    %p48 = scmp.eq.s32.totalorder %s8, 0
    %p49 = por %p47, %p48
    %p50 = scmp.ne.s32.totalorder %s42, %s44
    %p51 = scmp.eq.s32.totalorder %s13, 1
    %p52 = por %p50, %p51
    %p53 = scmp.ne.s32.totalorder %s44, %s45
    %p54 = scmp.eq.s32.totalorder %s13, 0
    %p55 = por %p53, %p54
    %p56 = scmp.ne.s32.totalorder %s44, %s45
    %p57 = scmp.eq.s32.totalorder %s14, 1
    %p58 = por %p56, %p57
    %p60 = scmp.ne.s32.totalorder %s45, %s59
    %p61 = scmp.eq.s32.totalorder %s14, 0
    %p62 = por %p60, %p61
    %s63 = ssub.s32 %s8, %s15
    %p64 = scmp.eq.s32.totalorder %s63, 0
    %s66 = sadd.s32 %s65, 1
    %s67 = scalar_select %p64, %s65, %s66
    %p70 = pneg %p64
    %p71 = scmp.eq.s32.totalorder %s8, 1
    %p72 = por %p70, %p71
    %p73 = scmp.ne.s32.totalorder %s65, %s68
    %p74 = scmp.eq.s32.totalorder %s8, 0
    %p75 = por %p73, %p74
    %p76 = scmp.ne.s32.totalorder %s65, %s68
    %p77 = scmp.eq.s32.totalorder %s13, 1
    %p78 = por %p76, %p77
    %p79 = scmp.ne.s32.totalorder %s68, %s69
    %p80 = scmp.eq.s32.totalorder %s13, 0
    %p81 = por %p79, %p80
    %p82 = scmp.ne.s32.totalorder %s68, %s69
    %p83 = scmp.eq.s32.totalorder %s14, 1
    %p84 = por %p82, %p83
    %p86 = scmp.ne.s32.totalorder %s69, %s85
    %p87 = scmp.eq.s32.totalorder %s14, 0
    %p88 = por %p86, %p87
    %p89 = scmp.le.s32.totalorder 1, %s8
    %p90 = scmp.lt.s32.totalorder %s8, 3
    %p91 = pnand %p89, %p90
    %p92 = pneg %p91
    // Predicated region
    $region9: #{_lambda_.1} parent=5 // pred_check
      _
    $region10: #{_lambda_.1} parent=5 // pred_check_branch
      %94 = sbr.rel (%p91) target = $region12
    $region11: #{_lambda_.1} parent=5 // pred_region
      %s95 = ssub.s32 %s8, 1
      // Predicated region
      $region13: #{_lambda_.1} parent=11 // pred_check
        %p96 = pneg %p55
      $region14: #{_lambda_.1} parent=11 // pred_check_branch
        %98 = sbr.rel (%p96) target = $region16
      $region15: #{_lambda_.1} parent=11 // pred_region
        _
      $region16: #{_lambda_.1} parent=11 // pred_fallthru
        _
    $region12: #{_lambda_.1} parent=5 // pred_fallthru
      _
    %p99 = scmp.lt.s32.totalorder %s8, 2
    // Predicated region
    $region17: #{_lambda_.1} parent=5 // pred_check
      %p100 = pneg %p99
    $region18: #{_lambda_.1} parent=5 // pred_check_branch
      %102 = sbr.rel (%p100) target = $region20
    $region19: #{_lambda_.1} parent=5 // pred_region
      // Predicated region
      $region21: #{_lambda_.1} parent=19 // pred_check
        %p103 = pneg %p28
      $region22: #{_lambda_.1} parent=19 // pred_check_branch
        %105 = sbr.rel (%p103) target = $region24
      $region23: #{_lambda_.1} parent=19 // pred_region
        %s106 = smul.u32 3, %s8
        %p107 = scmp.lt.s32.totalorder %s106, 5
        %s108 = scalar_select %p107, %s106, 5
        %s109 = smul.addr %s108, 8
        %s110 = scalar_lea.vmem %s0, %s109
        %s111 = smul.u32 3, %s8
      $region24: #{_lambda_.1} parent=19 // pred_fallthru
        _
    $region20: #{_lambda_.1} parent=5 // pred_fallthru
      _
    %p112 = scmp.le.s32.totalorder 1, %s8
    %p113 = scmp.lt.s32.totalorder %s8, 3
    %p114 = pnand %p112, %p113
    %p115 = pneg %p114
    // Predicated region
    $region25: #{_lambda_.1} parent=5 // pred_check
      _
    $region26: #{_lambda_.1} parent=5 // pred_check_branch
      %117 = sbr.rel (%p114) target = $region28
    $region27: #{_lambda_.1} parent=5 // pred_region
      %s118 = ssub.s32 %s8, 1
      %s119 = smul.u32 3, %s13
      %p120 = scmp.lt.s32.totalorder %s119, 5
      %s121 = scalar_select %p120, %s119, 5
      %s122 = smul.addr %s121, 8
      %s123 = scalar_lea.vmem %s0, %s122
      %p124 = pneg %p34
      %p125 = pneg %p31
      %p126 = pneg %p55
      %p127 = pneg %p52
      %p128 = pneg %p81
      %p129 = pneg %p78
      %s130 = smul.u32 3, %s13
      %p131 = scmp.lt.s32.totalorder %s130, 5
      %s132 = scalar_select %p131, %s130, 5
      %s133 = smul.addr %s132, 21
      %s134 = smul.addr %s133, 8
      %s135 = scalar_lea.vmem %s2, %s134
      %s136 = smul.u32 3, %s13
      %p137 = scmp.lt.s32.totalorder %s136, 5
      %s138 = scalar_select %p137, %s136, 5
      %s139 = smul.addr %s138, 8
      %s140 = scalar_lea.vmem %s0, %s139
      %s141 = smul.u32 3, %s13
      %s142 = smul.u32 3, %s13
      %p143 = scmp.lt.s32.totalorder %s142, 5
      %s144 = scalar_select %p143, %s142, 5
      %s145 = smul.addr %s144, 21
      %s146 = smul.addr %s145, 8
      %s147 = scalar_lea.vmem %s2, %s146
      %s148 = smul.u32 3, %s13
      %v149 = vld [vmem:[%s140] sm:$0xff]
      %v150 = vld [vmem:[%s140 + $0x8] sm:$0xff]
      %v151 = vld [vmem:[%s140 + $0x10] sm:$0xff]
      %v152 = vld [vmem:[%s1] sm:$0xff]
      %v153 = vld [vmem:[%s1 + $0x8] sm:$0xff]
      %v154 = vld [vmem:[%s1 + $0x10] sm:$0xff]
      %v155 = vld [vmem:[%s1 + $0x18] sm:$0xff]
      %v156 = vld [vmem:[%s1 + $0x20] sm:$0xff]
      %v157 = vld [vmem:[%s1 + $0x28] sm:$0xff]
      %v158 = vld [vmem:[%s1 + $0x30] sm:$0xff]
      %v159 = vld [vmem:[%s1 + $0x38] sm:$0xff]
      %v160 = vld [vmem:[%s1 + $0x40] sm:$0xff]
      %v161 = vld [vmem:[%s1 + $0x48] sm:$0xff]
      %v162 = vld [vmem:[%s1 + $0x50] sm:$0xff]
      %v163 = vld [vmem:[%s1 + $0x58] sm:$0xff]
      %v164 = vld [vmem:[%s1 + $0x60] sm:$0xff]
      %v165 = vld [vmem:[%s1 + $0x68] sm:$0xff]
      %v166 = vld [vmem:[%s1 + $0x70] sm:$0xff]
      %v167 = vld [vmem:[%s1 + $0x78] sm:$0xff]
      %v168 = vld [vmem:[%s1 + $0x80] sm:$0xff]
      %v169 = vld [vmem:[%s1 + $0x88] sm:$0xff]
      %v170 = vld [vmem:[%s1 + $0x90] sm:$0xff]
      %v171 = vld [vmem:[%s1 + $0x98] sm:$0xff]
      %v172 = vld [vmem:[%s1 + $0xa0] sm:$0xff]
      %vm173 = vcmask 64512
      %v175 = vsel %vm173, %v149, 0
      %v178 = vsel %vm173, %v150, 0
      %v181 = vsel %vm173, %v151, 0
      %183 = vmatpush.msra.mxu0 0.0
      %184 = vmatpush.msra.mxu0 0.0
      %185 = vmatpush.msra.mxu0 0.0
      %186 = vmatpush.msra.mxu0 0.0
      %187 = vmatpush.msra.mxu0 0.0
      %188 = vmatpush.msra.mxu0 0.0
      %189 = vmatpush.msra.mxu0 0.0
      %190 = vmatpush.msra.mxu0 0.0
      %191 = vmatpush.msra.mxu0 0.0
      %192 = vmatpush.msra.mxu0 0.0
      %193 = vmatpush.msra.mxu0 0.0
      %194 = vmatpush.msra.mxu0 0.0
      %195 = vmatpush.msra.mxu0 0.0
      %196 = vmatpush.msra.mxu0 0.0
      %197 = vmatpush.msra.mxu0 0.0
      %198 = vmatpush.msra.mxu0 %v152
      %199 = vmatmul.f32.gmra.mxu0 %v175
      %v200 = vpop.f32.mrf.mxu0
      %v201 = vadd.f32 0.0, %v200
      %202 = vmatmul.f32.gmra.mxu0 %v178
      %v203 = vpop.f32.mrf.mxu0
      %v204 = vadd.f32 0.0, %v203
      %205 = vmatmul.f32.gmra.mxu0 %v181
      %v206 = vpop.f32.mrf.mxu0
      %v207 = vadd.f32 0.0, %v206
      %208 = vdwg.mxu0
      %209 = vmatpush.msra.mxu0 0.0
      %210 = vmatpush.msra.mxu0 0.0
      %211 = vmatpush.msra.mxu0 0.0
      %212 = vmatpush.msra.mxu0 0.0
      %213 = vmatpush.msra.mxu0 0.0
      %214 = vmatpush.msra.mxu0 0.0
      %215 = vmatpush.msra.mxu0 0.0
      %216 = vmatpush.msra.mxu0 0.0
      %217 = vmatpush.msra.mxu0 0.0
      %218 = vmatpush.msra.mxu0 0.0
      %219 = vmatpush.msra.mxu0 0.0
      %220 = vmatpush.msra.mxu0 0.0
      %221 = vmatpush.msra.mxu0 0.0
      %222 = vmatpush.msra.mxu0 0.0
      %223 = vmatpush.msra.mxu0 0.0
      %224 = vmatpush.msra.mxu0 %v153
      %225 = vmatmul.f32.gmra.mxu0 %v175
      %v226 = vpop.f32.mrf.mxu0
      %v227 = vadd.f32 0.0, %v226
      %228 = vmatmul.f32.gmra.mxu0 %v178
      %v229 = vpop.f32.mrf.mxu0
      %v230 = vadd.f32 0.0, %v229
      %231 = vmatmul.f32.gmra.mxu0 %v181
      %v232 = vpop.f32.mrf.mxu0
      %v233 = vadd.f32 0.0, %v232
      %234 = vdwg.mxu0
      %235 = vmatpush.msra.mxu0 0.0
      %236 = vmatpush.msra.mxu0 0.0
      %237 = vmatpush.msra.mxu0 0.0
      %238 = vmatpush.msra.mxu0 0.0
      %239 = vmatpush.msra.mxu0 0.0
      %240 = vmatpush.msra.mxu0 0.0
      %241 = vmatpush.msra.mxu0 0.0
      %242 = vmatpush.msra.mxu0 0.0
      %243 = vmatpush.msra.mxu0 0.0
      %244 = vmatpush.msra.mxu0 0.0
      %245 = vmatpush.msra.mxu0 0.0
      %246 = vmatpush.msra.mxu0 0.0
      %247 = vmatpush.msra.mxu0 0.0
      %248 = vmatpush.msra.mxu0 0.0
      %249 = vmatpush.msra.mxu0 0.0
      %250 = vmatpush.msra.mxu0 %v154
      %251 = vmatmul.f32.gmra.mxu0 %v175
      %v252 = vpop.f32.mrf.mxu0
      %v253 = vadd.f32 0.0, %v252
      %254 = vmatmul.f32.gmra.mxu0 %v178
      %v255 = vpop.f32.mrf.mxu0
      %v256 = vadd.f32 0.0, %v255
      %257 = vmatmul.f32.gmra.mxu0 %v181
      %v258 = vpop.f32.mrf.mxu0
      %v259 = vadd.f32 0.0, %v258
      %260 = vdwg.mxu0
      %261 = vmatpush.msra.mxu0 0.0
      %262 = vmatpush.msra.mxu0 0.0
      %263 = vmatpush.msra.mxu0 0.0
      %264 = vmatpush.msra.mxu0 0.0
      %265 = vmatpush.msra.mxu0 0.0
      %266 = vmatpush.msra.mxu0 0.0
      %267 = vmatpush.msra.mxu0 0.0
      %268 = vmatpush.msra.mxu0 0.0
      %269 = vmatpush.msra.mxu0 0.0
      %270 = vmatpush.msra.mxu0 0.0
      %271 = vmatpush.msra.mxu0 0.0
      %272 = vmatpush.msra.mxu0 0.0
      %273 = vmatpush.msra.mxu0 0.0
      %274 = vmatpush.msra.mxu0 0.0
      %275 = vmatpush.msra.mxu0 0.0
      %276 = vmatpush.msra.mxu0 %v155
      %277 = vmatmul.f32.gmra.mxu0 %v175
      %v278 = vpop.f32.mrf.mxu0
      %v279 = vadd.f32 0.0, %v278
      %280 = vmatmul.f32.gmra.mxu0 %v178
      %v281 = vpop.f32.mrf.mxu0
      %v282 = vadd.f32 0.0, %v281
      %283 = vmatmul.f32.gmra.mxu0 %v181
      %v284 = vpop.f32.mrf.mxu0
      %v285 = vadd.f32 0.0, %v284
      %286 = vdwg.mxu0
      %287 = vmatpush.msra.mxu0 0.0
      %288 = vmatpush.msra.mxu0 0.0
      %289 = vmatpush.msra.mxu0 0.0
      %290 = vmatpush.msra.mxu0 0.0
      %291 = vmatpush.msra.mxu0 0.0
      %292 = vmatpush.msra.mxu0 0.0
      %293 = vmatpush.msra.mxu0 0.0
      %294 = vmatpush.msra.mxu0 0.0
      %295 = vmatpush.msra.mxu0 0.0
      %296 = vmatpush.msra.mxu0 0.0
      %297 = vmatpush.msra.mxu0 0.0
      %298 = vmatpush.msra.mxu0 0.0
      %299 = vmatpush.msra.mxu0 0.0
      %300 = vmatpush.msra.mxu0 0.0
      %301 = vmatpush.msra.mxu0 0.0
      %302 = vmatpush.msra.mxu0 %v156
      %303 = vmatmul.f32.gmra.mxu0 %v175
      %v304 = vpop.f32.mrf.mxu0
      %v305 = vadd.f32 0.0, %v304
      %306 = vmatmul.f32.gmra.mxu0 %v178
      %v307 = vpop.f32.mrf.mxu0
      %v308 = vadd.f32 0.0, %v307
      %309 = vmatmul.f32.gmra.mxu0 %v181
      %v310 = vpop.f32.mrf.mxu0
      %v311 = vadd.f32 0.0, %v310
      %312 = vdwg.mxu0
      %313 = vmatpush.msra.mxu0 0.0
      %314 = vmatpush.msra.mxu0 0.0
      %315 = vmatpush.msra.mxu0 0.0
      %316 = vmatpush.msra.mxu0 0.0
      %317 = vmatpush.msra.mxu0 0.0
      %318 = vmatpush.msra.mxu0 0.0
      %319 = vmatpush.msra.mxu0 0.0
      %320 = vmatpush.msra.mxu0 0.0
      %321 = vmatpush.msra.mxu0 0.0
      %322 = vmatpush.msra.mxu0 0.0
      %323 = vmatpush.msra.mxu0 0.0
      %324 = vmatpush.msra.mxu0 0.0
      %325 = vmatpush.msra.mxu0 0.0
      %326 = vmatpush.msra.mxu0 0.0
      %327 = vmatpush.msra.mxu0 0.0
      %328 = vmatpush.msra.mxu0 %v157
      %329 = vmatmul.f32.gmra.mxu0 %v175
      %v330 = vpop.f32.mrf.mxu0
      %v331 = vadd.f32 0.0, %v330
      %332 = vmatmul.f32.gmra.mxu0 %v178
      %v333 = vpop.f32.mrf.mxu0
      %v334 = vadd.f32 0.0, %v333
      %335 = vmatmul.f32.gmra.mxu0 %v181
      %v336 = vpop.f32.mrf.mxu0
      %v337 = vadd.f32 0.0, %v336
      %338 = vdwg.mxu0
      %339 = vmatpush.msra.mxu0 0.0
      %340 = vmatpush.msra.mxu0 0.0
      %341 = vmatpush.msra.mxu0 0.0
      %342 = vmatpush.msra.mxu0 0.0
      %343 = vmatpush.msra.mxu0 0.0
      %344 = vmatpush.msra.mxu0 0.0
      %345 = vmatpush.msra.mxu0 0.0
      %346 = vmatpush.msra.mxu0 0.0
      %347 = vmatpush.msra.mxu0 0.0
      %348 = vmatpush.msra.mxu0 0.0
      %349 = vmatpush.msra.mxu0 0.0
      %350 = vmatpush.msra.mxu0 0.0
      %351 = vmatpush.msra.mxu0 0.0
      %352 = vmatpush.msra.mxu0 0.0
      %353 = vmatpush.msra.mxu0 0.0
      %354 = vmatpush.msra.mxu0 %v158
      %355 = vmatmul.f32.gmra.mxu0 %v175
      %v356 = vpop.f32.mrf.mxu0
      %v357 = vadd.f32 0.0, %v356
      %358 = vmatmul.f32.gmra.mxu0 %v178
      %v359 = vpop.f32.mrf.mxu0
      %v360 = vadd.f32 0.0, %v359
      %361 = vmatmul.f32.gmra.mxu0 %v181
      %v362 = vpop.f32.mrf.mxu0
      %v363 = vadd.f32 0.0, %v362
      %364 = vdwg.mxu0
      %365 = vmatpush.msra.mxu0 0.0
      %366 = vmatpush.msra.mxu0 0.0
      %367 = vmatpush.msra.mxu0 0.0
      %368 = vmatpush.msra.mxu0 0.0
      %369 = vmatpush.msra.mxu0 0.0
      %370 = vmatpush.msra.mxu0 0.0
      %371 = vmatpush.msra.mxu0 0.0
      %372 = vmatpush.msra.mxu0 0.0
      %373 = vmatpush.msra.mxu0 0.0
      %374 = vmatpush.msra.mxu0 0.0
      %375 = vmatpush.msra.mxu0 0.0
      %376 = vmatpush.msra.mxu0 0.0
      %377 = vmatpush.msra.mxu0 0.0
      %378 = vmatpush.msra.mxu0 0.0
      %379 = vmatpush.msra.mxu0 0.0
      %380 = vmatpush.msra.mxu0 %v159
      %381 = vmatmul.f32.gmra.mxu0 %v175
      %v382 = vpop.f32.mrf.mxu0
      %v383 = vadd.f32 0.0, %v382
      %384 = vmatmul.f32.gmra.mxu0 %v178
      %v385 = vpop.f32.mrf.mxu0
      %v386 = vadd.f32 0.0, %v385
      %387 = vmatmul.f32.gmra.mxu0 %v181
      %v388 = vpop.f32.mrf.mxu0
      %v389 = vadd.f32 0.0, %v388
      %390 = vdwg.mxu0
      %391 = vmatpush.msra.mxu0 0.0
      %392 = vmatpush.msra.mxu0 0.0
      %393 = vmatpush.msra.mxu0 0.0
      %394 = vmatpush.msra.mxu0 0.0
      %395 = vmatpush.msra.mxu0 0.0
      %396 = vmatpush.msra.mxu0 0.0
      %397 = vmatpush.msra.mxu0 0.0
      %398 = vmatpush.msra.mxu0 0.0
      %399 = vmatpush.msra.mxu0 0.0
      %400 = vmatpush.msra.mxu0 0.0
      %401 = vmatpush.msra.mxu0 0.0
      %402 = vmatpush.msra.mxu0 0.0
      %403 = vmatpush.msra.mxu0 0.0
      %404 = vmatpush.msra.mxu0 0.0
      %405 = vmatpush.msra.mxu0 0.0
      %406 = vmatpush.msra.mxu0 %v160
      %407 = vmatmul.f32.gmra.mxu0 %v175
      %v408 = vpop.f32.mrf.mxu0
      %v409 = vadd.f32 0.0, %v408
      %410 = vmatmul.f32.gmra.mxu0 %v178
      %v411 = vpop.f32.mrf.mxu0
      %v412 = vadd.f32 0.0, %v411
      %413 = vmatmul.f32.gmra.mxu0 %v181
      %v414 = vpop.f32.mrf.mxu0
      %v415 = vadd.f32 0.0, %v414
      %416 = vdwg.mxu0
      %417 = vmatpush.msra.mxu0 0.0
      %418 = vmatpush.msra.mxu0 0.0
      %419 = vmatpush.msra.mxu0 0.0
      %420 = vmatpush.msra.mxu0 0.0
      %421 = vmatpush.msra.mxu0 0.0
      %422 = vmatpush.msra.mxu0 0.0
      %423 = vmatpush.msra.mxu0 0.0
      %424 = vmatpush.msra.mxu0 0.0
      %425 = vmatpush.msra.mxu0 0.0
      %426 = vmatpush.msra.mxu0 0.0
      %427 = vmatpush.msra.mxu0 0.0
      %428 = vmatpush.msra.mxu0 0.0
      %429 = vmatpush.msra.mxu0 0.0
      %430 = vmatpush.msra.mxu0 0.0
      %431 = vmatpush.msra.mxu0 0.0
      %432 = vmatpush.msra.mxu0 %v161
      %433 = vmatmul.f32.gmra.mxu0 %v175
      %v434 = vpop.f32.mrf.mxu0
      %v435 = vadd.f32 0.0, %v434
      %436 = vmatmul.f32.gmra.mxu0 %v178
      %v437 = vpop.f32.mrf.mxu0
      %v438 = vadd.f32 0.0, %v437
      %439 = vmatmul.f32.gmra.mxu0 %v181
      %v440 = vpop.f32.mrf.mxu0
      %v441 = vadd.f32 0.0, %v440
      %442 = vdwg.mxu0
      %443 = vmatpush.msra.mxu0 0.0
      %444 = vmatpush.msra.mxu0 0.0
      %445 = vmatpush.msra.mxu0 0.0
      %446 = vmatpush.msra.mxu0 0.0
      %447 = vmatpush.msra.mxu0 0.0
      %448 = vmatpush.msra.mxu0 0.0
      %449 = vmatpush.msra.mxu0 0.0
      %450 = vmatpush.msra.mxu0 0.0
      %451 = vmatpush.msra.mxu0 0.0
      %452 = vmatpush.msra.mxu0 0.0
      %453 = vmatpush.msra.mxu0 0.0
      %454 = vmatpush.msra.mxu0 0.0
      %455 = vmatpush.msra.mxu0 0.0
      %456 = vmatpush.msra.mxu0 0.0
      %457 = vmatpush.msra.mxu0 0.0
      %458 = vmatpush.msra.mxu0 %v162
      %459 = vmatmul.f32.gmra.mxu0 %v175
      %v460 = vpop.f32.mrf.mxu0
      %v461 = vadd.f32 0.0, %v460
      %462 = vmatmul.f32.gmra.mxu0 %v178
      %v463 = vpop.f32.mrf.mxu0
      %v464 = vadd.f32 0.0, %v463
      %465 = vmatmul.f32.gmra.mxu0 %v181
      %v466 = vpop.f32.mrf.mxu0
      %v467 = vadd.f32 0.0, %v466
      %468 = vdwg.mxu0
      %469 = vmatpush.msra.mxu0 0.0
      %470 = vmatpush.msra.mxu0 0.0
      %471 = vmatpush.msra.mxu0 0.0
      %472 = vmatpush.msra.mxu0 0.0
      %473 = vmatpush.msra.mxu0 0.0
      %474 = vmatpush.msra.mxu0 0.0
      %475 = vmatpush.msra.mxu0 0.0
      %476 = vmatpush.msra.mxu0 0.0
      %477 = vmatpush.msra.mxu0 0.0
      %478 = vmatpush.msra.mxu0 0.0
      %479 = vmatpush.msra.mxu0 0.0
      %480 = vmatpush.msra.mxu0 0.0
      %481 = vmatpush.msra.mxu0 0.0
      %482 = vmatpush.msra.mxu0 0.0
      %483 = vmatpush.msra.mxu0 0.0
      %484 = vmatpush.msra.mxu0 %v163
      %485 = vmatmul.f32.gmra.mxu0 %v175
      %v486 = vpop.f32.mrf.mxu0
      %v487 = vadd.f32 0.0, %v486
      %488 = vmatmul.f32.gmra.mxu0 %v178
      %v489 = vpop.f32.mrf.mxu0
      %v490 = vadd.f32 0.0, %v489
      %491 = vmatmul.f32.gmra.mxu0 %v181
      %v492 = vpop.f32.mrf.mxu0
      %v493 = vadd.f32 0.0, %v492
      %494 = vdwg.mxu0
      %495 = vmatpush.msra.mxu0 0.0
      %496 = vmatpush.msra.mxu0 0.0
      %497 = vmatpush.msra.mxu0 0.0
      %498 = vmatpush.msra.mxu0 0.0
      %499 = vmatpush.msra.mxu0 0.0
      %500 = vmatpush.msra.mxu0 0.0
      %501 = vmatpush.msra.mxu0 0.0
      %502 = vmatpush.msra.mxu0 0.0
      %503 = vmatpush.msra.mxu0 0.0
      %504 = vmatpush.msra.mxu0 0.0
      %505 = vmatpush.msra.mxu0 0.0
      %506 = vmatpush.msra.mxu0 0.0
      %507 = vmatpush.msra.mxu0 0.0
      %508 = vmatpush.msra.mxu0 0.0
      %509 = vmatpush.msra.mxu0 0.0
      %510 = vmatpush.msra.mxu0 %v164
      %511 = vmatmul.f32.gmra.mxu0 %v175
      %v512 = vpop.f32.mrf.mxu0
      %v513 = vadd.f32 0.0, %v512
      %514 = vmatmul.f32.gmra.mxu0 %v178
      %v515 = vpop.f32.mrf.mxu0
      %v516 = vadd.f32 0.0, %v515
      %517 = vmatmul.f32.gmra.mxu0 %v181
      %v518 = vpop.f32.mrf.mxu0
      %v519 = vadd.f32 0.0, %v518
      %520 = vdwg.mxu0
      %521 = vmatpush.msra.mxu0 0.0
      %522 = vmatpush.msra.mxu0 0.0
      %523 = vmatpush.msra.mxu0 0.0
      %524 = vmatpush.msra.mxu0 0.0
      %525 = vmatpush.msra.mxu0 0.0
      %526 = vmatpush.msra.mxu0 0.0
      %527 = vmatpush.msra.mxu0 0.0
      %528 = vmatpush.msra.mxu0 0.0
      %529 = vmatpush.msra.mxu0 0.0
      %530 = vmatpush.msra.mxu0 0.0
      %531 = vmatpush.msra.mxu0 0.0
      %532 = vmatpush.msra.mxu0 0.0
      %533 = vmatpush.msra.mxu0 0.0
      %534 = vmatpush.msra.mxu0 0.0
      %535 = vmatpush.msra.mxu0 0.0
      %536 = vmatpush.msra.mxu0 %v165
      %537 = vmatmul.f32.gmra.mxu0 %v175
      %v538 = vpop.f32.mrf.mxu0
      %v539 = vadd.f32 0.0, %v538
      %540 = vmatmul.f32.gmra.mxu0 %v178
      %v541 = vpop.f32.mrf.mxu0
      %v542 = vadd.f32 0.0, %v541
      %543 = vmatmul.f32.gmra.mxu0 %v181
      %v544 = vpop.f32.mrf.mxu0
      %v545 = vadd.f32 0.0, %v544
      %546 = vdwg.mxu0
      %547 = vmatpush.msra.mxu0 0.0
      %548 = vmatpush.msra.mxu0 0.0
      %549 = vmatpush.msra.mxu0 0.0
      %550 = vmatpush.msra.mxu0 0.0
      %551 = vmatpush.msra.mxu0 0.0
      %552 = vmatpush.msra.mxu0 0.0
      %553 = vmatpush.msra.mxu0 0.0
      %554 = vmatpush.msra.mxu0 0.0
      %555 = vmatpush.msra.mxu0 0.0
      %556 = vmatpush.msra.mxu0 0.0
      %557 = vmatpush.msra.mxu0 0.0
      %558 = vmatpush.msra.mxu0 0.0
      %559 = vmatpush.msra.mxu0 0.0
      %560 = vmatpush.msra.mxu0 0.0
      %561 = vmatpush.msra.mxu0 0.0
      %562 = vmatpush.msra.mxu0 %v166
      %563 = vmatmul.f32.gmra.mxu0 %v175
      %v564 = vpop.f32.mrf.mxu0
      %v565 = vadd.f32 0.0, %v564
      %566 = vmatmul.f32.gmra.mxu0 %v178
      %v567 = vpop.f32.mrf.mxu0
      %v568 = vadd.f32 0.0, %v567
      %569 = vmatmul.f32.gmra.mxu0 %v181
      %v570 = vpop.f32.mrf.mxu0
      %v571 = vadd.f32 0.0, %v570
      %572 = vdwg.mxu0
      %573 = vmatpush.msra.mxu0 0.0
      %574 = vmatpush.msra.mxu0 0.0
      %575 = vmatpush.msra.mxu0 0.0
      %576 = vmatpush.msra.mxu0 0.0
      %577 = vmatpush.msra.mxu0 0.0
      %578 = vmatpush.msra.mxu0 0.0
      %579 = vmatpush.msra.mxu0 0.0
      %580 = vmatpush.msra.mxu0 0.0
      %581 = vmatpush.msra.mxu0 0.0
      %582 = vmatpush.msra.mxu0 0.0
      %583 = vmatpush.msra.mxu0 0.0
      %584 = vmatpush.msra.mxu0 0.0
      %585 = vmatpush.msra.mxu0 0.0
      %586 = vmatpush.msra.mxu0 0.0
      %587 = vmatpush.msra.mxu0 0.0
      %588 = vmatpush.msra.mxu0 %v167
      %589 = vmatmul.f32.gmra.mxu0 %v175
      %v590 = vpop.f32.mrf.mxu0
      %v591 = vadd.f32 0.0, %v590
      %592 = vmatmul.f32.gmra.mxu0 %v178
      %v593 = vpop.f32.mrf.mxu0
      %v594 = vadd.f32 0.0, %v593
      %595 = vmatmul.f32.gmra.mxu0 %v181
      %v596 = vpop.f32.mrf.mxu0
      %v597 = vadd.f32 0.0, %v596
      %598 = vdwg.mxu0
      %599 = vmatpush.msra.mxu0 0.0
      %600 = vmatpush.msra.mxu0 0.0
      %601 = vmatpush.msra.mxu0 0.0
      %602 = vmatpush.msra.mxu0 0.0
      %603 = vmatpush.msra.mxu0 0.0
      %604 = vmatpush.msra.mxu0 0.0
      %605 = vmatpush.msra.mxu0 0.0
      %606 = vmatpush.msra.mxu0 0.0
      %607 = vmatpush.msra.mxu0 0.0
      %608 = vmatpush.msra.mxu0 0.0
      %609 = vmatpush.msra.mxu0 0.0
      %610 = vmatpush.msra.mxu0 0.0
      %611 = vmatpush.msra.mxu0 0.0
      %612 = vmatpush.msra.mxu0 0.0
      %613 = vmatpush.msra.mxu0 0.0
      %614 = vmatpush.msra.mxu0 %v168
      %615 = vmatmul.f32.gmra.mxu0 %v175
      %v616 = vpop.f32.mrf.mxu0
      %v617 = vadd.f32 0.0, %v616
      %618 = vmatmul.f32.gmra.mxu0 %v178
      %v619 = vpop.f32.mrf.mxu0
      %v620 = vadd.f32 0.0, %v619
      %621 = vmatmul.f32.gmra.mxu0 %v181
      %v622 = vpop.f32.mrf.mxu0
      %v623 = vadd.f32 0.0, %v622
      %624 = vdwg.mxu0
      %625 = vmatpush.msra.mxu0 0.0
      %626 = vmatpush.msra.mxu0 0.0
      %627 = vmatpush.msra.mxu0 0.0
      %628 = vmatpush.msra.mxu0 0.0
      %629 = vmatpush.msra.mxu0 0.0
      %630 = vmatpush.msra.mxu0 0.0
      %631 = vmatpush.msra.mxu0 0.0
      %632 = vmatpush.msra.mxu0 0.0
      %633 = vmatpush.msra.mxu0 0.0
      %634 = vmatpush.msra.mxu0 0.0
      %635 = vmatpush.msra.mxu0 0.0
      %636 = vmatpush.msra.mxu0 0.0
      %637 = vmatpush.msra.mxu0 0.0
      %638 = vmatpush.msra.mxu0 0.0
      %639 = vmatpush.msra.mxu0 0.0
      %640 = vmatpush.msra.mxu0 %v169
      %641 = vmatmul.f32.gmra.mxu0 %v175
      %v642 = vpop.f32.mrf.mxu0
      %v643 = vadd.f32 0.0, %v642
      %644 = vmatmul.f32.gmra.mxu0 %v178
      %v645 = vpop.f32.mrf.mxu0
      %v646 = vadd.f32 0.0, %v645
      %647 = vmatmul.f32.gmra.mxu0 %v181
      %v648 = vpop.f32.mrf.mxu0
      %v649 = vadd.f32 0.0, %v648
      %650 = vdwg.mxu0
      %651 = vmatpush.msra.mxu0 0.0
      %652 = vmatpush.msra.mxu0 0.0
      %653 = vmatpush.msra.mxu0 0.0
      %654 = vmatpush.msra.mxu0 0.0
      %655 = vmatpush.msra.mxu0 0.0
      %656 = vmatpush.msra.mxu0 0.0
      %657 = vmatpush.msra.mxu0 0.0
      %658 = vmatpush.msra.mxu0 0.0
      %659 = vmatpush.msra.mxu0 0.0
      %660 = vmatpush.msra.mxu0 0.0
      %661 = vmatpush.msra.mxu0 0.0
      %662 = vmatpush.msra.mxu0 0.0
      %663 = vmatpush.msra.mxu0 0.0
      %664 = vmatpush.msra.mxu0 0.0
      %665 = vmatpush.msra.mxu0 0.0
      %666 = vmatpush.msra.mxu0 %v170
      %667 = vmatmul.f32.gmra.mxu0 %v175
      %v668 = vpop.f32.mrf.mxu0
      %v669 = vadd.f32 0.0, %v668
      %670 = vmatmul.f32.gmra.mxu0 %v178
      %v671 = vpop.f32.mrf.mxu0
      %v672 = vadd.f32 0.0, %v671
      %673 = vmatmul.f32.gmra.mxu0 %v181
      %v674 = vpop.f32.mrf.mxu0
      %v675 = vadd.f32 0.0, %v674
      %676 = vdwg.mxu0
      %677 = vmatpush.msra.mxu0 0.0
      %678 = vmatpush.msra.mxu0 0.0
      %679 = vmatpush.msra.mxu0 0.0
      %680 = vmatpush.msra.mxu0 0.0
      %681 = vmatpush.msra.mxu0 0.0
      %682 = vmatpush.msra.mxu0 0.0
      %683 = vmatpush.msra.mxu0 0.0
      %684 = vmatpush.msra.mxu0 0.0
      %685 = vmatpush.msra.mxu0 0.0
      %686 = vmatpush.msra.mxu0 0.0
      %687 = vmatpush.msra.mxu0 0.0
      %688 = vmatpush.msra.mxu0 0.0
      %689 = vmatpush.msra.mxu0 0.0
      %690 = vmatpush.msra.mxu0 0.0
      %691 = vmatpush.msra.mxu0 0.0
      %692 = vmatpush.msra.mxu0 %v171
      %693 = vmatmul.f32.gmra.mxu0 %v175
      %v694 = vpop.f32.mrf.mxu0
      %v695 = vadd.f32 0.0, %v694
      %696 = vmatmul.f32.gmra.mxu0 %v178
      %v697 = vpop.f32.mrf.mxu0
      %v698 = vadd.f32 0.0, %v697
      %699 = vmatmul.f32.gmra.mxu0 %v181
      %v700 = vpop.f32.mrf.mxu0
      %v701 = vadd.f32 0.0, %v700
      %702 = vdwg.mxu0
      %703 = vmatpush.msra.mxu0 0.0
      %704 = vmatpush.msra.mxu0 0.0
      %705 = vmatpush.msra.mxu0 0.0
      %706 = vmatpush.msra.mxu0 0.0
      %707 = vmatpush.msra.mxu0 0.0
      %708 = vmatpush.msra.mxu0 0.0
      %709 = vmatpush.msra.mxu0 0.0
      %710 = vmatpush.msra.mxu0 0.0
      %711 = vmatpush.msra.mxu0 0.0
      %712 = vmatpush.msra.mxu0 0.0
      %713 = vmatpush.msra.mxu0 0.0
      %714 = vmatpush.msra.mxu0 0.0
      %715 = vmatpush.msra.mxu0 0.0
      %716 = vmatpush.msra.mxu0 0.0
      %717 = vmatpush.msra.mxu0 0.0
      %718 = vmatpush.msra.mxu0 %v172
      %719 = vmatmul.f32.gmra.mxu0 %v175
      %v720 = vpop.f32.mrf.mxu0
      %v721 = vadd.f32 0.0, %v720
      %722 = vmatmul.f32.gmra.mxu0 %v178
      %v723 = vpop.f32.mrf.mxu0
      %v724 = vadd.f32 0.0, %v723
      %725 = vmatmul.f32.gmra.mxu0 %v181
      %v726 = vpop.f32.mrf.mxu0
      %v727 = vadd.f32 0.0, %v726
      %728 = vdwg.mxu0
      %v729 = vmul.f32 %v201, 0.5
      %v730 = vmul.f32 %v227, 0.5
      %v731 = vmul.f32 %v253, 0.5
      %v732 = vmul.f32 %v279, 0.5
      %v733 = vmul.f32 %v305, 0.5
      %v734 = vmul.f32 %v331, 0.5
      %v735 = vmul.f32 %v357, 0.5
      %v736 = vmul.f32 %v383, 0.5
      %v737 = vmul.f32 %v409, 0.5
      %v738 = vmul.f32 %v435, 0.5
      %v739 = vmul.f32 %v461, 0.5
      %v740 = vmul.f32 %v487, 0.5
      %v741 = vmul.f32 %v513, 0.5
      %v742 = vmul.f32 %v539, 0.5
      %v743 = vmul.f32 %v565, 0.5
      %v744 = vmul.f32 %v591, 0.5
      %v745 = vmul.f32 %v617, 0.5
      %v746 = vmul.f32 %v643, 0.5
      %v747 = vmul.f32 %v669, 0.5
      %v748 = vmul.f32 %v695, 0.5
      %v749 = vmul.f32 %v721, 0.5
      %v750 = vmul.f32 %v204, 0.5
      %v751 = vmul.f32 %v230, 0.5
      %v752 = vmul.f32 %v256, 0.5
      %v753 = vmul.f32 %v282, 0.5
      %v754 = vmul.f32 %v308, 0.5
      %v755 = vmul.f32 %v334, 0.5
      %v756 = vmul.f32 %v360, 0.5
      %v757 = vmul.f32 %v386, 0.5
      %v758 = vmul.f32 %v412, 0.5
      %v759 = vmul.f32 %v438, 0.5
      %v760 = vmul.f32 %v464, 0.5
      %v761 = vmul.f32 %v490, 0.5
      %v762 = vmul.f32 %v516, 0.5
      %v763 = vmul.f32 %v542, 0.5
      %v764 = vmul.f32 %v568, 0.5
      %v765 = vmul.f32 %v594, 0.5
      %v766 = vmul.f32 %v620, 0.5
      %v767 = vmul.f32 %v646, 0.5
      %v768 = vmul.f32 %v672, 0.5
      %v769 = vmul.f32 %v698, 0.5
      %v770 = vmul.f32 %v724, 0.5
      %v771 = vmul.f32 %v207, 0.5
      %v772 = vmul.f32 %v233, 0.5
      %v773 = vmul.f32 %v259, 0.5
      %v774 = vmul.f32 %v285, 0.5
      %v775 = vmul.f32 %v311, 0.5
      %v776 = vmul.f32 %v337, 0.5
      %v777 = vmul.f32 %v363, 0.5
      %v778 = vmul.f32 %v389, 0.5
      %v779 = vmul.f32 %v415, 0.5
      %v780 = vmul.f32 %v441, 0.5
      %v781 = vmul.f32 %v467, 0.5
      %v782 = vmul.f32 %v493, 0.5
      %v783 = vmul.f32 %v519, 0.5
      %v784 = vmul.f32 %v545, 0.5
      %v785 = vmul.f32 %v571, 0.5
      %v786 = vmul.f32 %v597, 0.5
      %v787 = vmul.f32 %v623, 0.5
      %v788 = vmul.f32 %v649, 0.5
      %v789 = vmul.f32 %v675, 0.5
      %v790 = vmul.f32 %v701, 0.5
      %v791 = vmul.f32 %v727, 0.5
      %v792 = vtanh.pop %v729
      %v793 = vtanh.pop %v730
      %v794 = vtanh.pop %v731
      %v795 = vtanh.pop %v732
      %v796 = vtanh.pop %v733
      %v797 = vtanh.pop %v734
      %v798 = vtanh.pop %v735
      %v799 = vtanh.pop %v736
      %v800 = vtanh.pop %v737
      %v801 = vtanh.pop %v738
      %v802 = vtanh.pop %v739
      %v803 = vtanh.pop %v740
      %v804 = vtanh.pop %v741
      %v805 = vtanh.pop %v742
      %v806 = vtanh.pop %v743
      %v807 = vtanh.pop %v744
      %v808 = vtanh.pop %v745
      %v809 = vtanh.pop %v746
      %v810 = vtanh.pop %v747
      %v811 = vtanh.pop %v748
      %v812 = vtanh.pop %v749
      %v813 = vtanh.pop %v750
      %v814 = vtanh.pop %v751
      %v815 = vtanh.pop %v752
      %v816 = vtanh.pop %v753
      %v817 = vtanh.pop %v754
      %v818 = vtanh.pop %v755
      %v819 = vtanh.pop %v756
      %v820 = vtanh.pop %v757
      %v821 = vtanh.pop %v758
      %v822 = vtanh.pop %v759
      %v823 = vtanh.pop %v760
      %v824 = vtanh.pop %v761
      %v825 = vtanh.pop %v762
      %v826 = vtanh.pop %v763
      %v827 = vtanh.pop %v764
      %v828 = vtanh.pop %v765
      %v829 = vtanh.pop %v766
      %v830 = vtanh.pop %v767
      %v831 = vtanh.pop %v768
      %v832 = vtanh.pop %v769
      %v833 = vtanh.pop %v770
      %v834 = vtanh.pop %v771
      %v835 = vtanh.pop %v772
      %v836 = vtanh.pop %v773
      %v837 = vtanh.pop %v774
      %v838 = vtanh.pop %v775
      %v839 = vtanh.pop %v776
      %v840 = vtanh.pop %v777
      %v841 = vtanh.pop %v778
      %v842 = vtanh.pop %v779
      %v843 = vtanh.pop %v780
      %v844 = vtanh.pop %v781
      %v845 = vtanh.pop %v782
      %v846 = vtanh.pop %v783
      %v847 = vtanh.pop %v784
      %v848 = vtanh.pop %v785
      %v849 = vtanh.pop %v786
      %v850 = vtanh.pop %v787
      %v851 = vtanh.pop %v788
      %v852 = vtanh.pop %v789
      %v853 = vtanh.pop %v790
      %v854 = vtanh.pop %v791
      %v855 = vmul.f32 %v792, 0.5
      %v856 = vmul.f32 %v793, 0.5
      %v857 = vmul.f32 %v794, 0.5
      %v858 = vmul.f32 %v795, 0.5
      %v859 = vmul.f32 %v796, 0.5
      %v860 = vmul.f32 %v797, 0.5
      %v861 = vmul.f32 %v798, 0.5
      %v862 = vmul.f32 %v799, 0.5
      %v863 = vmul.f32 %v800, 0.5
      %v864 = vmul.f32 %v801, 0.5
      %v865 = vmul.f32 %v802, 0.5
      %v866 = vmul.f32 %v803, 0.5
      %v867 = vmul.f32 %v804, 0.5
      %v868 = vmul.f32 %v805, 0.5
      %v869 = vmul.f32 %v806, 0.5
      %v870 = vmul.f32 %v807, 0.5
      %v871 = vmul.f32 %v808, 0.5
      %v872 = vmul.f32 %v809, 0.5
      %v873 = vmul.f32 %v810, 0.5
      %v874 = vmul.f32 %v811, 0.5
      %v875 = vmul.f32 %v812, 0.5
      %v876 = vmul.f32 %v813, 0.5
      %v877 = vmul.f32 %v814, 0.5
      %v878 = vmul.f32 %v815, 0.5
      %v879 = vmul.f32 %v816, 0.5
      %v880 = vmul.f32 %v817, 0.5
      %v881 = vmul.f32 %v818, 0.5
      %v882 = vmul.f32 %v819, 0.5
      %v883 = vmul.f32 %v820, 0.5
      %v884 = vmul.f32 %v821, 0.5
      %v885 = vmul.f32 %v822, 0.5
      %v886 = vmul.f32 %v823, 0.5
      %v887 = vmul.f32 %v824, 0.5
      %v888 = vmul.f32 %v825, 0.5
      %v889 = vmul.f32 %v826, 0.5
      %v890 = vmul.f32 %v827, 0.5
      %v891 = vmul.f32 %v828, 0.5
      %v892 = vmul.f32 %v829, 0.5
      %v893 = vmul.f32 %v830, 0.5
      %v894 = vmul.f32 %v831, 0.5
      %v895 = vmul.f32 %v832, 0.5
      %v896 = vmul.f32 %v833, 0.5
      %v897 = vmul.f32 %v834, 0.5
      %v898 = vmul.f32 %v835, 0.5
      %v899 = vmul.f32 %v836, 0.5
      %v900 = vmul.f32 %v837, 0.5
      %v901 = vmul.f32 %v838, 0.5
      %v902 = vmul.f32 %v839, 0.5
      %v903 = vmul.f32 %v840, 0.5
      %v904 = vmul.f32 %v841, 0.5
      %v905 = vmul.f32 %v842, 0.5
      %v906 = vmul.f32 %v843, 0.5
      %v907 = vmul.f32 %v844, 0.5
      %v908 = vmul.f32 %v845, 0.5
      %v909 = vmul.f32 %v846, 0.5
      %v910 = vmul.f32 %v847, 0.5
      %v911 = vmul.f32 %v848, 0.5
      %v912 = vmul.f32 %v849, 0.5
      %v913 = vmul.f32 %v850, 0.5
      %v914 = vmul.f32 %v851, 0.5
      %v915 = vmul.f32 %v852, 0.5
      %v916 = vmul.f32 %v853, 0.5
      %v917 = vmul.f32 %v854, 0.5
      %v918 = vadd.f32 %v855, 0.5
      %v919 = vadd.f32 %v856, 0.5
      %v920 = vadd.f32 %v857, 0.5
      %v921 = vadd.f32 %v858, 0.5
      %v922 = vadd.f32 %v859, 0.5
      %v923 = vadd.f32 %v860, 0.5
      %v924 = vadd.f32 %v861, 0.5
      %v925 = vadd.f32 %v862, 0.5
      %v926 = vadd.f32 %v863, 0.5
      %v927 = vadd.f32 %v864, 0.5
      %v928 = vadd.f32 %v865, 0.5
      %v929 = vadd.f32 %v866, 0.5
      %v930 = vadd.f32 %v867, 0.5
      %v931 = vadd.f32 %v868, 0.5
      %v932 = vadd.f32 %v869, 0.5
      %v933 = vadd.f32 %v870, 0.5
      %v934 = vadd.f32 %v871, 0.5
      %v935 = vadd.f32 %v872, 0.5
      %v936 = vadd.f32 %v873, 0.5
      %v937 = vadd.f32 %v874, 0.5
      %v938 = vadd.f32 %v875, 0.5
      %v939 = vadd.f32 %v876, 0.5
      %v940 = vadd.f32 %v877, 0.5
      %v941 = vadd.f32 %v878, 0.5
      %v942 = vadd.f32 %v879, 0.5
      %v943 = vadd.f32 %v880, 0.5
      %v944 = vadd.f32 %v881, 0.5
      %v945 = vadd.f32 %v882, 0.5
      %v946 = vadd.f32 %v883, 0.5
      %v947 = vadd.f32 %v884, 0.5
      %v948 = vadd.f32 %v885, 0.5
      %v949 = vadd.f32 %v886, 0.5
      %v950 = vadd.f32 %v887, 0.5
      %v951 = vadd.f32 %v888, 0.5
      %v952 = vadd.f32 %v889, 0.5
      %v953 = vadd.f32 %v890, 0.5
      %v954 = vadd.f32 %v891, 0.5
      %v955 = vadd.f32 %v892, 0.5
      %v956 = vadd.f32 %v893, 0.5
      %v957 = vadd.f32 %v894, 0.5
      %v958 = vadd.f32 %v895, 0.5
      %v959 = vadd.f32 %v896, 0.5
      %v960 = vadd.f32 %v897, 0.5
      %v961 = vadd.f32 %v898, 0.5
      %v962 = vadd.f32 %v899, 0.5
      %v963 = vadd.f32 %v900, 0.5
      %v964 = vadd.f32 %v901, 0.5
      %v965 = vadd.f32 %v902, 0.5
      %v966 = vadd.f32 %v903, 0.5
      %v967 = vadd.f32 %v904, 0.5
      %v968 = vadd.f32 %v905, 0.5
      %v969 = vadd.f32 %v906, 0.5
      %v970 = vadd.f32 %v907, 0.5
      %v971 = vadd.f32 %v908, 0.5
      %v972 = vadd.f32 %v909, 0.5
      %v973 = vadd.f32 %v910, 0.5
      %v974 = vadd.f32 %v911, 0.5
      %v975 = vadd.f32 %v912, 0.5
      %v976 = vadd.f32 %v913, 0.5
      %v977 = vadd.f32 %v914, 0.5
      %v978 = vadd.f32 %v915, 0.5
      %v979 = vadd.f32 %v916, 0.5
      %v980 = vadd.f32 %v917, 0.5
      %981 = vst [vmem:[%s147] sm:$0xff] %v918
      %982 = vst [vmem:[%s147 + $0x8] sm:$0xff] %v919
      %983 = vst [vmem:[%s147 + $0x10] sm:$0xff] %v920
      %984 = vst [vmem:[%s147 + $0x18] sm:$0xff] %v921
      %985 = vst [vmem:[%s147 + $0x20] sm:$0xff] %v922
      %986 = vst [vmem:[%s147 + $0x28] sm:$0xff] %v923
      %987 = vst [vmem:[%s147 + $0x30] sm:$0xff] %v924
      %988 = vst [vmem:[%s147 + $0x38] sm:$0xff] %v925
      %989 = vst [vmem:[%s147 + $0x40] sm:$0xff] %v926
      %990 = vst [vmem:[%s147 + $0x48] sm:$0xff] %v927
      %991 = vst [vmem:[%s147 + $0x50] sm:$0xff] %v928
      %992 = vst [vmem:[%s147 + $0x58] sm:$0xff] %v929
      %993 = vst [vmem:[%s147 + $0x60] sm:$0xff] %v930
      %994 = vst [vmem:[%s147 + $0x68] sm:$0xff] %v931
      %995 = vst [vmem:[%s147 + $0x70] sm:$0xff] %v932
      %996 = vst [vmem:[%s147 + $0x78] sm:$0xff] %v933
      %997 = vst [vmem:[%s147 + $0x80] sm:$0xff] %v934
      %998 = vst [vmem:[%s147 + $0x88] sm:$0xff] %v935
      %999 = vst [vmem:[%s147 + $0x90] sm:$0xff] %v936
      %1000 = vst [vmem:[%s147 + $0x98] sm:$0xff] %v937
      %vm1001 = vcmask 654336
      %1002 = vst.msk [vmem:[%s147 + $0xa0] sm:$0xff] %vm1001, %v938
      %1003 = vst [vmem:[%s147 + $0xa8] sm:$0xff] %v939
      %1004 = vst [vmem:[%s147 + $0xb0] sm:$0xff] %v940
      %1005 = vst [vmem:[%s147 + $0xb8] sm:$0xff] %v941
      %1006 = vst [vmem:[%s147 + $0xc0] sm:$0xff] %v942
      %1007 = vst [vmem:[%s147 + $0xc8] sm:$0xff] %v943
      %1008 = vst [vmem:[%s147 + $0xd0] sm:$0xff] %v944
      %1009 = vst [vmem:[%s147 + $0xd8] sm:$0xff] %v945
      %1010 = vst [vmem:[%s147 + $0xe0] sm:$0xff] %v946
      %1011 = vst [vmem:[%s147 + $0xe8] sm:$0xff] %v947
      %1012 = vst [vmem:[%s147 + $0xf0] sm:$0xff] %v948
      %1013 = vst [vmem:[%s147 + $0xf8] sm:$0xff] %v949
      %1014 = vst [vmem:[%s147 + $0x100] sm:$0xff] %v950
      %1015 = vst [vmem:[%s147 + $0x108] sm:$0xff] %v951
      %1016 = vst [vmem:[%s147 + $0x110] sm:$0xff] %v952
      %1017 = vst [vmem:[%s147 + $0x118] sm:$0xff] %v953
      %1018 = vst [vmem:[%s147 + $0x120] sm:$0xff] %v954
      %1019 = vst [vmem:[%s147 + $0x128] sm:$0xff] %v955
      %1020 = vst [vmem:[%s147 + $0x130] sm:$0xff] %v956
      %1021 = vst [vmem:[%s147 + $0x138] sm:$0xff] %v957
      %1022 = vst [vmem:[%s147 + $0x140] sm:$0xff] %v958
      %1023 = vst.msk [vmem:[%s147 + $0x148] sm:$0xff] %vm1001, %v959
      %1024 = vst [vmem:[%s147 + $0x150] sm:$0xff] %v960
      %1025 = vst [vmem:[%s147 + $0x158] sm:$0xff] %v961
      %1026 = vst [vmem:[%s147 + $0x160] sm:$0xff] %v962
      %1027 = vst [vmem:[%s147 + $0x168] sm:$0xff] %v963
      %1028 = vst [vmem:[%s147 + $0x170] sm:$0xff] %v964
      %1029 = vst [vmem:[%s147 + $0x178] sm:$0xff] %v965
      %1030 = vst [vmem:[%s147 + $0x180] sm:$0xff] %v966
      %1031 = vst [vmem:[%s147 + $0x188] sm:$0xff] %v967
      %1032 = vst [vmem:[%s147 + $0x190] sm:$0xff] %v968
      %1033 = vst [vmem:[%s147 + $0x198] sm:$0xff] %v969
      %1034 = vst [vmem:[%s147 + $0x1a0] sm:$0xff] %v970
      %1035 = vst [vmem:[%s147 + $0x1a8] sm:$0xff] %v971
      %1036 = vst [vmem:[%s147 + $0x1b0] sm:$0xff] %v972
      %1037 = vst [vmem:[%s147 + $0x1b8] sm:$0xff] %v973
      %1038 = vst [vmem:[%s147 + $0x1c0] sm:$0xff] %v974
      %1039 = vst [vmem:[%s147 + $0x1c8] sm:$0xff] %v975
      %1040 = vst [vmem:[%s147 + $0x1d0] sm:$0xff] %v976
      %1041 = vst [vmem:[%s147 + $0x1d8] sm:$0xff] %v977
      %1042 = vst [vmem:[%s147 + $0x1e0] sm:$0xff] %v978
      %1043 = vst [vmem:[%s147 + $0x1e8] sm:$0xff] %v979
      %1044 = vst.msk [vmem:[%s147 + $0x1f0] sm:$0xff] %vm1001, %v980
      %s1045 = smul.u32 3, %s13
      %p1046 = scmp.lt.s32.totalorder %s1045, 5
      %s1047 = scalar_select %p1046, %s1045, 5
      %s1048 = smul.addr %s1047, 21
      %s1049 = smul.addr %s1048, 8
      %s1050 = scalar_lea.vmem %s2, %s1049
      // Predicated region
      $region29: #{_lambda_.1} parent=27 // pred_check
        %p1051 = pneg %p78
      $region30: #{_lambda_.1} parent=27 // pred_check_branch
        %1053 = sbr.rel (%p1051) target = $region32
      $region31: #{_lambda_.1} parent=27 // pred_region
        %s1054 = smul.u32 3, %s13
      $region32: #{_lambda_.1} parent=27 // pred_fallthru
        _
    $region28: #{_lambda_.1} parent=5 // pred_fallthru
      _
    %p1055 = scmp.le.s32.totalorder 2, %s8
    // Predicated region
    $region33: #{_lambda_.1} parent=5 // pred_check
      %p1056 = pneg %p1055
    $region34: #{_lambda_.1} parent=5 // pred_check_branch
      %1058 = sbr.rel (%p1056) target = $region36
    $region35: #{_lambda_.1} parent=5 // pred_region
      %s1059 = ssub.s32 %s8, 2
      // Predicated region
      $region37: #{_lambda_.1} parent=35 // pred_check
        %p1060 = pneg %p84
      $region38: #{_lambda_.1} parent=35 // pred_check_branch
        %1062 = sbr.rel (%p1060) target = $region40
      $region39: #{_lambda_.1} parent=35 // pred_region
        %s1063 = smul.u32 3, %s14
        %p1064 = scmp.lt.s32.totalorder %s1063, 5
        %s1065 = scalar_select %p1064, %s1063, 5
        %s1066 = smul.addr %s1065, 21
        %s1067 = smul.addr %s1066, 8
        %s1068 = scalar_lea.vmem %s2, %s1067
      $region40: #{_lambda_.1} parent=35 // pred_fallthru
        _
    $region36: #{_lambda_.1} parent=5 // pred_fallthru
      _
  $region6: #{_lambda_.1} parent=0 // loop_footer
    %s12 = sadd.s32 1, %s8
  $region7: #{_lambda_.1} parent=0 // loop_footer_branch
    %7 = sbr.rel target = $region3
  $region8: #{_lambda_.1} parent=0 // loop_exit
    _

</llo_original>
